<compile_context>
chip_gen: v7x
topology: tpu7x:2x2x1
jax: 0.10.0
libtpu: 0.0.40
codegen_flags: <defaults>
</compile_context>

<pallas_src>
import functools

import jax
import jax.numpy as jnp
from jax.experimental import pallas as pl
from jax.experimental.pallas import tpu as pltpu


_VMEM = pl.BlockSpec(memory_space=pltpu.MemorySpace.VMEM)

# Operand dtype for every MXU matmul (accumulation is always f32 via
# preferred_element_type).  float32 keeps exact reference numerics; on v5e
# (bf16-native MXU, f32xf32 multi-pass emulated) set to jnp.bfloat16 -- the
# prepped weights are stored pre-cast and the patch builders cast inside the
# XLA fusion, so there is no in-kernel astype and half the DMA bytes.
MXU_DTYPE = jnp.float32


# ----------------------------- Pallas kernels ------------------------------

def _conv_relu_pool_kernel(p_ref, w_ref, b_ref, o_ref):
    """Fused im2col-conv + bias + ReLU + 2x2/stride-2 max pool.

    p_ref stacks the four pool-window-parity patch matrices along rows: rows
    [d*M2, (d+1)*M2) hold the im2col patches of the conv-output positions with
    parity d = (di, dj) inside each 2x2 pool window.  Bias is per-channel and
    ReLU is monotone, so
        pool(relu(conv(x) + b)) == relu(max_d(P_d @ W) + b)
    -> ONE matmul + a 4-way row-slab max; only the pooled tensor hits HBM.
    """
    y = jnp.dot(p_ref[...], w_ref[...], preferred_element_type=jnp.float32)
    m2 = o_ref.shape[0]                       # rows per parity (multiple of 8)
    pooled = jnp.maximum(jnp.maximum(y[0 * m2:1 * m2], y[1 * m2:2 * m2]),
                         jnp.maximum(y[2 * m2:3 * m2], y[3 * m2:4 * m2]))
    o_ref[...] = jnp.maximum(pooled + b_ref[...], 0.0).astype(o_ref.dtype)


def _conv_pool_mlp_kernel(p_ref, w2_ref, b2_ref, wf1_ref, bf1_ref,
                          wf2_ref, bf2_ref, wf3_ref, bf3_ref, o_ref, *, n):
    """conv2+bias+ReLU+pool -> flatten -> fc1+ReLU -> fc2+ReLU -> fc3, fused.

    Patch rows inside each parity slab are position-major (row = pos*n + s),
    so the NHWC flatten is an in-register lane concat of the n-row slabs of
    the 25 pooled positions; no intermediate of this stage ever leaves VMEM.
    """
    mxu = w2_ref.dtype
    y = jnp.dot(p_ref[...], w2_ref[...], preferred_element_type=jnp.float32)
    m2 = y.shape[0] // 4
    pooled = jnp.maximum(jnp.maximum(y[0 * m2:1 * m2], y[1 * m2:2 * m2]),
                         jnp.maximum(y[2 * m2:3 * m2], y[3 * m2:4 * m2]))
    act = jnp.maximum(pooled + b2_ref[...], 0.0)          # (npos*n, cout2)
    npos = m2 // n
    # flatten: feature order (oi, oj, c); wfc1 rows were pre-permuted to match.
    flat = jnp.concatenate([act[p * n:(p + 1) * n, :] for p in range(npos)],
                           axis=1)                        # (n, npos*cout2)
    h = jnp.dot(flat.astype(mxu), wf1_ref[...], preferred_element_type=jnp.float32)
    h = jnp.maximum(h + bf1_ref[...], 0.0)
    h = jnp.dot(h.astype(mxu), wf2_ref[...], preferred_element_type=jnp.float32)
    h = jnp.maximum(h + bf2_ref[...], 0.0)
    h = jnp.dot(h.astype(mxu), wf3_ref[...], preferred_element_type=jnp.float32)
    o_ref[...] = (h + bf3_ref[...]).astype(o_ref.dtype)


# ----------------------------- kernel wrappers ------------------------------

def _nbytes(*arrs):
    return sum(int(a.size) * a.dtype.itemsize for a in arrs)


def conv_relu_pool(patches, wmat, bias):
    """patches: (4*M2, K) stacked parity patches; wmat: (K, Cout);
    bias: (1, Cout) f32 -> pooled activation (M2, Cout) f32."""
    m4, k = patches.shape
    m2 = m4 // 4
    cout = wmat.shape[1]
    cost = pl.CostEstimate(flops=2 * m4 * k * cout, transcendentals=0,
                           bytes_accessed=_nbytes(patches, wmat, bias) + m2 * cout * 4)
    # No grid: all operands << VMEM on v5e/v6e/v7x; whole-array VMEM blocks
    # avoid per-step pipeline overhead.  Only add an M-grid with
    # dimension_semantics=("parallel",) (second v7x TensorCore) once
    # batch*spatial rows reach the thousands.
    return pl.pallas_call(
        _conv_relu_pool_kernel,
        out_shape=jax.ShapeDtypeStruct((m2, cout), jnp.float32),
        in_specs=[_VMEM] * 3,
        out_specs=_VMEM,
        cost_estimate=cost,
    )(patches, wmat, bias)


def conv_pool_mlp(patches, n, w2, b2, wf1, bf1, wf2, bf2, wf3, bf3):
    """Fused conv2+ReLU+pool + 3-layer MLP.  patches: (4*25*n, K2)."""
    m4, k = patches.shape
    cout2 = w2.shape[1]
    ncls = wf3.shape[1]
    flops = 2 * (m4 * k * cout2
                 + n * wf1.shape[0] * wf1.shape[1]
                 + n * wf2.shape[0] * wf2.shape[1]
                 + n * wf3.shape[0] * ncls)
    cost = pl.CostEstimate(
        flops=flops, transcendentals=0,
        bytes_accessed=_nbytes(patches, w2, b2, wf1, bf1, wf2, bf2, wf3, bf3)
        + n * ncls * 4)
    kern = functools.partial(_conv_pool_mlp_kernel, n=n)
    return pl.pallas_call(
        kern,
        out_shape=jax.ShapeDtypeStruct((n, ncls), jnp.float32),
        in_specs=[_VMEM] * 9,
        out_specs=_VMEM,
        cost_estimate=cost,
    )(patches, w2, b2, wf1, bf1, wf2, bf2, wf3, bf3)


# ------------------------------- glue ops ----------------------------------

def _conv1_parity_patches(x_nchw, kh, kw, dtype):
    """Stacked pool-parity im2col patches sliced straight from NCHW input (the
    NCHW->NHWC transpose is folded into this gather).  Returns
    (4 * n*OH2*OW2, Cin*kh*kw); rows within a parity are sample-major
    (s, oi, oj); feature order (cin, ki, kj) -- matches prepped `w1`."""
    n, c, h, w = x_nchw.shape
    oh2, ow2 = (h - kh + 1) // 2, (w - kw + 1) // 2
    x = x_nchw.astype(dtype)
    blocks = []
    for di in (0, 1):
        for dj in (0, 1):
            taps = [x[:, :, di + ki:di + ki + 2 * oh2:2,
                      dj + kj:dj + kj + 2 * ow2:2]
                    for ki in range(kh) for kj in range(kw)]
            t = jnp.stack(taps, axis=2)               # (n, c, kh*kw, oh2, ow2)
            t = jnp.transpose(t, (0, 3, 4, 1, 2))     # (n, oh2, ow2, c, kh*kw)
            blocks.append(t.reshape(n * oh2 * ow2, c * kh * kw))
    return jnp.concatenate(blocks, axis=0)


def _conv2_parity_patches(y_nhwc, kh, kw, dtype):
    """Stacked parity patches for stage 2; rows inside each parity are
    position-major (oi, oj, s) so the fused kernel can flatten in-register;
    feature order (ki, kj, c) -- matches prepped `w2`."""
    n, h, w, c = y_nhwc.shape
    oh2, ow2 = (h - kh + 1) // 2, (w - kw + 1) // 2
    y = y_nhwc.astype(dtype)
    blocks = []
    for di in (0, 1):
        for dj in (0, 1):
            taps = [y[:, di + ki:di + ki + 2 * oh2:2,
                      dj + kj:dj + kj + 2 * ow2:2, :]
                    for ki in range(kh) for kj in range(kw)]
            t = jnp.concatenate(taps, axis=-1)        # (n, oh2, ow2, kh*kw*c)
            t = jnp.transpose(t, (1, 2, 0, 3))        # (oh2, ow2, n, kh*kw*c)
            blocks.append(t.reshape(oh2 * ow2 * n, kh * kw * c))
    return jnp.concatenate(blocks, axis=0)


# ------------------------------- parameters ---------------------------------

def init_params(key, input_shape=(32, 32, 3), num_classes=10):
    """Deterministic parameter init (PyTorch-style shapes, uniform fan-in)."""
    h, w, ch = input_shape
    oh1, ow1 = (h - 4) // 2, (w - 4) // 2
    oh2, ow2 = (oh1 - 4) // 2, (ow1 - 4) // 2
    flat = 16 * oh2 * ow2  # == num_flat_features after the second pool

    def u(key, shape, fan_in):
        bound = 1.0 / jnp.sqrt(jnp.float32(fan_in))
        return jax.random.uniform(key, shape, jnp.float32, -bound, bound)

    ks = jax.random.split(key, 10)
    return {
        "w_conv1": u(ks[0], (6, ch, 5, 5), ch * 25),
        "b_conv1": u(ks[1], (6,), ch * 25),
        "w_conv2": u(ks[2], (16, 6, 5, 5), 6 * 25),
        "b_conv2": u(ks[3], (16,), 6 * 25),
        # NOTE: the PyTorch module builds nn.Linear(flat, 120) *inside* forward
        # (fresh random weights each call); here it is a fixed parameter.
        "w_fc1": u(ks[4], (120, flat), flat),   # flat in torch NCHW (c,h,w) order
        "b_fc1": u(ks[5], (120,), flat),
        "w_fc2": u(ks[6], (84, 120), 120),
        "b_fc2": u(ks[7], (84,), 120),
        "w_fc3": u(ks[8], (num_classes, 84), 84),
        "b_fc3": u(ks[9], (num_classes,), 84),
    }


def prepare_params(params, input_shape=(32, 32, 3)):
    """One-time re-layout of PyTorch-style params into the matrix forms the
    Pallas kernels consume (all transposes/reshapes/casts hoisted out of
    forward, weights stored directly in MXU_DTYPE)."""
    h, w, _ = input_shape
    oh1, ow1 = (h - 4) // 2, (w - 4) // 2
    oh2, ow2 = (oh1 - 4) // 2, (ow1 - 4) // 2
    dt = MXU_DTYPE

    def conv1_w(w_oihw):                      # rows ordered (cin, ki, kj)
        cout, cin, kh, kw = w_oihw.shape
        return jnp.transpose(w_oihw, (1, 2, 3, 0)).reshape(cin * kh * kw, cout).astype(dt)

    def conv2_w(w_oihw):                      # rows ordered (ki, kj, cin)
        cout, cin, kh, kw = w_oihw.shape
        return jnp.transpose(w_oihw, (2, 3, 1, 0)).reshape(kh * kw * cin, cout).astype(dt)

    # Fold torch's NCHW flatten order into the fc1 weight: reorder its columns
    # to the kernel's (oi, oj, c) flatten order, then transpose.
    c2 = params["w_conv2"].shape[0]
    n_fc1, flat = params["w_fc1"].shape
    wfc1 = params["w_fc1"].reshape(n_fc1, c2, oh2, ow2)
    wfc1 = jnp.transpose(wfc1, (0, 2, 3, 1)).reshape(n_fc1, flat)

    f32 = lambda a: a.astype(jnp.float32)
    return {
        "w1": conv1_w(params["w_conv1"]),
        "b1": f32(params["b_conv1"]).reshape(1, -1),
        "w2": conv2_w(params["w_conv2"]),
        "b2": f32(params["b_conv2"]).reshape(1, -1),
        "wfc1": wfc1.T.astype(dt),            # (flat, 120), (oi,oj,c) row order
        "bfc1": f32(params["b_fc1"]).reshape(1, -1),
        "wfc2": f32(params["w_fc2"]).T.astype(dt),      # (120, 84)
        "bfc2": f32(params["b_fc2"]).reshape(1, -1),
        "wfc3": f32(params["w_fc3"]).T.astype(dt),      # (84, num_classes)
        "bfc3": f32(params["b_fc3"]).reshape(1, -1),
    }


# ----------------------------- SimpleNet forward ----------------------------

@jax.jit
def simplenet_forward(x_nchw, prepped):
    n = x_nchw.shape[0]
    oh1 = (x_nchw.shape[2] - 4) // 2
    ow1 = (x_nchw.shape[3] - 4) // 2
    c1 = prepped["w1"].shape[1]
    dt = prepped["w1"].dtype

    # stage 1: conv1(5x5) + ReLU + 2x2 maxpool -- one fused pallas_call.
    p1 = _conv1_parity_patches(x_nchw, 5, 5, dt)            # (4*n*oh1*ow1, 75)
    y1 = conv_relu_pool(p1, prepped["w1"], prepped["b1"])   # (n*oh1*ow1, 6)
    y1 = y1.reshape(n, oh1, ow1, c1)                        # free: same HBM layout

    # stage 2+3: conv2(5x5)+ReLU+pool -> flatten -> fc1/fc2/fc3 -- one call.
    p2 = _conv2_parity_patches(y1, 5, 5, dt)                # (4*25*n, 150)
    return conv_pool_mlp(p2, n,
                         prepped["w2"], prepped["b2"],
                         prepped["wfc1"], prepped["bfc1"],
                         prepped["wfc2"], prepped["bfc2"],
                         prepped["wfc3"], prepped["bfc3"])


# ------------------------------ pure-JAX check ------------------------------

def simplenet_reference(x_nchw, params):
    """Pure-JAX f32 reference of the torch forward (tolerance guard)."""
    x = x_nchw.astype(jnp.float32)

    def conv(x, w, b):
        y = jax.lax.conv_general_dilated(
            x, w, window_strides=(1, 1), padding="VALID",
            dimension_numbers=("NCHW", "OIHW", "NCHW"))
        return y + b.reshape(1, -1, 1, 1)

    def pool(x):
        return jax.lax.reduce_window(x, -jnp.inf, jax.lax.max,
                                     (1, 1, 2, 2), (1, 1, 2, 2), "VALID")

    y = pool(jax.nn.relu(conv(x, params["w_conv1"], params["b_conv1"])))
    y = pool(jax.nn.relu(conv(y, params["w_conv2"], params["b_conv2"])))
    y = y.reshape(y.shape[0], -1)                   # torch NCHW flatten order
    y = jax.nn.relu(y @ params["w_fc1"].T + params["b_fc1"])
    y = jax.nn.relu(y @ params["w_fc2"].T + params["b_fc2"])
    return y @ params["w_fc3"].T + params["b_fc3"]


if __name__ == "__main__":
    key = jax.random.PRNGKey(0)
    k_x, k_p = jax.random.split(key)

    batch = 2
    input_shape = (32, 32, 3)            # (H, W, C) as in the module signature
    num_classes = 10

    # PyTorch conv input convention: NCHW
    x = jax.random.normal(
        k_x, (batch, input_shape[2], input_shape[0], input_shape[1]),
        dtype=jnp.float32)
    params = init_params(k_p, input_shape=input_shape, num_classes=num_classes)
    prepped = prepare_params(params, input_shape=input_shape)

    out = jax.block_until_ready(simplenet_forward(x, prepped))
    assert out.shape == (batch, num_classes), out.shape
    assert bool(jnp.all(jnp.isfinite(out)))

    if MXU_DTYPE == jnp.float32:         # exact-semantics mode: validate
        ref = jax.block_until_ready(simplenet_reference(x, params))
        max_err = float(jnp.max(jnp.abs(out - ref)))
        assert jnp.allclose(out, ref, atol=1e-3, rtol=1e-3), max_err

    print("KERNEL_OK")
</pallas_src>

<mosaic_0001>
module attributes {stable_mosaic.version = 11 : i64} {
  func.func @_conv_relu_pool_kernel(%arg0: memref<1568x75xf32, #tpu.memory_space<vmem>>, %arg1: memref<75x6xf32, #tpu.memory_space<vmem>>, %arg2: memref<1x6xf32, #tpu.memory_space<vmem>>, %arg3: memref<392x6xf32, #tpu.memory_space<vmem>>) attributes {dimension_semantics = [], scalar_prefetch = 0 : i64, scratch_operands = 0 : i64, tpu.core_type = #tpu.core_type<tc>} {
    %c0 = arith.constant 0 : index
    %c0_0 = arith.constant 0 : index
    %0 = vector.load %arg0[%c0, %c0_0] : memref<1568x75xf32, #tpu.memory_space<vmem>>, vector<1568x75xf32>
    %c0_1 = arith.constant 0 : index
    %c0_2 = arith.constant 0 : index
    %1 = vector.load %arg1[%c0_1, %c0_2] : memref<75x6xf32, #tpu.memory_space<vmem>>, vector<75x6xf32>
    %cst = arith.constant dense<0.000000e+00> : vector<1568x6xf32>
    %2 = tpu.matmul %0, %1, %cst {dimension_numbers = #tpu.dot_dimension_numbers<[1], [0], [0], [1], [0, 0, 1, 1], [], []>} : vector<1568x75xf32>, vector<75x6xf32>, vector<1568x6xf32> -> vector<1568x6xf32>
    %3 = vector.extract_strided_slice %2 {offsets = [0, 0], sizes = [392, 6], strides = [1, 1]} : vector<1568x6xf32> to vector<392x6xf32>
    %4 = vector.extract_strided_slice %2 {offsets = [392, 0], sizes = [392, 6], strides = [1, 1]} : vector<1568x6xf32> to vector<392x6xf32>
    %5 = arith.maximumf %3, %4 : vector<392x6xf32>
    %6 = vector.extract_strided_slice %2 {offsets = [784, 0], sizes = [392, 6], strides = [1, 1]} : vector<1568x6xf32> to vector<392x6xf32>
    %7 = vector.extract_strided_slice %2 {offsets = [1176, 0], sizes = [392, 6], strides = [1, 1]} : vector<1568x6xf32> to vector<392x6xf32>
    %8 = arith.maximumf %6, %7 : vector<392x6xf32>
    %9 = arith.maximumf %5, %8 : vector<392x6xf32>
    %c0_3 = arith.constant 0 : index
    %c0_4 = arith.constant 0 : index
    %10 = vector.load %arg2[%c0_3, %c0_4] : memref<1x6xf32, #tpu.memory_space<vmem>>, vector<1x6xf32>
    %11 = vector.broadcast %10 : vector<1x6xf32> to vector<392x6xf32>
    %12 = arith.addf %9, %11 : vector<392x6xf32>
    %cst_5 = arith.constant 0.000000e+00 : f32
    %13 = vector.broadcast %cst_5 : f32 to vector<392x6xf32>
    %14 = arith.maximumf %12, %13 : vector<392x6xf32>
    %c0_6 = arith.constant 0 : index
    %c0_7 = arith.constant 0 : index
    %15 = vector.load %arg3[%c0_6, %c0_7] : memref<392x6xf32, #tpu.memory_space<vmem>>, vector<392x6xf32>
    tpu.vector_store %arg3[%c0_6, %c0_7], %14 {strides = array<i32>} : memref<392x6xf32, #tpu.memory_space<vmem>>, vector<392x6xf32>,
    return
  }
}

module attributes {stable_mosaic.version = 11 : i64} {
  func.func @_conv_pool_mlp_kernel(%arg0: memref<200x150xf32, #tpu.memory_space<vmem>>, %arg1: memref<150x16xf32, #tpu.memory_space<vmem>>, %arg2: memref<1x16xf32, #tpu.memory_space<vmem>>, %arg3: memref<400x120xf32, #tpu.memory_space<vmem>>, %arg4: memref<1x120xf32, #tpu.memory_space<vmem>>, %arg5: memref<120x84xf32, #tpu.memory_space<vmem>>, %arg6: memref<1x84xf32, #tpu.memory_space<vmem>>, %arg7: memref<84x10xf32, #tpu.memory_space<vmem>>, %arg8: memref<1x10xf32, #tpu.memory_space<vmem>>, %arg9: memref<2x10xf32, #tpu.memory_space<vmem>>) attributes {dimension_semantics = [], scalar_prefetch = 0 : i64, scratch_operands = 0 : i64, tpu.core_type = #tpu.core_type<tc>} {
    %c0 = arith.constant 0 : index
    %c0_0 = arith.constant 0 : index
    %0 = vector.load %arg0[%c0, %c0_0] : memref<200x150xf32, #tpu.memory_space<vmem>>, vector<200x150xf32>
    %c0_1 = arith.constant 0 : index
    %c0_2 = arith.constant 0 : index
    %1 = vector.load %arg1[%c0_1, %c0_2] : memref<150x16xf32, #tpu.memory_space<vmem>>, vector<150x16xf32>
    %cst = arith.constant dense<0.000000e+00> : vector<200x16xf32>
    %2 = tpu.matmul %0, %1, %cst {dimension_numbers = #tpu.dot_dimension_numbers<[1], [0], [0], [1], [0, 0, 1, 1], [], []>} : vector<200x150xf32>, vector<150x16xf32>, vector<200x16xf32> -> vector<200x16xf32>
    %3 = vector.extract_strided_slice %2 {offsets = [0, 0], sizes = [50, 16], strides = [1, 1]} : vector<200x16xf32> to vector<50x16xf32>
    %4 = vector.extract_strided_slice %2 {offsets = [50, 0], sizes = [50, 16], strides = [1, 1]} : vector<200x16xf32> to vector<50x16xf32>
    %5 = arith.maximumf %3, %4 : vector<50x16xf32>
    %6 = vector.extract_strided_slice %2 {offsets = [100, 0], sizes = [50, 16], strides = [1, 1]} : vector<200x16xf32> to vector<50x16xf32>
    %7 = vector.extract_strided_slice %2 {offsets = [150, 0], sizes = [50, 16], strides = [1, 1]} : vector<200x16xf32> to vector<50x16xf32>
    %8 = arith.maximumf %6, %7 : vector<50x16xf32>
    %9 = arith.maximumf %5, %8 : vector<50x16xf32>
    %c0_3 = arith.constant 0 : index
    %c0_4 = arith.constant 0 : index
    %10 = vector.load %arg2[%c0_3, %c0_4] : memref<1x16xf32, #tpu.memory_space<vmem>>, vector<1x16xf32>
    %11 = vector.broadcast %10 : vector<1x16xf32> to vector<50x16xf32>
    %12 = arith.addf %9, %11 : vector<50x16xf32>
    %cst_5 = arith.constant 0.000000e+00 : f32
    %13 = vector.broadcast %cst_5 : f32 to vector<50x16xf32>
    %14 = arith.maximumf %12, %13 : vector<50x16xf32>
    %15 = vector.extract_strided_slice %14 {offsets = [0, 0], sizes = [2, 16], strides = [1, 1]} : vector<50x16xf32> to vector<2x16xf32>
    %16 = vector.extract_strided_slice %14 {offsets = [2, 0], sizes = [2, 16], strides = [1, 1]} : vector<50x16xf32> to vector<2x16xf32>
    %17 = vector.extract_strided_slice %14 {offsets = [4, 0], sizes = [2, 16], strides = [1, 1]} : vector<50x16xf32> to vector<2x16xf32>
    %18 = vector.extract_strided_slice %14 {offsets = [6, 0], sizes = [2, 16], strides = [1, 1]} : vector<50x16xf32> to vector<2x16xf32>
    %19 = vector.extract_strided_slice %14 {offsets = [8, 0], sizes = [2, 16], strides = [1, 1]} : vector<50x16xf32> to vector<2x16xf32>
    %20 = vector.extract_strided_slice %14 {offsets = [10, 0], sizes = [2, 16], strides = [1, 1]} : vector<50x16xf32> to vector<2x16xf32>
    %21 = vector.extract_strided_slice %14 {offsets = [12, 0], sizes = [2, 16], strides = [1, 1]} : vector<50x16xf32> to vector<2x16xf32>
    %22 = vector.extract_strided_slice %14 {offsets = [14, 0], sizes = [2, 16], strides = [1, 1]} : vector<50x16xf32> to vector<2x16xf32>
    %23 = vector.extract_strided_slice %14 {offsets = [16, 0], sizes = [2, 16], strides = [1, 1]} : vector<50x16xf32> to vector<2x16xf32>
    %24 = vector.extract_strided_slice %14 {offsets = [18, 0], sizes = [2, 16], strides = [1, 1]} : vector<50x16xf32> to vector<2x16xf32>
    %25 = vector.extract_strided_slice %14 {offsets = [20, 0], sizes = [2, 16], strides = [1, 1]} : vector<50x16xf32> to vector<2x16xf32>
    %26 = vector.extract_strided_slice %14 {offsets = [22, 0], sizes = [2, 16], strides = [1, 1]} : vector<50x16xf32> to vector<2x16xf32>
    %27 = vector.extract_strided_slice %14 {offsets = [24, 0], sizes = [2, 16], strides = [1, 1]} : vector<50x16xf32> to vector<2x16xf32>
    %28 = vector.extract_strided_slice %14 {offsets = [26, 0], sizes = [2, 16], strides = [1, 1]} : vector<50x16xf32> to vector<2x16xf32>
    %29 = vector.extract_strided_slice %14 {offsets = [28, 0], sizes = [2, 16], strides = [1, 1]} : vector<50x16xf32> to vector<2x16xf32>
    %30 = vector.extract_strided_slice %14 {offsets = [30, 0], sizes = [2, 16], strides = [1, 1]} : vector<50x16xf32> to vector<2x16xf32>
    %31 = vector.extract_strided_slice %14 {offsets = [32, 0], sizes = [2, 16], strides = [1, 1]} : vector<50x16xf32> to vector<2x16xf32>
    %32 = vector.extract_strided_slice %14 {offsets = [34, 0], sizes = [2, 16], strides = [1, 1]} : vector<50x16xf32> to vector<2x16xf32>
    %33 = vector.extract_strided_slice %14 {offsets = [36, 0], sizes = [2, 16], strides = [1, 1]} : vector<50x16xf32> to vector<2x16xf32>
    %34 = vector.extract_strided_slice %14 {offsets = [38, 0], sizes = [2, 16], strides = [1, 1]} : vector<50x16xf32> to vector<2x16xf32>
    %35 = vector.extract_strided_slice %14 {offsets = [40, 0], sizes = [2, 16], strides = [1, 1]} : vector<50x16xf32> to vector<2x16xf32>
    %36 = vector.extract_strided_slice %14 {offsets = [42, 0], sizes = [2, 16], strides = [1, 1]} : vector<50x16xf32> to vector<2x16xf32>
    %37 = vector.extract_strided_slice %14 {offsets = [44, 0], sizes = [2, 16], strides = [1, 1]} : vector<50x16xf32> to vector<2x16xf32>
    %38 = vector.extract_strided_slice %14 {offsets = [46, 0], sizes = [2, 16], strides = [1, 1]} : vector<50x16xf32> to vector<2x16xf32>
    %39 = vector.extract_strided_slice %14 {offsets = [48, 0], sizes = [2, 16], strides = [1, 1]} : vector<50x16xf32> to vector<2x16xf32>
    %40 = tpu.concatenate %15, %16, %17, %18, %19, %20, %21, %22, %23, %24, %25, %26, %27, %28, %29, %30 in 1 : vector<2x16xf32>, vector<2x16xf32>, vector<2x16xf32>, vector<2x16xf32>, vector<2x16xf32>, vector<2x16xf32>, vector<2x16xf32>, vector<2x16xf32>, vector<2x16xf32>, vector<2x16xf32>, vector<2x16xf32>, vector<2x16xf32>, vector<2x16xf32>, vector<2x16xf32>, vector<2x16xf32>, vector<2x16xf32> -> vector<2x256xf32>
    %41 = tpu.concatenate %31, %32, %33, %34, %35, %36, %37, %38, %39 in 1 : vector<2x16xf32>, vector<2x16xf32>, vector<2x16xf32>, vector<2x16xf32>, vector<2x16xf32>, vector<2x16xf32>, vector<2x16xf32>, vector<2x16xf32>, vector<2x16xf32> -> vector<2x144xf32>
    %42 = tpu.concatenate %40, %41 in 1 : vector<2x256xf32>, vector<2x144xf32> -> vector<2x400xf32>
    %c0_6 = arith.constant 0 : index
    %c0_7 = arith.constant 0 : index
    %43 = vector.load %arg3[%c0_6, %c0_7] : memref<400x120xf32, #tpu.memory_space<vmem>>, vector<400x120xf32>
    %cst_8 = arith.constant dense<0.000000e+00> : vector<2x120xf32>
    %44 = tpu.matmul %42, %43, %cst_8 {dimension_numbers = #tpu.dot_dimension_numbers<[1], [0], [0], [1], [0, 0, 1, 1], [], []>} : vector<2x400xf32>, vector<400x120xf32>, vector<2x120xf32> -> vector<2x120xf32>
    %c0_9 = arith.constant 0 : index
    %c0_10 = arith.constant 0 : index
    %45 = vector.load %arg4[%c0_9, %c0_10] : memref<1x120xf32, #tpu.memory_space<vmem>>, vector<1x120xf32>
    %46 = vector.broadcast %45 : vector<1x120xf32> to vector<2x120xf32>
    %47 = arith.addf %44, %46 : vector<2x120xf32>
    %cst_11 = arith.constant 0.000000e+00 : f32
    %48 = vector.broadcast %cst_11 : f32 to vector<2x120xf32>
    %49 = arith.maximumf %47, %48 : vector<2x120xf32>
    %c0_12 = arith.constant 0 : index
    %c0_13 = arith.constant 0 : index
    %50 = vector.load %arg5[%c0_12, %c0_13] : memref<120x84xf32, #tpu.memory_space<vmem>>, vector<120x84xf32>
    %cst_14 = arith.constant dense<0.000000e+00> : vector<2x84xf32>
    %51 = tpu.matmul %49, %50, %cst_14 {dimension_numbers = #tpu.dot_dimension_numbers<[1], [0], [0], [1], [0, 0, 1, 1], [], []>} : vector<2x120xf32>, vector<120x84xf32>, vector<2x84xf32> -> vector<2x84xf32>
    %c0_15 = arith.constant 0 : index
    %c0_16 = arith.constant 0 : index
    %52 = vector.load %arg6[%c0_15, %c0_16] : memref<1x84xf32, #tpu.memory_space<vmem>>, vector<1x84xf32>
    %53 = vector.broadcast %52 : vector<1x84xf32> to vector<2x84xf32>
    %54 = arith.addf %51, %53 : vector<2x84xf32>
    %cst_17 = arith.constant 0.000000e+00 : f32
    %55 = vector.broadcast %cst_17 : f32 to vector<2x84xf32>
    %56 = arith.maximumf %54, %55 : vector<2x84xf32>
    %c0_18 = arith.constant 0 : index
    %c0_19 = arith.constant 0 : index
    %57 = vector.load %arg7[%c0_18, %c0_19] : memref<84x10xf32, #tpu.memory_space<vmem>>, vector<84x10xf32>
    %cst_20 = arith.constant dense<0.000000e+00> : vector<2x10xf32>
    %58 = tpu.matmul %56, %57, %cst_20 {dimension_numbers = #tpu.dot_dimension_numbers<[1], [0], [0], [1], [0, 0, 1, 1], [], []>} : vector<2x84xf32>, vector<84x10xf32>, vector<2x10xf32> -> vector<2x10xf32>
    %c0_21 = arith.constant 0 : index
    %c0_22 = arith.constant 0 : index
    %59 = vector.load %arg8[%c0_21, %c0_22] : memref<1x10xf32, #tpu.memory_space<vmem>>, vector<1x10xf32>
    %60 = vector.broadcast %59 : vector<1x10xf32> to vector<2x10xf32>
    %61 = arith.addf %58, %60 : vector<2x10xf32>
    %c0_23 = arith.constant 0 : index
    %c0_24 = arith.constant 0 : index
    %62 = vector.load %arg9[%c0_23, %c0_24] : memref<2x10xf32, #tpu.memory_space<vmem>>, vector<2x10xf32>
    tpu.vector_store %arg9[%c0_23, %c0_24], %61 {strides = array<i32>} : memref<2x10xf32, #tpu.memory_space<vmem>>, vector<2x10xf32>,
    return
  }
}

</mosaic_0001>

<llo_original>
// kernel: simplenet_forward.2
$region0: #{simplenet_forward.2}
  #allocation0 [shape = 'u32[]', space=smem, size = 0x4, offset = 0x4, fixed_abs, tag = 'smem constant byte address 0x4 - core index']
  #allocation1 [shape = 'u32[144,128]{1,0:T(1,128)}', space=vmem, size = 0x12000, scoped, tag = 'internal scratch']
  %s0 = inlined_call_operand.vmem [shape: f32[1568,75], index: 0, kind: input, shape index: {}]
  %s1 = inlined_call_operand.vmem [shape: f32[75,6], index: 1, kind: input, shape index: {}]
  %s2 = inlined_call_operand.vmem [shape: f32[1,6], index: 2, kind: input, shape index: {}]
  %s3 = inlined_call_operand.vmem [shape: f32[392,6], index: 3, kind: output, shape index: {}]
  %s4 = sld [smem:[#allocation0]]
  $region22: #{simplenet_forward.2} parent=0
    _
  %s6 = ssub.s32 1, %s4
  %s7 = scalar_select 0, %s6, %s4
  // Predicated region
  $region2: #{simplenet_forward.2} parent=0 // pred_check
    _
  $region3: #{simplenet_forward.2} parent=0 // pred_check_branch
    %9 = sbr.rel (0) target = $region5
  $region4: #{simplenet_forward.2} parent=0 // pred_region
    _
  $region5: #{simplenet_forward.2} parent=0 // pred_fallthru
    _
  // Predicated region
  $region6: #{simplenet_forward.2} parent=0 // pred_check
    _
  $region7: #{simplenet_forward.2} parent=0 // pred_check_branch
    %11 = sbr.rel (0) target = $region9
  $region8: #{simplenet_forward.2} parent=0 // pred_region
    _
  $region9: #{simplenet_forward.2} parent=0 // pred_fallthru
    _
  // Predicated region
  $region10: #{simplenet_forward.2} parent=0 // pred_check
    _
  $region11: #{simplenet_forward.2} parent=0 // pred_check_branch
    %13 = sbr.rel (0) target = $region13
  $region12: #{simplenet_forward.2} parent=0 // pred_region
    _
  $region13: #{simplenet_forward.2} parent=0 // pred_fallthru
    _
  %v14 = vld [vmem:[%s0] sm:$0xff]
  %v15 = vld [vmem:[%s0 + $0x8] sm:$0xff]
  %v16 = vld [vmem:[%s0 + $0x10] sm:$0xff]
  %v17 = vld [vmem:[%s0 + $0x18] sm:$0xff]
  %v18 = vld [vmem:[%s0 + $0x20] sm:$0xff]
  %v19 = vld [vmem:[%s0 + $0x28] sm:$0xff]
  %v20 = vld [vmem:[%s0 + $0x30] sm:$0xff]
  %v21 = vld [vmem:[%s0 + $0x38] sm:$0xff]
  %v22 = vld [vmem:[%s0 + $0x40] sm:$0xff]
  %v23 = vld [vmem:[%s0 + $0x48] sm:$0xff]
  %v24 = vld [vmem:[%s0 + $0x50] sm:$0xff]
  %v25 = vld [vmem:[%s0 + $0x58] sm:$0xff]
  %v26 = vld [vmem:[%s0 + $0x60] sm:$0xff]
  %v27 = vld [vmem:[%s0 + $0x68] sm:$0xff]
  %v28 = vld [vmem:[%s0 + $0x70] sm:$0xff]
  %v29 = vld [vmem:[%s0 + $0x78] sm:$0xff]
  %v30 = vld [vmem:[%s0 + $0x80] sm:$0xff]
  %v31 = vld [vmem:[%s0 + $0x88] sm:$0xff]
  %v32 = vld [vmem:[%s0 + $0x90] sm:$0xff]
  %v33 = vld [vmem:[%s0 + $0x98] sm:$0xff]
  %v34 = vld [vmem:[%s0 + $0xa0] sm:$0xff]
  %v35 = vld [vmem:[%s0 + $0xa8] sm:$0xff]
  %v36 = vld [vmem:[%s0 + $0xb0] sm:$0xff]
  %v37 = vld [vmem:[%s0 + $0xb8] sm:$0xff]
  %v38 = vld [vmem:[%s0 + $0xc0] sm:$0xff]
  %v39 = vld [vmem:[%s0 + $0xc8] sm:$0xff]
  %v40 = vld [vmem:[%s0 + $0xd0] sm:$0xff]
  %v41 = vld [vmem:[%s0 + $0xd8] sm:$0xff]
  %v42 = vld [vmem:[%s0 + $0xe0] sm:$0xff]
  %v43 = vld [vmem:[%s0 + $0xe8] sm:$0xff]
  %v44 = vld [vmem:[%s0 + $0xf0] sm:$0xff]
  %v45 = vld [vmem:[%s0 + $0xf8] sm:$0xff]
  %v46 = vld [vmem:[%s0 + $0x100] sm:$0xff]
  %v47 = vld [vmem:[%s0 + $0x108] sm:$0xff]
  %v48 = vld [vmem:[%s0 + $0x110] sm:$0xff]
  %v49 = vld [vmem:[%s0 + $0x118] sm:$0xff]
  %v50 = vld [vmem:[%s0 + $0x120] sm:$0xff]
  %v51 = vld [vmem:[%s0 + $0x128] sm:$0xff]
  %v52 = vld [vmem:[%s0 + $0x130] sm:$0xff]
  %v53 = vld [vmem:[%s0 + $0x138] sm:$0xff]
  %v54 = vld [vmem:[%s0 + $0x140] sm:$0xff]
  %v55 = vld [vmem:[%s0 + $0x148] sm:$0xff]
  %v56 = vld [vmem:[%s0 + $0x150] sm:$0xff]
  %v57 = vld [vmem:[%s0 + $0x158] sm:$0xff]
  %v58 = vld [vmem:[%s0 + $0x160] sm:$0xff]
  %v59 = vld [vmem:[%s0 + $0x168] sm:$0xff]
  %v60 = vld [vmem:[%s0 + $0x170] sm:$0xff]
  %v61 = vld [vmem:[%s0 + $0x178] sm:$0xff]
  %v62 = vld [vmem:[%s0 + $0x180] sm:$0xff]
  %v63 = vld [vmem:[%s0 + $0x188] sm:$0xff]
  %v64 = vld [vmem:[%s0 + $0x190] sm:$0xff]
  %v65 = vld [vmem:[%s0 + $0x198] sm:$0xff]
  %v66 = vld [vmem:[%s0 + $0x1a0] sm:$0xff]
  %v67 = vld [vmem:[%s0 + $0x1a8] sm:$0xff]
  %v68 = vld [vmem:[%s0 + $0x1b0] sm:$0xff]
  %v69 = vld [vmem:[%s0 + $0x1b8] sm:$0xff]
  %v70 = vld [vmem:[%s0 + $0x1c0] sm:$0xff]
  %v71 = vld [vmem:[%s0 + $0x1c8] sm:$0xff]
  %v72 = vld [vmem:[%s0 + $0x1d0] sm:$0xff]
  %v73 = vld [vmem:[%s0 + $0x1d8] sm:$0xff]
  %v74 = vld [vmem:[%s0 + $0x1e0] sm:$0xff]
  %v75 = vld [vmem:[%s0 + $0x1e8] sm:$0xff]
  %v76 = vld [vmem:[%s0 + $0x1f0] sm:$0xff]
  %v77 = vld [vmem:[%s0 + $0x1f8] sm:$0xff]
  %v78 = vld [vmem:[%s0 + $0x200] sm:$0xff]
  %v79 = vld [vmem:[%s0 + $0x208] sm:$0xff]
  %v80 = vld [vmem:[%s0 + $0x210] sm:$0xff]
  %v81 = vld [vmem:[%s0 + $0x218] sm:$0xff]
  %v82 = vld [vmem:[%s0 + $0x220] sm:$0xff]
  %v83 = vld [vmem:[%s0 + $0x228] sm:$0xff]
  %v84 = vld [vmem:[%s0 + $0x230] sm:$0xff]
  %v85 = vld [vmem:[%s0 + $0x238] sm:$0xff]
  %v86 = vld [vmem:[%s0 + $0x240] sm:$0xff]
  %v87 = vld [vmem:[%s0 + $0x248] sm:$0xff]
  %v88 = vld [vmem:[%s0 + $0x250] sm:$0xff]
  %v89 = vld [vmem:[%s0 + $0x258] sm:$0xff]
  %v90 = vld [vmem:[%s0 + $0x260] sm:$0xff]
  %v91 = vld [vmem:[%s0 + $0x268] sm:$0xff]
  %v92 = vld [vmem:[%s0 + $0x270] sm:$0xff]
  %v93 = vld [vmem:[%s0 + $0x278] sm:$0xff]
  %v94 = vld [vmem:[%s0 + $0x280] sm:$0xff]
  %v95 = vld [vmem:[%s0 + $0x288] sm:$0xff]
  %v96 = vld [vmem:[%s0 + $0x290] sm:$0xff]
  %v97 = vld [vmem:[%s0 + $0x298] sm:$0xff]
  %v98 = vld [vmem:[%s0 + $0x2a0] sm:$0xff]
  %v99 = vld [vmem:[%s0 + $0x2a8] sm:$0xff]
  %v100 = vld [vmem:[%s0 + $0x2b0] sm:$0xff]
  %v101 = vld [vmem:[%s0 + $0x2b8] sm:$0xff]
  %v102 = vld [vmem:[%s0 + $0x2c0] sm:$0xff]
  %v103 = vld [vmem:[%s0 + $0x2c8] sm:$0xff]
  %v104 = vld [vmem:[%s0 + $0x2d0] sm:$0xff]
  %v105 = vld [vmem:[%s0 + $0x2d8] sm:$0xff]
  %v106 = vld [vmem:[%s0 + $0x2e0] sm:$0xff]
  %v107 = vld [vmem:[%s0 + $0x2e8] sm:$0xff]
  %v108 = vld [vmem:[%s0 + $0x2f0] sm:$0xff]
  %v109 = vld [vmem:[%s0 + $0x2f8] sm:$0xff]
  %v110 = vld [vmem:[%s0 + $0x300] sm:$0xff]
  %v111 = vld [vmem:[%s0 + $0x308] sm:$0xff]
  %v112 = vld [vmem:[%s0 + $0x310] sm:$0xff]
  %v113 = vld [vmem:[%s0 + $0x318] sm:$0xff]
  %v114 = vld [vmem:[%s0 + $0x320] sm:$0xff]
  %v115 = vld [vmem:[%s0 + $0x328] sm:$0xff]
  %v116 = vld [vmem:[%s0 + $0x330] sm:$0xff]
  %v117 = vld [vmem:[%s0 + $0x338] sm:$0xff]
  %v118 = vld [vmem:[%s0 + $0x340] sm:$0xff]
  %v119 = vld [vmem:[%s0 + $0x348] sm:$0xff]
  %v120 = vld [vmem:[%s0 + $0x350] sm:$0xff]
  %v121 = vld [vmem:[%s0 + $0x358] sm:$0xff]
  %v122 = vld [vmem:[%s0 + $0x360] sm:$0xff]
  %v123 = vld [vmem:[%s0 + $0x368] sm:$0xff]
  %v124 = vld [vmem:[%s0 + $0x370] sm:$0xff]
  %v125 = vld [vmem:[%s0 + $0x378] sm:$0xff]
  %v126 = vld [vmem:[%s0 + $0x380] sm:$0xff]
  %v127 = vld [vmem:[%s0 + $0x388] sm:$0xff]
  %v128 = vld [vmem:[%s0 + $0x390] sm:$0xff]
  %v129 = vld [vmem:[%s0 + $0x398] sm:$0xff]
  %v130 = vld [vmem:[%s0 + $0x3a0] sm:$0xff]
  %v131 = vld [vmem:[%s0 + $0x3a8] sm:$0xff]
  %v132 = vld [vmem:[%s0 + $0x3b0] sm:$0xff]
  %v133 = vld [vmem:[%s0 + $0x3b8] sm:$0xff]
  %v134 = vld [vmem:[%s0 + $0x3c0] sm:$0xff]
  %v135 = vld [vmem:[%s0 + $0x3c8] sm:$0xff]
  %v136 = vld [vmem:[%s0 + $0x3d0] sm:$0xff]
  %v137 = vld [vmem:[%s0 + $0x3d8] sm:$0xff]
  %v138 = vld [vmem:[%s0 + $0x3e0] sm:$0xff]
  %v139 = vld [vmem:[%s0 + $0x3e8] sm:$0xff]
  %v140 = vld [vmem:[%s0 + $0x3f0] sm:$0xff]
  %v141 = vld [vmem:[%s0 + $0x3f8] sm:$0xff]
  %v142 = vld [vmem:[%s0 + $0x400] sm:$0xff]
  %v143 = vld [vmem:[%s0 + $0x408] sm:$0xff]
  %v144 = vld [vmem:[%s0 + $0x410] sm:$0xff]
  %v145 = vld [vmem:[%s0 + $0x418] sm:$0xff]
  %v146 = vld [vmem:[%s0 + $0x420] sm:$0xff]
  %v147 = vld [vmem:[%s0 + $0x428] sm:$0xff]
  %v148 = vld [vmem:[%s0 + $0x430] sm:$0xff]
  %v149 = vld [vmem:[%s0 + $0x438] sm:$0xff]
  %v150 = vld [vmem:[%s0 + $0x440] sm:$0xff]
  %v151 = vld [vmem:[%s0 + $0x448] sm:$0xff]
  %v152 = vld [vmem:[%s0 + $0x450] sm:$0xff]
  %v153 = vld [vmem:[%s0 + $0x458] sm:$0xff]
  %v154 = vld [vmem:[%s0 + $0x460] sm:$0xff]
  %v155 = vld [vmem:[%s0 + $0x468] sm:$0xff]
  %v156 = vld [vmem:[%s0 + $0x470] sm:$0xff]
  %v157 = vld [vmem:[%s0 + $0x478] sm:$0xff]
  %v158 = vld [vmem:[%s0 + $0x480] sm:$0xff]
  %v159 = vld [vmem:[%s0 + $0x488] sm:$0xff]
  %v160 = vld [vmem:[%s0 + $0x490] sm:$0xff]
  %v161 = vld [vmem:[%s0 + $0x498] sm:$0xff]
  %v162 = vld [vmem:[%s0 + $0x4a0] sm:$0xff]
  %v163 = vld [vmem:[%s0 + $0x4a8] sm:$0xff]
  %v164 = vld [vmem:[%s0 + $0x4b0] sm:$0xff]
  %v165 = vld [vmem:[%s0 + $0x4b8] sm:$0xff]
  %v166 = vld [vmem:[%s0 + $0x4c0] sm:$0xff]
  %v167 = vld [vmem:[%s0 + $0x4c8] sm:$0xff]
  %v168 = vld [vmem:[%s0 + $0x4d0] sm:$0xff]
  %v169 = vld [vmem:[%s0 + $0x4d8] sm:$0xff]
  %v170 = vld [vmem:[%s0 + $0x4e0] sm:$0xff]
  %v171 = vld [vmem:[%s0 + $0x4e8] sm:$0xff]
  %v172 = vld [vmem:[%s0 + $0x4f0] sm:$0xff]
  %v173 = vld [vmem:[%s0 + $0x4f8] sm:$0xff]
  %v174 = vld [vmem:[%s0 + $0x500] sm:$0xff]
  %v175 = vld [vmem:[%s0 + $0x508] sm:$0xff]
  %v176 = vld [vmem:[%s0 + $0x510] sm:$0xff]
  %v177 = vld [vmem:[%s0 + $0x518] sm:$0xff]
  %v178 = vld [vmem:[%s0 + $0x520] sm:$0xff]
  %v179 = vld [vmem:[%s0 + $0x528] sm:$0xff]
  %v180 = vld [vmem:[%s0 + $0x530] sm:$0xff]
  %v181 = vld [vmem:[%s0 + $0x538] sm:$0xff]
  %v182 = vld [vmem:[%s0 + $0x540] sm:$0xff]
  %v183 = vld [vmem:[%s0 + $0x548] sm:$0xff]
  %v184 = vld [vmem:[%s0 + $0x550] sm:$0xff]
  %v185 = vld [vmem:[%s0 + $0x558] sm:$0xff]
  %v186 = vld [vmem:[%s0 + $0x560] sm:$0xff]
  %v187 = vld [vmem:[%s0 + $0x568] sm:$0xff]
  %v188 = vld [vmem:[%s0 + $0x570] sm:$0xff]
  %v189 = vld [vmem:[%s0 + $0x578] sm:$0xff]
  %v190 = vld [vmem:[%s0 + $0x580] sm:$0xff]
  %v191 = vld [vmem:[%s0 + $0x588] sm:$0xff]
  %v192 = vld [vmem:[%s0 + $0x590] sm:$0xff]
  %v193 = vld [vmem:[%s0 + $0x598] sm:$0xff]
  %v194 = vld [vmem:[%s0 + $0x5a0] sm:$0xff]
  %v195 = vld [vmem:[%s0 + $0x5a8] sm:$0xff]
  %v196 = vld [vmem:[%s0 + $0x5b0] sm:$0xff]
  %v197 = vld [vmem:[%s0 + $0x5b8] sm:$0xff]
  %v198 = vld [vmem:[%s0 + $0x5c0] sm:$0xff]
  %v199 = vld [vmem:[%s0 + $0x5c8] sm:$0xff]
  %v200 = vld [vmem:[%s0 + $0x5d0] sm:$0xff]
  %v201 = vld [vmem:[%s0 + $0x5d8] sm:$0xff]
  %v202 = vld [vmem:[%s0 + $0x5e0] sm:$0xff]
  %v203 = vld [vmem:[%s0 + $0x5e8] sm:$0xff]
  %v204 = vld [vmem:[%s0 + $0x5f0] sm:$0xff]
  %v205 = vld [vmem:[%s0 + $0x5f8] sm:$0xff]
  %v206 = vld [vmem:[%s0 + $0x600] sm:$0xff]
  %v207 = vld [vmem:[%s0 + $0x608] sm:$0xff]
  %v208 = vld [vmem:[%s0 + $0x610] sm:$0xff]
  %v209 = vld [vmem:[%s0 + $0x618] sm:$0xff]
  %v210 = vld [vmem:[%s1] sm:$0xff]
  %v211 = vld [vmem:[%s1 + $0x8] sm:$0xff]
  %v212 = vld [vmem:[%s1 + $0x10] sm:$0xff]
  %v213 = vld [vmem:[%s1 + $0x18] sm:$0xff]
  %v214 = vld [vmem:[%s1 + $0x20] sm:$0xff]
  %v215 = vld [vmem:[%s1 + $0x28] sm:$0xff]
  %v216 = vld [vmem:[%s1 + $0x30] sm:$0xff]
  %v217 = vld [vmem:[%s1 + $0x38] sm:$0xff]
  %v218 = vld [vmem:[%s1 + $0x40] sm:$0xff]
  %v219 = vld [vmem:[%s1 + $0x48] sm:$0x7]
  %vm220 = vcmask 613376
  %v222 = vsel %vm220, %v14, 0
  %v225 = vsel %vm220, %v15, 0
  %v228 = vsel %vm220, %v16, 0
  %v231 = vsel %vm220, %v17, 0
  %v234 = vsel %vm220, %v18, 0
  %v237 = vsel %vm220, %v19, 0
  %v240 = vsel %vm220, %v20, 0
  %v243 = vsel %vm220, %v21, 0
  %v246 = vsel %vm220, %v22, 0
  %v249 = vsel %vm220, %v23, 0
  %v252 = vsel %vm220, %v24, 0
  %v255 = vsel %vm220, %v25, 0
  %v258 = vsel %vm220, %v26, 0
  %v261 = vsel %vm220, %v27, 0
  %v264 = vsel %vm220, %v28, 0
  %v267 = vsel %vm220, %v29, 0
  %v270 = vsel %vm220, %v30, 0
  %v273 = vsel %vm220, %v31, 0
  %v276 = vsel %vm220, %v32, 0
  %v279 = vsel %vm220, %v33, 0
  %v282 = vsel %vm220, %v34, 0
  %v285 = vsel %vm220, %v35, 0
  %v288 = vsel %vm220, %v36, 0
  %v291 = vsel %vm220, %v37, 0
  %v294 = vsel %vm220, %v38, 0
  %v297 = vsel %vm220, %v39, 0
  %v300 = vsel %vm220, %v40, 0
  %v303 = vsel %vm220, %v41, 0
  %v306 = vsel %vm220, %v42, 0
  %v309 = vsel %vm220, %v43, 0
  %v312 = vsel %vm220, %v44, 0
  %v315 = vsel %vm220, %v45, 0
  %v318 = vsel %vm220, %v46, 0
  %v321 = vsel %vm220, %v47, 0
  %v324 = vsel %vm220, %v48, 0
  %v327 = vsel %vm220, %v49, 0
  %v330 = vsel %vm220, %v50, 0
  %v333 = vsel %vm220, %v51, 0
  %v336 = vsel %vm220, %v52, 0
  %v339 = vsel %vm220, %v53, 0
  %v342 = vsel %vm220, %v54, 0
  %v345 = vsel %vm220, %v55, 0
  %v348 = vsel %vm220, %v56, 0
  %v351 = vsel %vm220, %v57, 0
  %v354 = vsel %vm220, %v58, 0
  %v357 = vsel %vm220, %v59, 0
  %v360 = vsel %vm220, %v60, 0
  %v363 = vsel %vm220, %v61, 0
  %v366 = vsel %vm220, %v62, 0
  %v369 = vsel %vm220, %v63, 0
  %v372 = vsel %vm220, %v64, 0
  %v375 = vsel %vm220, %v65, 0
  %v378 = vsel %vm220, %v66, 0
  %v381 = vsel %vm220, %v67, 0
  %v384 = vsel %vm220, %v68, 0
  %v387 = vsel %vm220, %v69, 0
  %v390 = vsel %vm220, %v70, 0
  %v393 = vsel %vm220, %v71, 0
  %v396 = vsel %vm220, %v72, 0
  %v399 = vsel %vm220, %v73, 0
  %v402 = vsel %vm220, %v74, 0
  %v405 = vsel %vm220, %v75, 0
  %v408 = vsel %vm220, %v76, 0
  %v411 = vsel %vm220, %v77, 0
  %v414 = vsel %vm220, %v78, 0
  %v417 = vsel %vm220, %v79, 0
  %v420 = vsel %vm220, %v80, 0
  %v423 = vsel %vm220, %v81, 0
  %v426 = vsel %vm220, %v82, 0
  %v429 = vsel %vm220, %v83, 0
  %v432 = vsel %vm220, %v84, 0
  %v435 = vsel %vm220, %v85, 0
  %v438 = vsel %vm220, %v86, 0
  %v441 = vsel %vm220, %v87, 0
  %v444 = vsel %vm220, %v88, 0
  %v447 = vsel %vm220, %v89, 0
  %v450 = vsel %vm220, %v90, 0
  %v453 = vsel %vm220, %v91, 0
  %v456 = vsel %vm220, %v92, 0
  %v459 = vsel %vm220, %v93, 0
  %v462 = vsel %vm220, %v94, 0
  %v465 = vsel %vm220, %v95, 0
  %v468 = vsel %vm220, %v96, 0
  %v471 = vsel %vm220, %v97, 0
  %v474 = vsel %vm220, %v98, 0
  %v477 = vsel %vm220, %v99, 0
  %v480 = vsel %vm220, %v100, 0
  %v483 = vsel %vm220, %v101, 0
  %v486 = vsel %vm220, %v102, 0
  %v489 = vsel %vm220, %v103, 0
  %v492 = vsel %vm220, %v104, 0
  %v495 = vsel %vm220, %v105, 0
  %v498 = vsel %vm220, %v106, 0
  %v501 = vsel %vm220, %v107, 0
  %v504 = vsel %vm220, %v108, 0
  %v507 = vsel %vm220, %v109, 0
  %v510 = vsel %vm220, %v110, 0
  %v513 = vsel %vm220, %v111, 0
  %v516 = vsel %vm220, %v112, 0
  %v519 = vsel %vm220, %v113, 0
  %v522 = vsel %vm220, %v114, 0
  %v525 = vsel %vm220, %v115, 0
  %v528 = vsel %vm220, %v116, 0
  %v531 = vsel %vm220, %v117, 0
  %v534 = vsel %vm220, %v118, 0
  %v537 = vsel %vm220, %v119, 0
  %v540 = vsel %vm220, %v120, 0
  %v543 = vsel %vm220, %v121, 0
  %v546 = vsel %vm220, %v122, 0
  %v549 = vsel %vm220, %v123, 0
  %v552 = vsel %vm220, %v124, 0
  %v555 = vsel %vm220, %v125, 0
  %v558 = vsel %vm220, %v126, 0
  %v561 = vsel %vm220, %v127, 0
  %v564 = vsel %vm220, %v128, 0
  %v567 = vsel %vm220, %v129, 0
  %v570 = vsel %vm220, %v130, 0
  %v573 = vsel %vm220, %v131, 0
  %v576 = vsel %vm220, %v132, 0
  %v579 = vsel %vm220, %v133, 0
  %v582 = vsel %vm220, %v134, 0
  %v585 = vsel %vm220, %v135, 0
  %v588 = vsel %vm220, %v136, 0
  %v591 = vsel %vm220, %v137, 0
  %v594 = vsel %vm220, %v138, 0
  %v597 = vsel %vm220, %v139, 0
  %v600 = vsel %vm220, %v140, 0
  %v603 = vsel %vm220, %v141, 0
  %v606 = vsel %vm220, %v142, 0
  %v609 = vsel %vm220, %v143, 0
  %v612 = vsel %vm220, %v144, 0
  %v615 = vsel %vm220, %v145, 0
  %v618 = vsel %vm220, %v146, 0
  %v621 = vsel %vm220, %v147, 0
  %v624 = vsel %vm220, %v148, 0
  %v627 = vsel %vm220, %v149, 0
  %v630 = vsel %vm220, %v150, 0
  %v633 = vsel %vm220, %v151, 0
  %v636 = vsel %vm220, %v152, 0
  %v639 = vsel %vm220, %v153, 0
  %v642 = vsel %vm220, %v154, 0
  %v645 = vsel %vm220, %v155, 0
  %v648 = vsel %vm220, %v156, 0
  %v651 = vsel %vm220, %v157, 0
  %v654 = vsel %vm220, %v158, 0
  %v657 = vsel %vm220, %v159, 0
  %v660 = vsel %vm220, %v160, 0
  %v663 = vsel %vm220, %v161, 0
  %v666 = vsel %vm220, %v162, 0
  %v669 = vsel %vm220, %v163, 0
  %v672 = vsel %vm220, %v164, 0
  %v675 = vsel %vm220, %v165, 0
  %v678 = vsel %vm220, %v166, 0
  %v681 = vsel %vm220, %v167, 0
  %v684 = vsel %vm220, %v168, 0
  %v687 = vsel %vm220, %v169, 0
  %v690 = vsel %vm220, %v170, 0
  %v693 = vsel %vm220, %v171, 0
  %v696 = vsel %vm220, %v172, 0
  %v699 = vsel %vm220, %v173, 0
  %v702 = vsel %vm220, %v174, 0
  %v705 = vsel %vm220, %v175, 0
  %v708 = vsel %vm220, %v176, 0
  %v711 = vsel %vm220, %v177, 0
  %v714 = vsel %vm220, %v178, 0
  %v717 = vsel %vm220, %v179, 0
  %v720 = vsel %vm220, %v180, 0
  %v723 = vsel %vm220, %v181, 0
  %v726 = vsel %vm220, %v182, 0
  %v729 = vsel %vm220, %v183, 0
  %v732 = vsel %vm220, %v184, 0
  %v735 = vsel %vm220, %v185, 0
  %v738 = vsel %vm220, %v186, 0
  %v741 = vsel %vm220, %v187, 0
  %v744 = vsel %vm220, %v188, 0
  %v747 = vsel %vm220, %v189, 0
  %v750 = vsel %vm220, %v190, 0
  %v753 = vsel %vm220, %v191, 0
  %v756 = vsel %vm220, %v192, 0
  %v759 = vsel %vm220, %v193, 0
  %v762 = vsel %vm220, %v194, 0
  %v765 = vsel %vm220, %v195, 0
  %v768 = vsel %vm220, %v196, 0
  %v771 = vsel %vm220, %v197, 0
  %v774 = vsel %vm220, %v198, 0
  %v777 = vsel %vm220, %v199, 0
  %v780 = vsel %vm220, %v200, 0
  %v783 = vsel %vm220, %v201, 0
  %v786 = vsel %vm220, %v202, 0
  %v789 = vsel %vm220, %v203, 0
  %v792 = vsel %vm220, %v204, 0
  %v795 = vsel %vm220, %v205, 0
  %v798 = vsel %vm220, %v206, 0
  %v801 = vsel %vm220, %v207, 0
  %v804 = vsel %vm220, %v208, 0
  %v807 = vsel %vm220, %v209, 0
  %vm809 = vcmask 1042432
  %v811 = vsel %vm809, %v219, 0
  %813 = vmatprep.subr.mxu0 0.0
  %814 = vmatpush1.msra.mxu0 %v210
  %815 = vmatprep.subr.mxu0 0.0
  %816 = vmatpush1.msra.mxu0 %v211
  %817 = vmatprep.subr.mxu0 0.0
  %818 = vmatpush1.msra.mxu0 %v212
  %819 = vmatprep.subr.mxu0 0.0
  %820 = vmatpush1.msra.mxu0 %v213
  %821 = vmatprep.subr.mxu0 0.0
  %822 = vmatpush1.msra.mxu0 %v214
  %823 = vmatprep.subr.mxu0 0.0
  %824 = vmatpush1.msra.mxu0 %v215
  %825 = vmatprep.subr.mxu0 0.0
  %826 = vmatpush1.msra.mxu0 %v216
  %827 = vmatprep.subr.mxu0 0.0
  %828 = vmatpush1.msra.mxu0 %v217
  %829 = vmatprep.subr.mxu0 0.0
  %830 = vmatpush1.msra.mxu0 %v218
  %831 = vmatprep.subr.mxu0 0.0
  %832 = vmatpush1.msra.mxu0 %v811
  %833 = vmatprep.subr.mxu0 0.0
  %834 = vmatpush1.msra.mxu0 0.0
  %835 = vmatprep.subr.mxu0 0.0
  %836 = vmatpush1.msra.mxu0 0.0
  %837 = vmatprep.subr.mxu0 0.0
  %838 = vmatpush1.msra.mxu0 0.0
  %839 = vmatprep.subr.mxu0 0.0
  %840 = vmatpush1.msra.mxu0 0.0
  %841 = vmatprep.subr.mxu0 0.0
  %842 = vmatpush1.msra.mxu0 0.0
  %843 = vmatprep.subr.mxu0 0.0
  %844 = vmatpush1.msra.mxu0 0.0
  %845 = vmatprep.subr.mxu0 0.0
  %846 = vmatpush1.msra.mxu0 0.0
  %847 = vmatprep.subr.mxu0 0.0
  %848 = vmatpush1.msra.mxu0 0.0
  %849 = vmatprep.subr.mxu0 0.0
  %850 = vmatpush1.msra.mxu0 0.0
  %851 = vmatprep.subr.mxu0 0.0
  %852 = vmatpush1.msra.mxu0 0.0
  %853 = vmatprep.subr.mxu0 0.0
  %854 = vmatpush1.msra.mxu0 0.0
  %855 = vmatprep.subr.mxu0 0.0
  %856 = vmatpush1.msra.mxu0 0.0
  %857 = vmatprep.subr.mxu0 0.0
  %858 = vmatpush1.msra.mxu0 0.0
  %859 = vmatprep.subr.mxu0 0.0
  %860 = vmatpush1.msra.mxu0 0.0
  %861 = vmatprep.subr.mxu0 0.0
  %862 = vmatpush1.msra.mxu0 0.0
  %863 = vmatprep.subr.mxu0 0.0
  %864 = vmatpush1.msra.mxu0 0.0
  %865 = vmatprep.subr.mxu0 0.0
  %866 = vmatpush1.msra.mxu0 0.0
  %867 = vmatprep.subr.mxu0 0.0
  %868 = vmatpush1.msra.mxu0 0.0
  %869 = vmatprep.subr.mxu0 0.0
  %870 = vmatpush1.msra.mxu0 0.0
  %871 = vmatprep.subr.mxu0 0.0
  %872 = vmatpush1.msra.mxu0 0.0
  %873 = vmatprep.subr.mxu0 0.0
  %874 = vmatpush1.msra.mxu0 0.0
  %875 = vmatprep.subr.mxu0 0.0
  %876 = vmatpush1.msra.mxu0 0.0
  %877 = vmatprep.mubr.f32.mxu0 0.0
  %878 = vmatmul.mubr.f32.gmra.mrb[0].mxu0 %v222
  %v879 = vpop.f32.mrb[0].mxu0
  %v880 = vadd.f32 0.0, %v879
  %v881 = vpop.f32.mrb[0].mxu0
  %882 = vmatprep.mubr.f32.mxu0 0.0
  %883 = vmatmul.mubr.f32.gmra.mrb[0].mxu0 %v225
  %v884 = vpop.f32.mrb[0].mxu0
  %v885 = vadd.f32 0.0, %v884
  %v886 = vpop.f32.mrb[0].mxu0
  %887 = vmatprep.mubr.f32.mxu0 0.0
  %888 = vmatmul.mubr.f32.gmra.mrb[0].mxu0 %v228
  %v889 = vpop.f32.mrb[0].mxu0
  %v890 = vadd.f32 0.0, %v889
  %v891 = vpop.f32.mrb[0].mxu0
  %892 = vmatprep.mubr.f32.mxu0 0.0
  %893 = vmatmul.mubr.f32.gmra.mrb[0].mxu0 %v231
  %v894 = vpop.f32.mrb[0].mxu0
  %v895 = vadd.f32 0.0, %v894
  %v896 = vpop.f32.mrb[0].mxu0
  %897 = vmatprep.mubr.f32.mxu0 0.0
  %898 = vmatmul.mubr.f32.gmra.mrb[0].mxu0 %v234
  %v899 = vpop.f32.mrb[0].mxu0
  %v900 = vadd.f32 0.0, %v899
  %v901 = vpop.f32.mrb[0].mxu0
  %902 = vmatprep.mubr.f32.mxu0 0.0
  %903 = vmatmul.mubr.f32.gmra.mrb[0].mxu0 %v237
  %v904 = vpop.f32.mrb[0].mxu0
  %v905 = vadd.f32 0.0, %v904
  %v906 = vpop.f32.mrb[0].mxu0
  %907 = vmatprep.mubr.f32.mxu0 0.0
  %908 = vmatmul.mubr.f32.gmra.mrb[0].mxu0 %v240
  %v909 = vpop.f32.mrb[0].mxu0
  %v910 = vadd.f32 0.0, %v909
  %v911 = vpop.f32.mrb[0].mxu0
  %912 = vmatprep.mubr.f32.mxu0 0.0
  %913 = vmatmul.mubr.f32.gmra.mrb[0].mxu0 %v243
  %v914 = vpop.f32.mrb[0].mxu0
  %v915 = vadd.f32 0.0, %v914
  %v916 = vpop.f32.mrb[0].mxu0
  %917 = vmatprep.mubr.f32.mxu0 0.0
  %918 = vmatmul.mubr.f32.gmra.mrb[0].mxu0 %v246
  %v919 = vpop.f32.mrb[0].mxu0
  %v920 = vadd.f32 0.0, %v919
  %v921 = vpop.f32.mrb[0].mxu0
  %922 = vmatprep.mubr.f32.mxu0 0.0
  %923 = vmatmul.mubr.f32.gmra.mrb[0].mxu0 %v249
  %v924 = vpop.f32.mrb[0].mxu0
  %v925 = vadd.f32 0.0, %v924
  %v926 = vpop.f32.mrb[0].mxu0
  %927 = vmatprep.mubr.f32.mxu0 0.0
  %928 = vmatmul.mubr.f32.gmra.mrb[0].mxu0 %v252
  %v929 = vpop.f32.mrb[0].mxu0
  %v930 = vadd.f32 0.0, %v929
  %v931 = vpop.f32.mrb[0].mxu0
  %932 = vmatprep.mubr.f32.mxu0 0.0
  %933 = vmatmul.mubr.f32.gmra.mrb[0].mxu0 %v255
  %v934 = vpop.f32.mrb[0].mxu0
  %v935 = vadd.f32 0.0, %v934
  %v936 = vpop.f32.mrb[0].mxu0
  %937 = vmatprep.mubr.f32.mxu0 0.0
  %938 = vmatmul.mubr.f32.gmra.mrb[0].mxu0 %v258
  %v939 = vpop.f32.mrb[0].mxu0
  %v940 = vadd.f32 0.0, %v939
  %v941 = vpop.f32.mrb[0].mxu0
  %942 = vmatprep.mubr.f32.mxu0 0.0
  %943 = vmatmul.mubr.f32.gmra.mrb[0].mxu0 %v261
  %v944 = vpop.f32.mrb[0].mxu0
  %v945 = vadd.f32 0.0, %v944
  %v946 = vpop.f32.mrb[0].mxu0
  %947 = vmatprep.mubr.f32.mxu0 0.0
  %948 = vmatmul.mubr.f32.gmra.mrb[0].mxu0 %v264
  %v949 = vpop.f32.mrb[0].mxu0
  %v950 = vadd.f32 0.0, %v949
  %v951 = vpop.f32.mrb[0].mxu0
  %952 = vmatprep.mubr.f32.mxu0 0.0
  %953 = vmatmul.mubr.f32.gmra.mrb[0].mxu0 %v267
  %v954 = vpop.f32.mrb[0].mxu0
  %v955 = vadd.f32 0.0, %v954
  %v956 = vpop.f32.mrb[0].mxu0
  %957 = vmatprep.mubr.f32.mxu0 0.0
  %958 = vmatmul.mubr.f32.gmra.mrb[0].mxu0 %v270
  %v959 = vpop.f32.mrb[0].mxu0
  %v960 = vadd.f32 0.0, %v959
  %v961 = vpop.f32.mrb[0].mxu0
  %962 = vmatprep.mubr.f32.mxu0 0.0
  %963 = vmatmul.mubr.f32.gmra.mrb[0].mxu0 %v273
  %v964 = vpop.f32.mrb[0].mxu0
  %v965 = vadd.f32 0.0, %v964
  %v966 = vpop.f32.mrb[0].mxu0
  %967 = vmatprep.mubr.f32.mxu0 0.0
  %968 = vmatmul.mubr.f32.gmra.mrb[0].mxu0 %v276
  %v969 = vpop.f32.mrb[0].mxu0
  %v970 = vadd.f32 0.0, %v969
  %v971 = vpop.f32.mrb[0].mxu0
  %972 = vmatprep.mubr.f32.mxu0 0.0
  %973 = vmatmul.mubr.f32.gmra.mrb[0].mxu0 %v279
  %v974 = vpop.f32.mrb[0].mxu0
  %v975 = vadd.f32 0.0, %v974
  %v976 = vpop.f32.mrb[0].mxu0
  %977 = vmatprep.mubr.f32.mxu0 0.0
  %978 = vmatmul.mubr.f32.gmra.mrb[0].mxu0 %v282
  %v979 = vpop.f32.mrb[0].mxu0
  %v980 = vadd.f32 0.0, %v979
  %v981 = vpop.f32.mrb[0].mxu0
  %982 = vmatprep.mubr.f32.mxu0 0.0
  %983 = vmatmul.mubr.f32.gmra.mrb[0].mxu0 %v285
  %v984 = vpop.f32.mrb[0].mxu0
  %v985 = vadd.f32 0.0, %v984
  %v986 = vpop.f32.mrb[0].mxu0
  %987 = vmatprep.mubr.f32.mxu0 0.0
  %988 = vmatmul.mubr.f32.gmra.mrb[0].mxu0 %v288
  %v989 = vpop.f32.mrb[0].mxu0
  %v990 = vadd.f32 0.0, %v989
  %v991 = vpop.f32.mrb[0].mxu0
  %992 = vmatprep.mubr.f32.mxu0 0.0
  %993 = vmatmul.mubr.f32.gmra.mrb[0].mxu0 %v291
  %v994 = vpop.f32.mrb[0].mxu0
  %v995 = vadd.f32 0.0, %v994
  %v996 = vpop.f32.mrb[0].mxu0
  %997 = vmatprep.mubr.f32.mxu0 0.0
  %998 = vmatmul.mubr.f32.gmra.mrb[0].mxu0 %v294
  %v999 = vpop.f32.mrb[0].mxu0
  %v1000 = vadd.f32 0.0, %v999
  %v1001 = vpop.f32.mrb[0].mxu0
  %1002 = vmatprep.mubr.f32.mxu0 0.0
  %1003 = vmatmul.mubr.f32.gmra.mrb[0].mxu0 %v297
  %v1004 = vpop.f32.mrb[0].mxu0
  %v1005 = vadd.f32 0.0, %v1004
  %v1006 = vpop.f32.mrb[0].mxu0
  %1007 = vmatprep.mubr.f32.mxu0 0.0
  %1008 = vmatmul.mubr.f32.gmra.mrb[0].mxu0 %v300
  %v1009 = vpop.f32.mrb[0].mxu0
  %v1010 = vadd.f32 0.0, %v1009
  %v1011 = vpop.f32.mrb[0].mxu0
  %1012 = vmatprep.mubr.f32.mxu0 0.0
  %1013 = vmatmul.mubr.f32.gmra.mrb[0].mxu0 %v303
  %v1014 = vpop.f32.mrb[0].mxu0
  %v1015 = vadd.f32 0.0, %v1014
  %v1016 = vpop.f32.mrb[0].mxu0
  %1017 = vmatprep.mubr.f32.mxu0 0.0
  %1018 = vmatmul.mubr.f32.gmra.mrb[0].mxu0 %v306
  %v1019 = vpop.f32.mrb[0].mxu0
  %v1020 = vadd.f32 0.0, %v1019
  %v1021 = vpop.f32.mrb[0].mxu0
  %1022 = vmatprep.mubr.f32.mxu0 0.0
  %1023 = vmatmul.mubr.f32.gmra.mrb[0].mxu0 %v309
  %v1024 = vpop.f32.mrb[0].mxu0
  %v1025 = vadd.f32 0.0, %v1024
  %v1026 = vpop.f32.mrb[0].mxu0
  %1027 = vmatprep.mubr.f32.mxu0 0.0
  %1028 = vmatmul.mubr.f32.gmra.mrb[0].mxu0 %v312
  %v1029 = vpop.f32.mrb[0].mxu0
  %v1030 = vadd.f32 0.0, %v1029
  %v1031 = vpop.f32.mrb[0].mxu0
  %1032 = vmatprep.mubr.f32.mxu0 0.0
  %1033 = vmatmul.mubr.f32.gmra.mrb[0].mxu0 %v315
  %v1034 = vpop.f32.mrb[0].mxu0
  %v1035 = vadd.f32 0.0, %v1034
  %v1036 = vpop.f32.mrb[0].mxu0
  %1037 = vmatprep.mubr.f32.mxu0 0.0
  %1038 = vmatmul.mubr.f32.gmra.mrb[0].mxu0 %v318
  %v1039 = vpop.f32.mrb[0].mxu0
  %v1040 = vadd.f32 0.0, %v1039
  %v1041 = vpop.f32.mrb[0].mxu0
  %1042 = vmatprep.mubr.f32.mxu0 0.0
  %1043 = vmatmul.mubr.f32.gmra.mrb[0].mxu0 %v321
  %v1044 = vpop.f32.mrb[0].mxu0
  %v1045 = vadd.f32 0.0, %v1044
  %v1046 = vpop.f32.mrb[0].mxu0
  %1047 = vmatprep.mubr.f32.mxu0 0.0
  %1048 = vmatmul.mubr.f32.gmra.mrb[0].mxu0 %v324
  %v1049 = vpop.f32.mrb[0].mxu0
  %v1050 = vadd.f32 0.0, %v1049
  %v1051 = vpop.f32.mrb[0].mxu0
  %1052 = vmatprep.mubr.f32.mxu0 0.0
  %1053 = vmatmul.mubr.f32.gmra.mrb[0].mxu0 %v327
  %v1054 = vpop.f32.mrb[0].mxu0
  %v1055 = vadd.f32 0.0, %v1054
  %v1056 = vpop.f32.mrb[0].mxu0
  %1057 = vmatprep.mubr.f32.mxu0 0.0
  %1058 = vmatmul.mubr.f32.gmra.mrb[0].mxu0 %v330
  %v1059 = vpop.f32.mrb[0].mxu0
  %v1060 = vadd.f32 0.0, %v1059
  %v1061 = vpop.f32.mrb[0].mxu0
  %1062 = vmatprep.mubr.f32.mxu0 0.0
  %1063 = vmatmul.mubr.f32.gmra.mrb[0].mxu0 %v333
  %v1064 = vpop.f32.mrb[0].mxu0
  %v1065 = vadd.f32 0.0, %v1064
  %v1066 = vpop.f32.mrb[0].mxu0
  %1067 = vmatprep.mubr.f32.mxu0 0.0
  %1068 = vmatmul.mubr.f32.gmra.mrb[0].mxu0 %v336
  %v1069 = vpop.f32.mrb[0].mxu0
  %v1070 = vadd.f32 0.0, %v1069
  %v1071 = vpop.f32.mrb[0].mxu0
  %1072 = vmatprep.mubr.f32.mxu0 0.0
  %1073 = vmatmul.mubr.f32.gmra.mrb[0].mxu0 %v339
  %v1074 = vpop.f32.mrb[0].mxu0
  %v1075 = vadd.f32 0.0, %v1074
  %v1076 = vpop.f32.mrb[0].mxu0
  %1077 = vmatprep.mubr.f32.mxu0 0.0
  %1078 = vmatmul.mubr.f32.gmra.mrb[0].mxu0 %v342
  %v1079 = vpop.f32.mrb[0].mxu0
  %v1080 = vadd.f32 0.0, %v1079
  %v1081 = vpop.f32.mrb[0].mxu0
  %1082 = vmatprep.mubr.f32.mxu0 0.0
  %1083 = vmatmul.mubr.f32.gmra.mrb[0].mxu0 %v345
  %v1084 = vpop.f32.mrb[0].mxu0
  %v1085 = vadd.f32 0.0, %v1084
  %v1086 = vpop.f32.mrb[0].mxu0
  %1087 = vmatprep.mubr.f32.mxu0 0.0
  %1088 = vmatmul.mubr.f32.gmra.mrb[0].mxu0 %v348
  %v1089 = vpop.f32.mrb[0].mxu0
  %v1090 = vadd.f32 0.0, %v1089
  %v1091 = vpop.f32.mrb[0].mxu0
  %1092 = vmatprep.mubr.f32.mxu0 0.0
  %1093 = vmatmul.mubr.f32.gmra.mrb[0].mxu0 %v351
  %v1094 = vpop.f32.mrb[0].mxu0
  %v1095 = vadd.f32 0.0, %v1094
  %v1096 = vpop.f32.mrb[0].mxu0
  %1097 = vmatprep.mubr.f32.mxu0 0.0
  %1098 = vmatmul.mubr.f32.gmra.mrb[0].mxu0 %v354
  %v1099 = vpop.f32.mrb[0].mxu0
  %v1100 = vadd.f32 0.0, %v1099
  %v1101 = vpop.f32.mrb[0].mxu0
  %1102 = vmatprep.mubr.f32.mxu0 0.0
  %1103 = vmatmul.mubr.f32.gmra.mrb[0].mxu0 %v357
  %v1104 = vpop.f32.mrb[0].mxu0
  %v1105 = vadd.f32 0.0, %v1104
  %v1106 = vpop.f32.mrb[0].mxu0
  %1107 = vmatprep.mubr.f32.mxu0 0.0
  %1108 = vmatmul.mubr.f32.gmra.mrb[0].mxu0 %v360
  %v1109 = vpop.f32.mrb[0].mxu0
  %v1110 = vadd.f32 0.0, %v1109
  %v1111 = vpop.f32.mrb[0].mxu0
  %1112 = vmatprep.mubr.f32.mxu0 0.0
  %1113 = vmatmul.mubr.f32.gmra.mrb[0].mxu0 %v363
  %v1114 = vpop.f32.mrb[0].mxu0
  %v1115 = vadd.f32 0.0, %v1114
  %v1116 = vpop.f32.mrb[0].mxu0
  %1117 = vmatprep.mubr.f32.mxu0 0.0
  %1118 = vmatmul.mubr.f32.gmra.mrb[0].mxu0 %v366
  %v1119 = vpop.f32.mrb[0].mxu0
  %v1120 = vadd.f32 0.0, %v1119
  %v1121 = vpop.f32.mrb[0].mxu0
  %1122 = vmatprep.mubr.f32.mxu0 0.0
  %1123 = vmatmul.mubr.f32.gmra.mrb[0].mxu0 %v369
  %v1124 = vpop.f32.mrb[0].mxu0
  %v1125 = vadd.f32 0.0, %v1124
  %v1126 = vpop.f32.mrb[0].mxu0
  %1127 = vmatprep.mubr.f32.mxu0 0.0
  %1128 = vmatmul.mubr.f32.gmra.mrb[0].mxu0 %v372
  %v1129 = vpop.f32.mrb[0].mxu0
  %v1130 = vadd.f32 0.0, %v1129
  %v1131 = vpop.f32.mrb[0].mxu0
  %1132 = vmatprep.mubr.f32.mxu0 0.0
  %1133 = vmatmul.mubr.f32.gmra.mrb[0].mxu0 %v375
  %v1134 = vpop.f32.mrb[0].mxu0
  %v1135 = vadd.f32 0.0, %v1134
  %v1136 = vpop.f32.mrb[0].mxu0
  %1137 = vmatprep.mubr.f32.mxu0 0.0
  %1138 = vmatmul.mubr.f32.gmra.mrb[0].mxu0 %v378
  %v1139 = vpop.f32.mrb[0].mxu0
  %v1140 = vadd.f32 0.0, %v1139
  %v1141 = vpop.f32.mrb[0].mxu0
  %1142 = vmatprep.mubr.f32.mxu0 0.0
  %1143 = vmatmul.mubr.f32.gmra.mrb[0].mxu0 %v381
  %v1144 = vpop.f32.mrb[0].mxu0
  %v1145 = vadd.f32 0.0, %v1144
  %v1146 = vpop.f32.mrb[0].mxu0
  %1147 = vmatprep.mubr.f32.mxu0 0.0
  %1148 = vmatmul.mubr.f32.gmra.mrb[0].mxu0 %v384
  %v1149 = vpop.f32.mrb[0].mxu0
  %v1150 = vadd.f32 0.0, %v1149
  %v1151 = vpop.f32.mrb[0].mxu0
  %1152 = vmatprep.mubr.f32.mxu0 0.0
  %1153 = vmatmul.mubr.f32.gmra.mrb[0].mxu0 %v387
  %v1154 = vpop.f32.mrb[0].mxu0
  %v1155 = vadd.f32 0.0, %v1154
  %v1156 = vpop.f32.mrb[0].mxu0
  %1157 = vmatprep.mubr.f32.mxu0 0.0
  %1158 = vmatmul.mubr.f32.gmra.mrb[0].mxu0 %v390
  %v1159 = vpop.f32.mrb[0].mxu0
  %v1160 = vadd.f32 0.0, %v1159
  %v1161 = vpop.f32.mrb[0].mxu0
  %1162 = vmatprep.mubr.f32.mxu0 0.0
  %1163 = vmatmul.mubr.f32.gmra.mrb[0].mxu0 %v393
  %v1164 = vpop.f32.mrb[0].mxu0
  %v1165 = vadd.f32 0.0, %v1164
  %v1166 = vpop.f32.mrb[0].mxu0
  %1167 = vmatprep.mubr.f32.mxu0 0.0
  %1168 = vmatmul.mubr.f32.gmra.mrb[0].mxu0 %v396
  %v1169 = vpop.f32.mrb[0].mxu0
  %v1170 = vadd.f32 0.0, %v1169
  %v1171 = vpop.f32.mrb[0].mxu0
  %1172 = vmatprep.mubr.f32.mxu0 0.0
  %1173 = vmatmul.mubr.f32.gmra.mrb[0].mxu0 %v399
  %v1174 = vpop.f32.mrb[0].mxu0
  %v1175 = vadd.f32 0.0, %v1174
  %v1176 = vpop.f32.mrb[0].mxu0
  %1177 = vmatprep.mubr.f32.mxu0 0.0
  %1178 = vmatmul.mubr.f32.gmra.mrb[0].mxu0 %v402
  %v1179 = vpop.f32.mrb[0].mxu0
  %v1180 = vadd.f32 0.0, %v1179
  %v1181 = vpop.f32.mrb[0].mxu0
  %1182 = vmatprep.mubr.f32.mxu0 0.0
  %1183 = vmatmul.mubr.f32.gmra.mrb[0].mxu0 %v405
  %v1184 = vpop.f32.mrb[0].mxu0
  %v1185 = vadd.f32 0.0, %v1184
  %v1186 = vpop.f32.mrb[0].mxu0
  %1187 = vmatprep.mubr.f32.mxu0 0.0
  %1188 = vmatmul.mubr.f32.gmra.mrb[0].mxu0 %v408
  %v1189 = vpop.f32.mrb[0].mxu0
  %v1190 = vadd.f32 0.0, %v1189
  %v1191 = vpop.f32.mrb[0].mxu0
  %1192 = vmatprep.mubr.f32.mxu0 0.0
  %1193 = vmatmul.mubr.f32.gmra.mrb[0].mxu0 %v411
  %v1194 = vpop.f32.mrb[0].mxu0
  %v1195 = vadd.f32 0.0, %v1194
  %v1196 = vpop.f32.mrb[0].mxu0
  %1197 = vmatprep.mubr.f32.mxu0 0.0
  %1198 = vmatmul.mubr.f32.gmra.mrb[0].mxu0 %v414
  %v1199 = vpop.f32.mrb[0].mxu0
  %v1200 = vadd.f32 0.0, %v1199
  %v1201 = vpop.f32.mrb[0].mxu0
  %1202 = vmatprep.mubr.f32.mxu0 0.0
  %1203 = vmatmul.mubr.f32.gmra.mrb[0].mxu0 %v417
  %v1204 = vpop.f32.mrb[0].mxu0
  %v1205 = vadd.f32 0.0, %v1204
  %v1206 = vpop.f32.mrb[0].mxu0
  %1207 = vmatprep.mubr.f32.mxu0 0.0
  %1208 = vmatmul.mubr.f32.gmra.mrb[0].mxu0 %v420
  %v1209 = vpop.f32.mrb[0].mxu0
  %v1210 = vadd.f32 0.0, %v1209
  %v1211 = vpop.f32.mrb[0].mxu0
  %1212 = vmatprep.mubr.f32.mxu0 0.0
  %1213 = vmatmul.mubr.f32.gmra.mrb[0].mxu0 %v423
  %v1214 = vpop.f32.mrb[0].mxu0
  %v1215 = vadd.f32 0.0, %v1214
  %v1216 = vpop.f32.mrb[0].mxu0
  %1217 = vmatprep.mubr.f32.mxu0 0.0
  %1218 = vmatmul.mubr.f32.gmra.mrb[0].mxu0 %v426
  %v1219 = vpop.f32.mrb[0].mxu0
  %v1220 = vadd.f32 0.0, %v1219
  %v1221 = vpop.f32.mrb[0].mxu0
  %1222 = vmatprep.mubr.f32.mxu0 0.0
  %1223 = vmatmul.mubr.f32.gmra.mrb[0].mxu0 %v429
  %v1224 = vpop.f32.mrb[0].mxu0
  %v1225 = vadd.f32 0.0, %v1224
  %v1226 = vpop.f32.mrb[0].mxu0
  %1227 = vmatprep.mubr.f32.mxu0 0.0
  %1228 = vmatmul.mubr.f32.gmra.mrb[0].mxu0 %v432
  %v1229 = vpop.f32.mrb[0].mxu0
  %v1230 = vadd.f32 0.0, %v1229
  %v1231 = vpop.f32.mrb[0].mxu0
  %1232 = vmatprep.mubr.f32.mxu0 0.0
  %1233 = vmatmul.mubr.f32.gmra.mrb[0].mxu0 %v435
  %v1234 = vpop.f32.mrb[0].mxu0
  %v1235 = vadd.f32 0.0, %v1234
  %v1236 = vpop.f32.mrb[0].mxu0
  %1237 = vmatprep.mubr.f32.mxu0 0.0
  %1238 = vmatmul.mubr.f32.gmra.mrb[0].mxu0 %v438
  %v1239 = vpop.f32.mrb[0].mxu0
  %v1240 = vadd.f32 0.0, %v1239
  %v1241 = vpop.f32.mrb[0].mxu0
  %1242 = vmatprep.mubr.f32.mxu0 0.0
  %1243 = vmatmul.mubr.f32.gmra.mrb[0].mxu0 %v441
  %v1244 = vpop.f32.mrb[0].mxu0
  %v1245 = vadd.f32 0.0, %v1244
  %v1246 = vpop.f32.mrb[0].mxu0
  %1247 = vmatprep.mubr.f32.mxu0 0.0
  %1248 = vmatmul.mubr.f32.gmra.mrb[0].mxu0 %v444
  %v1249 = vpop.f32.mrb[0].mxu0
  %v1250 = vadd.f32 0.0, %v1249
  %v1251 = vpop.f32.mrb[0].mxu0
  %1252 = vmatprep.mubr.f32.mxu0 0.0
  %1253 = vmatmul.mubr.f32.gmra.mrb[0].mxu0 %v447
  %v1254 = vpop.f32.mrb[0].mxu0
  %v1255 = vadd.f32 0.0, %v1254
  %v1256 = vpop.f32.mrb[0].mxu0
  %1257 = vmatprep.mubr.f32.mxu0 0.0
  %1258 = vmatmul.mubr.f32.gmra.mrb[0].mxu0 %v450
  %v1259 = vpop.f32.mrb[0].mxu0
  %v1260 = vadd.f32 0.0, %v1259
  %v1261 = vpop.f32.mrb[0].mxu0
  %1262 = vmatprep.mubr.f32.mxu0 0.0
  %1263 = vmatmul.mubr.f32.gmra.mrb[0].mxu0 %v453
  %v1264 = vpop.f32.mrb[0].mxu0
  %v1265 = vadd.f32 0.0, %v1264
  %v1266 = vpop.f32.mrb[0].mxu0
  %1267 = vmatprep.mubr.f32.mxu0 0.0
  %1268 = vmatmul.mubr.f32.gmra.mrb[0].mxu0 %v456
  %v1269 = vpop.f32.mrb[0].mxu0
  %v1270 = vadd.f32 0.0, %v1269
  %v1271 = vpop.f32.mrb[0].mxu0
  %1272 = vmatprep.mubr.f32.mxu0 0.0
  %1273 = vmatmul.mubr.f32.gmra.mrb[0].mxu0 %v459
  %v1274 = vpop.f32.mrb[0].mxu0
  %v1275 = vadd.f32 0.0, %v1274
  %v1276 = vpop.f32.mrb[0].mxu0
  %1277 = vmatprep.mubr.f32.mxu0 0.0
  %1278 = vmatmul.mubr.f32.gmra.mrb[0].mxu0 %v462
  %v1279 = vpop.f32.mrb[0].mxu0
  %v1280 = vadd.f32 0.0, %v1279
  %v1281 = vpop.f32.mrb[0].mxu0
  %1282 = vmatprep.mubr.f32.mxu0 0.0
  %1283 = vmatmul.mubr.f32.gmra.mrb[0].mxu0 %v465
  %v1284 = vpop.f32.mrb[0].mxu0
  %v1285 = vadd.f32 0.0, %v1284
  %v1286 = vpop.f32.mrb[0].mxu0
  %1287 = vmatprep.mubr.f32.mxu0 0.0
  %1288 = vmatmul.mubr.f32.gmra.mrb[0].mxu0 %v468
  %v1289 = vpop.f32.mrb[0].mxu0
  %v1290 = vadd.f32 0.0, %v1289
  %v1291 = vpop.f32.mrb[0].mxu0
  %1292 = vmatprep.mubr.f32.mxu0 0.0
  %1293 = vmatmul.mubr.f32.gmra.mrb[0].mxu0 %v471
  %v1294 = vpop.f32.mrb[0].mxu0
  %v1295 = vadd.f32 0.0, %v1294
  %v1296 = vpop.f32.mrb[0].mxu0
  %1297 = vmatprep.mubr.f32.mxu0 0.0
  %1298 = vmatmul.mubr.f32.gmra.mrb[0].mxu0 %v474
  %v1299 = vpop.f32.mrb[0].mxu0
  %v1300 = vadd.f32 0.0, %v1299
  %v1301 = vpop.f32.mrb[0].mxu0
  %1302 = vmatprep.mubr.f32.mxu0 0.0
  %1303 = vmatmul.mubr.f32.gmra.mrb[0].mxu0 %v477
  %v1304 = vpop.f32.mrb[0].mxu0
  %v1305 = vadd.f32 0.0, %v1304
  %v1306 = vpop.f32.mrb[0].mxu0
  %1307 = vmatprep.mubr.f32.mxu0 0.0
  %1308 = vmatmul.mubr.f32.gmra.mrb[0].mxu0 %v480
  %v1309 = vpop.f32.mrb[0].mxu0
  %v1310 = vadd.f32 0.0, %v1309
  %v1311 = vpop.f32.mrb[0].mxu0
  %1312 = vmatprep.mubr.f32.mxu0 0.0
  %1313 = vmatmul.mubr.f32.gmra.mrb[0].mxu0 %v483
  %v1314 = vpop.f32.mrb[0].mxu0
  %v1315 = vadd.f32 0.0, %v1314
  %v1316 = vpop.f32.mrb[0].mxu0
  %1317 = vmatprep.mubr.f32.mxu0 0.0
  %1318 = vmatmul.mubr.f32.gmra.mrb[0].mxu0 %v486
  %v1319 = vpop.f32.mrb[0].mxu0
  %v1320 = vadd.f32 0.0, %v1319
  %v1321 = vpop.f32.mrb[0].mxu0
  %1322 = vmatprep.mubr.f32.mxu0 0.0
  %1323 = vmatmul.mubr.f32.gmra.mrb[0].mxu0 %v489
  %v1324 = vpop.f32.mrb[0].mxu0
  %v1325 = vadd.f32 0.0, %v1324
  %v1326 = vpop.f32.mrb[0].mxu0
  %1327 = vmatprep.mubr.f32.mxu0 0.0
  %1328 = vmatmul.mubr.f32.gmra.mrb[0].mxu0 %v492
  %v1329 = vpop.f32.mrb[0].mxu0
  %v1330 = vadd.f32 0.0, %v1329
  %v1331 = vpop.f32.mrb[0].mxu0
  %1332 = vmatprep.mubr.f32.mxu0 0.0
  %1333 = vmatmul.mubr.f32.gmra.mrb[0].mxu0 %v495
  %v1334 = vpop.f32.mrb[0].mxu0
  %v1335 = vadd.f32 0.0, %v1334
  %v1336 = vpop.f32.mrb[0].mxu0
  %1337 = vmatprep.mubr.f32.mxu0 0.0
  %1338 = vmatmul.mubr.f32.gmra.mrb[0].mxu0 %v498
  %v1339 = vpop.f32.mrb[0].mxu0
  %v1340 = vadd.f32 0.0, %v1339
  %v1341 = vpop.f32.mrb[0].mxu0
  %1342 = vmatprep.mubr.f32.mxu0 0.0
  %1343 = vmatmul.mubr.f32.gmra.mrb[0].mxu0 %v501
  %v1344 = vpop.f32.mrb[0].mxu0
  %v1345 = vadd.f32 0.0, %v1344
  %v1346 = vpop.f32.mrb[0].mxu0
  %1347 = vmatprep.mubr.f32.mxu0 0.0
  %1348 = vmatmul.mubr.f32.gmra.mrb[0].mxu0 %v504
  %v1349 = vpop.f32.mrb[0].mxu0
  %v1350 = vadd.f32 0.0, %v1349
  %v1351 = vpop.f32.mrb[0].mxu0
  %1352 = vmatprep.mubr.f32.mxu0 0.0
  %1353 = vmatmul.mubr.f32.gmra.mrb[0].mxu0 %v507
  %v1354 = vpop.f32.mrb[0].mxu0
  %v1355 = vadd.f32 0.0, %v1354
  %v1356 = vpop.f32.mrb[0].mxu0
  %1357 = vmatprep.mubr.f32.mxu0 0.0
  %1358 = vmatmul.mubr.f32.gmra.mrb[0].mxu0 %v510
  %v1359 = vpop.f32.mrb[0].mxu0
  %v1360 = vadd.f32 0.0, %v1359
  %v1361 = vpop.f32.mrb[0].mxu0
  %1362 = vmatprep.mubr.f32.mxu0 0.0
  %1363 = vmatmul.mubr.f32.gmra.mrb[0].mxu0 %v513
  %v1364 = vpop.f32.mrb[0].mxu0
  %v1365 = vadd.f32 0.0, %v1364
  %v1366 = vpop.f32.mrb[0].mxu0
  %1367 = vmatprep.mubr.f32.mxu0 0.0
  %1368 = vmatmul.mubr.f32.gmra.mrb[0].mxu0 %v516
  %v1369 = vpop.f32.mrb[0].mxu0
  %v1370 = vadd.f32 0.0, %v1369
  %v1371 = vpop.f32.mrb[0].mxu0
  %1372 = vmatprep.mubr.f32.mxu0 0.0
  %1373 = vmatmul.mubr.f32.gmra.mrb[0].mxu0 %v519
  %v1374 = vpop.f32.mrb[0].mxu0
  %v1375 = vadd.f32 0.0, %v1374
  %v1376 = vpop.f32.mrb[0].mxu0
  %1377 = vmatprep.mubr.f32.mxu0 0.0
  %1378 = vmatmul.mubr.f32.gmra.mrb[0].mxu0 %v522
  %v1379 = vpop.f32.mrb[0].mxu0
  %v1380 = vadd.f32 0.0, %v1379
  %v1381 = vpop.f32.mrb[0].mxu0
  %1382 = vmatprep.mubr.f32.mxu0 0.0
  %1383 = vmatmul.mubr.f32.gmra.mrb[0].mxu0 %v525
  %v1384 = vpop.f32.mrb[0].mxu0
  %v1385 = vadd.f32 0.0, %v1384
  %v1386 = vpop.f32.mrb[0].mxu0
  %1387 = vmatprep.mubr.f32.mxu0 0.0
  %1388 = vmatmul.mubr.f32.gmra.mrb[0].mxu0 %v528
  %v1389 = vpop.f32.mrb[0].mxu0
  %v1390 = vadd.f32 0.0, %v1389
  %v1391 = vpop.f32.mrb[0].mxu0
  %1392 = vmatprep.mubr.f32.mxu0 0.0
  %1393 = vmatmul.mubr.f32.gmra.mrb[0].mxu0 %v531
  %v1394 = vpop.f32.mrb[0].mxu0
  %v1395 = vadd.f32 0.0, %v1394
  %v1396 = vpop.f32.mrb[0].mxu0
  %1397 = vmatprep.mubr.f32.mxu0 0.0
  %1398 = vmatmul.mubr.f32.gmra.mrb[0].mxu0 %v534
  %v1399 = vpop.f32.mrb[0].mxu0
  %v1400 = vadd.f32 0.0, %v1399
  %v1401 = vpop.f32.mrb[0].mxu0
  %1402 = vmatprep.mubr.f32.mxu0 0.0
  %1403 = vmatmul.mubr.f32.gmra.mrb[0].mxu0 %v537
  %v1404 = vpop.f32.mrb[0].mxu0
  %v1405 = vadd.f32 0.0, %v1404
  %v1406 = vpop.f32.mrb[0].mxu0
  %1407 = vmatprep.mubr.f32.mxu0 0.0
  %1408 = vmatmul.mubr.f32.gmra.mrb[0].mxu0 %v540
  %v1409 = vpop.f32.mrb[0].mxu0
  %v1410 = vadd.f32 0.0, %v1409
  %v1411 = vpop.f32.mrb[0].mxu0
  %1412 = vmatprep.mubr.f32.mxu0 0.0
  %1413 = vmatmul.mubr.f32.gmra.mrb[0].mxu0 %v543
  %v1414 = vpop.f32.mrb[0].mxu0
  %v1415 = vadd.f32 0.0, %v1414
  %v1416 = vpop.f32.mrb[0].mxu0
  %1417 = vmatprep.mubr.f32.mxu0 0.0
  %1418 = vmatmul.mubr.f32.gmra.mrb[0].mxu0 %v546
  %v1419 = vpop.f32.mrb[0].mxu0
  %v1420 = vadd.f32 0.0, %v1419
  %v1421 = vpop.f32.mrb[0].mxu0
  %1422 = vmatprep.mubr.f32.mxu0 0.0
  %1423 = vmatmul.mubr.f32.gmra.mrb[0].mxu0 %v549
  %v1424 = vpop.f32.mrb[0].mxu0
  %v1425 = vadd.f32 0.0, %v1424
  %v1426 = vpop.f32.mrb[0].mxu0
  %1427 = vmatprep.mubr.f32.mxu0 0.0
  %1428 = vmatmul.mubr.f32.gmra.mrb[0].mxu0 %v552
  %v1429 = vpop.f32.mrb[0].mxu0
  %v1430 = vadd.f32 0.0, %v1429
  %v1431 = vpop.f32.mrb[0].mxu0
  %1432 = vmatprep.mubr.f32.mxu0 0.0
  %1433 = vmatmul.mubr.f32.gmra.mrb[0].mxu0 %v555
  %v1434 = vpop.f32.mrb[0].mxu0
  %v1435 = vadd.f32 0.0, %v1434
  %v1436 = vpop.f32.mrb[0].mxu0
  %1437 = vmatprep.mubr.f32.mxu0 0.0
  %1438 = vmatmul.mubr.f32.gmra.mrb[0].mxu0 %v558
  %v1439 = vpop.f32.mrb[0].mxu0
  %v1440 = vadd.f32 0.0, %v1439
  %v1441 = vpop.f32.mrb[0].mxu0
  %1442 = vmatprep.mubr.f32.mxu0 0.0
  %1443 = vmatmul.mubr.f32.gmra.mrb[0].mxu0 %v561
  %v1444 = vpop.f32.mrb[0].mxu0
  %v1445 = vadd.f32 0.0, %v1444
  %v1446 = vpop.f32.mrb[0].mxu0
  %1447 = vmatprep.mubr.f32.mxu0 0.0
  %1448 = vmatmul.mubr.f32.gmra.mrb[0].mxu0 %v564
  %v1449 = vpop.f32.mrb[0].mxu0
  %v1450 = vadd.f32 0.0, %v1449
  %v1451 = vpop.f32.mrb[0].mxu0
  %1452 = vmatprep.mubr.f32.mxu0 0.0
  %1453 = vmatmul.mubr.f32.gmra.mrb[0].mxu0 %v567
  %v1454 = vpop.f32.mrb[0].mxu0
  %v1455 = vadd.f32 0.0, %v1454
  %v1456 = vpop.f32.mrb[0].mxu0
  %1457 = vmatprep.mubr.f32.mxu0 0.0
  %1458 = vmatmul.mubr.f32.gmra.mrb[0].mxu0 %v570
  %v1459 = vpop.f32.mrb[0].mxu0
  %v1460 = vadd.f32 0.0, %v1459
  %v1461 = vpop.f32.mrb[0].mxu0
  %1462 = vmatprep.mubr.f32.mxu0 0.0
  %1463 = vmatmul.mubr.f32.gmra.mrb[0].mxu0 %v573
  %v1464 = vpop.f32.mrb[0].mxu0
  %v1465 = vadd.f32 0.0, %v1464
  %v1466 = vpop.f32.mrb[0].mxu0
  %1467 = vmatprep.mubr.f32.mxu0 0.0
  %1468 = vmatmul.mubr.f32.gmra.mrb[0].mxu0 %v576
  %v1469 = vpop.f32.mrb[0].mxu0
  %v1470 = vadd.f32 0.0, %v1469
  %v1471 = vpop.f32.mrb[0].mxu0
  %1472 = vmatprep.mubr.f32.mxu0 0.0
  %1473 = vmatmul.mubr.f32.gmra.mrb[0].mxu0 %v579
  %v1474 = vpop.f32.mrb[0].mxu0
  %v1475 = vadd.f32 0.0, %v1474
  %v1476 = vpop.f32.mrb[0].mxu0
  %1477 = vmatprep.mubr.f32.mxu0 0.0
  %1478 = vmatmul.mubr.f32.gmra.mrb[0].mxu0 %v582
  %v1479 = vpop.f32.mrb[0].mxu0
  %v1480 = vadd.f32 0.0, %v1479
  %v1481 = vpop.f32.mrb[0].mxu0
  %1482 = vmatprep.mubr.f32.mxu0 0.0
  %1483 = vmatmul.mubr.f32.gmra.mrb[0].mxu0 %v585
  %v1484 = vpop.f32.mrb[0].mxu0
  %v1485 = vadd.f32 0.0, %v1484
  %v1486 = vpop.f32.mrb[0].mxu0
  %1487 = vmatprep.mubr.f32.mxu0 0.0
  %1488 = vmatmul.mubr.f32.gmra.mrb[0].mxu0 %v588
  %v1489 = vpop.f32.mrb[0].mxu0
  %v1490 = vadd.f32 0.0, %v1489
  %v1491 = vpop.f32.mrb[0].mxu0
  %1492 = vmatprep.mubr.f32.mxu0 0.0
  %1493 = vmatmul.mubr.f32.gmra.mrb[0].mxu0 %v591
  %v1494 = vpop.f32.mrb[0].mxu0
  %v1495 = vadd.f32 0.0, %v1494
  %v1496 = vpop.f32.mrb[0].mxu0
  %1497 = vmatprep.mubr.f32.mxu0 0.0
  %1498 = vmatmul.mubr.f32.gmra.mrb[0].mxu0 %v594
  %v1499 = vpop.f32.mrb[0].mxu0
  %v1500 = vadd.f32 0.0, %v1499
  %v1501 = vpop.f32.mrb[0].mxu0
  %1502 = vmatprep.mubr.f32.mxu0 0.0
  %1503 = vmatmul.mubr.f32.gmra.mrb[0].mxu0 %v597
  %v1504 = vpop.f32.mrb[0].mxu0
  %v1505 = vadd.f32 0.0, %v1504
  %v1506 = vpop.f32.mrb[0].mxu0
  %1507 = vmatprep.mubr.f32.mxu0 0.0
  %1508 = vmatmul.mubr.f32.gmra.mrb[0].mxu0 %v600
  %v1509 = vpop.f32.mrb[0].mxu0
  %v1510 = vadd.f32 0.0, %v1509
  %v1511 = vpop.f32.mrb[0].mxu0
  %1512 = vmatprep.mubr.f32.mxu0 0.0
  %1513 = vmatmul.mubr.f32.gmra.mrb[0].mxu0 %v603
  %v1514 = vpop.f32.mrb[0].mxu0
  %v1515 = vadd.f32 0.0, %v1514
  %v1516 = vpop.f32.mrb[0].mxu0
  %1517 = vmatprep.mubr.f32.mxu0 0.0
  %1518 = vmatmul.mubr.f32.gmra.mrb[0].mxu0 %v606
  %v1519 = vpop.f32.mrb[0].mxu0
  %v1520 = vadd.f32 0.0, %v1519
  %v1521 = vpop.f32.mrb[0].mxu0
  %1522 = vmatprep.mubr.f32.mxu0 0.0
  %1523 = vmatmul.mubr.f32.gmra.mrb[0].mxu0 %v609
  %v1524 = vpop.f32.mrb[0].mxu0
  %v1525 = vadd.f32 0.0, %v1524
  %v1526 = vpop.f32.mrb[0].mxu0
  %1527 = vmatprep.mubr.f32.mxu0 0.0
  %1528 = vmatmul.mubr.f32.gmra.mrb[0].mxu0 %v612
  %v1529 = vpop.f32.mrb[0].mxu0
  %v1530 = vadd.f32 0.0, %v1529
  %v1531 = vpop.f32.mrb[0].mxu0
  %1532 = vmatprep.mubr.f32.mxu0 0.0
  %1533 = vmatmul.mubr.f32.gmra.mrb[0].mxu0 %v615
  %v1534 = vpop.f32.mrb[0].mxu0
  %v1535 = vadd.f32 0.0, %v1534
  %v1536 = vpop.f32.mrb[0].mxu0
  %1537 = vmatprep.mubr.f32.mxu0 0.0
  %1538 = vmatmul.mubr.f32.gmra.mrb[0].mxu0 %v618
  %v1539 = vpop.f32.mrb[0].mxu0
  %v1540 = vadd.f32 0.0, %v1539
  %v1541 = vpop.f32.mrb[0].mxu0
  %1542 = vmatprep.mubr.f32.mxu0 0.0
  %1543 = vmatmul.mubr.f32.gmra.mrb[0].mxu0 %v621
  %v1544 = vpop.f32.mrb[0].mxu0
  %v1545 = vadd.f32 0.0, %v1544
  %v1546 = vpop.f32.mrb[0].mxu0
  %1547 = vmatprep.mubr.f32.mxu0 0.0
  %1548 = vmatmul.mubr.f32.gmra.mrb[0].mxu0 %v624
  %v1549 = vpop.f32.mrb[0].mxu0
  %v1550 = vadd.f32 0.0, %v1549
  %v1551 = vpop.f32.mrb[0].mxu0
  %1552 = vmatprep.mubr.f32.mxu0 0.0
  %1553 = vmatmul.mubr.f32.gmra.mrb[0].mxu0 %v627
  %v1554 = vpop.f32.mrb[0].mxu0
  %v1555 = vadd.f32 0.0, %v1554
  %v1556 = vpop.f32.mrb[0].mxu0
  %1557 = vmatprep.mubr.f32.mxu0 0.0
  %1558 = vmatmul.mubr.f32.gmra.mrb[0].mxu0 %v630
  %v1559 = vpop.f32.mrb[0].mxu0
  %v1560 = vadd.f32 0.0, %v1559
  %v1561 = vpop.f32.mrb[0].mxu0
  %1562 = vmatprep.mubr.f32.mxu0 0.0
  %1563 = vmatmul.mubr.f32.gmra.mrb[0].mxu0 %v633
  %v1564 = vpop.f32.mrb[0].mxu0
  %v1565 = vadd.f32 0.0, %v1564
  %v1566 = vpop.f32.mrb[0].mxu0
  %1567 = vmatprep.mubr.f32.mxu0 0.0
  %1568 = vmatmul.mubr.f32.gmra.mrb[0].mxu0 %v636
  %v1569 = vpop.f32.mrb[0].mxu0
  %v1570 = vadd.f32 0.0, %v1569
  %v1571 = vpop.f32.mrb[0].mxu0
  %1572 = vmatprep.mubr.f32.mxu0 0.0
  %1573 = vmatmul.mubr.f32.gmra.mrb[0].mxu0 %v639
  %v1574 = vpop.f32.mrb[0].mxu0
  %v1575 = vadd.f32 0.0, %v1574
  %v1576 = vpop.f32.mrb[0].mxu0
  %1577 = vmatprep.mubr.f32.mxu0 0.0
  %1578 = vmatmul.mubr.f32.gmra.mrb[0].mxu0 %v642
  %v1579 = vpop.f32.mrb[0].mxu0
  %v1580 = vadd.f32 0.0, %v1579
  %v1581 = vpop.f32.mrb[0].mxu0
  %1582 = vmatprep.mubr.f32.mxu0 0.0
  %1583 = vmatmul.mubr.f32.gmra.mrb[0].mxu0 %v645
  %v1584 = vpop.f32.mrb[0].mxu0
  %v1585 = vadd.f32 0.0, %v1584
  %v1586 = vpop.f32.mrb[0].mxu0
  %1587 = vmatprep.mubr.f32.mxu0 0.0
  %1588 = vmatmul.mubr.f32.gmra.mrb[0].mxu0 %v648
  %v1589 = vpop.f32.mrb[0].mxu0
  %v1590 = vadd.f32 0.0, %v1589
  %v1591 = vpop.f32.mrb[0].mxu0
  %1592 = vmatprep.mubr.f32.mxu0 0.0
  %1593 = vmatmul.mubr.f32.gmra.mrb[0].mxu0 %v651
  %v1594 = vpop.f32.mrb[0].mxu0
  %v1595 = vadd.f32 0.0, %v1594
  %v1596 = vpop.f32.mrb[0].mxu0
  %1597 = vmatprep.mubr.f32.mxu0 0.0
  %1598 = vmatmul.mubr.f32.gmra.mrb[0].mxu0 %v654
  %v1599 = vpop.f32.mrb[0].mxu0
  %v1600 = vadd.f32 0.0, %v1599
  %v1601 = vpop.f32.mrb[0].mxu0
  %1602 = vmatprep.mubr.f32.mxu0 0.0
  %1603 = vmatmul.mubr.f32.gmra.mrb[0].mxu0 %v657
  %v1604 = vpop.f32.mrb[0].mxu0
  %v1605 = vadd.f32 0.0, %v1604
  %v1606 = vpop.f32.mrb[0].mxu0
  %1607 = vmatprep.mubr.f32.mxu0 0.0
  %1608 = vmatmul.mubr.f32.gmra.mrb[0].mxu0 %v660
  %v1609 = vpop.f32.mrb[0].mxu0
  %v1610 = vadd.f32 0.0, %v1609
  %v1611 = vpop.f32.mrb[0].mxu0
  %1612 = vmatprep.mubr.f32.mxu0 0.0
  %1613 = vmatmul.mubr.f32.gmra.mrb[0].mxu0 %v663
  %v1614 = vpop.f32.mrb[0].mxu0
  %v1615 = vadd.f32 0.0, %v1614
  %v1616 = vpop.f32.mrb[0].mxu0
  %1617 = vmatprep.mubr.f32.mxu0 0.0
  %1618 = vmatmul.mubr.f32.gmra.mrb[0].mxu0 %v666
  %v1619 = vpop.f32.mrb[0].mxu0
  %v1620 = vadd.f32 0.0, %v1619
  %v1621 = vpop.f32.mrb[0].mxu0
  %1622 = vmatprep.mubr.f32.mxu0 0.0
  %1623 = vmatmul.mubr.f32.gmra.mrb[0].mxu0 %v669
  %v1624 = vpop.f32.mrb[0].mxu0
  %v1625 = vadd.f32 0.0, %v1624
  %v1626 = vpop.f32.mrb[0].mxu0
  %1627 = vmatprep.mubr.f32.mxu0 0.0
  %1628 = vmatmul.mubr.f32.gmra.mrb[0].mxu0 %v672
  %v1629 = vpop.f32.mrb[0].mxu0
  %v1630 = vadd.f32 0.0, %v1629
  %v1631 = vpop.f32.mrb[0].mxu0
  %1632 = vmatprep.mubr.f32.mxu0 0.0
  %1633 = vmatmul.mubr.f32.gmra.mrb[0].mxu0 %v675
  %v1634 = vpop.f32.mrb[0].mxu0
  %v1635 = vadd.f32 0.0, %v1634
  %v1636 = vpop.f32.mrb[0].mxu0
  %1637 = vmatprep.mubr.f32.mxu0 0.0
  %1638 = vmatmul.mubr.f32.gmra.mrb[0].mxu0 %v678
  %v1639 = vpop.f32.mrb[0].mxu0
  %v1640 = vadd.f32 0.0, %v1639
  %v1641 = vpop.f32.mrb[0].mxu0
  %1642 = vmatprep.mubr.f32.mxu0 0.0
  %1643 = vmatmul.mubr.f32.gmra.mrb[0].mxu0 %v681
  %v1644 = vpop.f32.mrb[0].mxu0
  %v1645 = vadd.f32 0.0, %v1644
  %v1646 = vpop.f32.mrb[0].mxu0
  %1647 = vmatprep.mubr.f32.mxu0 0.0
  %1648 = vmatmul.mubr.f32.gmra.mrb[0].mxu0 %v684
  %v1649 = vpop.f32.mrb[0].mxu0
  %v1650 = vadd.f32 0.0, %v1649
  %v1651 = vpop.f32.mrb[0].mxu0
  %1652 = vmatprep.mubr.f32.mxu0 0.0
  %1653 = vmatmul.mubr.f32.gmra.mrb[0].mxu0 %v687
  %v1654 = vpop.f32.mrb[0].mxu0
  %v1655 = vadd.f32 0.0, %v1654
  %v1656 = vpop.f32.mrb[0].mxu0
  %1657 = vmatprep.mubr.f32.mxu0 0.0
  %1658 = vmatmul.mubr.f32.gmra.mrb[0].mxu0 %v690
  %v1659 = vpop.f32.mrb[0].mxu0
  %v1660 = vadd.f32 0.0, %v1659
  %v1661 = vpop.f32.mrb[0].mxu0
  %1662 = vmatprep.mubr.f32.mxu0 0.0
  %1663 = vmatmul.mubr.f32.gmra.mrb[0].mxu0 %v693
  %v1664 = vpop.f32.mrb[0].mxu0
  %v1665 = vadd.f32 0.0, %v1664
  %v1666 = vpop.f32.mrb[0].mxu0
  %1667 = vmatprep.mubr.f32.mxu0 0.0
  %1668 = vmatmul.mubr.f32.gmra.mrb[0].mxu0 %v696
  %v1669 = vpop.f32.mrb[0].mxu0
  %v1670 = vadd.f32 0.0, %v1669
  %v1671 = vpop.f32.mrb[0].mxu0
  %1672 = vmatprep.mubr.f32.mxu0 0.0
  %1673 = vmatmul.mubr.f32.gmra.mrb[0].mxu0 %v699
  %v1674 = vpop.f32.mrb[0].mxu0
  %v1675 = vadd.f32 0.0, %v1674
  %v1676 = vpop.f32.mrb[0].mxu0
  %1677 = vmatprep.mubr.f32.mxu0 0.0
  %1678 = vmatmul.mubr.f32.gmra.mrb[0].mxu0 %v702
  %v1679 = vpop.f32.mrb[0].mxu0
  %v1680 = vadd.f32 0.0, %v1679
  %v1681 = vpop.f32.mrb[0].mxu0
  %1682 = vmatprep.mubr.f32.mxu0 0.0
  %1683 = vmatmul.mubr.f32.gmra.mrb[0].mxu0 %v705
  %v1684 = vpop.f32.mrb[0].mxu0
  %v1685 = vadd.f32 0.0, %v1684
  %v1686 = vpop.f32.mrb[0].mxu0
  %1687 = vmatprep.mubr.f32.mxu0 0.0
  %1688 = vmatmul.mubr.f32.gmra.mrb[0].mxu0 %v708
  %v1689 = vpop.f32.mrb[0].mxu0
  %v1690 = vadd.f32 0.0, %v1689
  %v1691 = vpop.f32.mrb[0].mxu0
  %1692 = vmatprep.mubr.f32.mxu0 0.0
  %1693 = vmatmul.mubr.f32.gmra.mrb[0].mxu0 %v711
  %v1694 = vpop.f32.mrb[0].mxu0
  %v1695 = vadd.f32 0.0, %v1694
  %v1696 = vpop.f32.mrb[0].mxu0
  %1697 = vmatprep.mubr.f32.mxu0 0.0
  %1698 = vmatmul.mubr.f32.gmra.mrb[0].mxu0 %v714
  %v1699 = vpop.f32.mrb[0].mxu0
  %v1700 = vadd.f32 0.0, %v1699
  %v1701 = vpop.f32.mrb[0].mxu0
  %1702 = vmatprep.mubr.f32.mxu0 0.0
  %1703 = vmatmul.mubr.f32.gmra.mrb[0].mxu0 %v717
  %v1704 = vpop.f32.mrb[0].mxu0
  %v1705 = vadd.f32 0.0, %v1704
  %v1706 = vpop.f32.mrb[0].mxu0
  %1707 = vmatprep.mubr.f32.mxu0 0.0
  %1708 = vmatmul.mubr.f32.gmra.mrb[0].mxu0 %v720
  %v1709 = vpop.f32.mrb[0].mxu0
  %v1710 = vadd.f32 0.0, %v1709
  %v1711 = vpop.f32.mrb[0].mxu0
  %1712 = vmatprep.mubr.f32.mxu0 0.0
  %1713 = vmatmul.mubr.f32.gmra.mrb[0].mxu0 %v723
  %v1714 = vpop.f32.mrb[0].mxu0
  %v1715 = vadd.f32 0.0, %v1714
  %v1716 = vpop.f32.mrb[0].mxu0
  %1717 = vmatprep.mubr.f32.mxu0 0.0
  %1718 = vmatmul.mubr.f32.gmra.mrb[0].mxu0 %v726
  %v1719 = vpop.f32.mrb[0].mxu0
  %v1720 = vadd.f32 0.0, %v1719
  %v1721 = vpop.f32.mrb[0].mxu0
  %1722 = vmatprep.mubr.f32.mxu0 0.0
  %1723 = vmatmul.mubr.f32.gmra.mrb[0].mxu0 %v729
  %v1724 = vpop.f32.mrb[0].mxu0
  %v1725 = vadd.f32 0.0, %v1724
  %v1726 = vpop.f32.mrb[0].mxu0
  %1727 = vmatprep.mubr.f32.mxu0 0.0
  %1728 = vmatmul.mubr.f32.gmra.mrb[0].mxu0 %v732
  %v1729 = vpop.f32.mrb[0].mxu0
  %v1730 = vadd.f32 0.0, %v1729
  %v1731 = vpop.f32.mrb[0].mxu0
  %1732 = vmatprep.mubr.f32.mxu0 0.0
  %1733 = vmatmul.mubr.f32.gmra.mrb[0].mxu0 %v735
  %v1734 = vpop.f32.mrb[0].mxu0
  %v1735 = vadd.f32 0.0, %v1734
  %v1736 = vpop.f32.mrb[0].mxu0
  %1737 = vmatprep.mubr.f32.mxu0 0.0
  %1738 = vmatmul.mubr.f32.gmra.mrb[0].mxu0 %v738
  %v1739 = vpop.f32.mrb[0].mxu0
  %v1740 = vadd.f32 0.0, %v1739
  %v1741 = vpop.f32.mrb[0].mxu0
  %1742 = vmatprep.mubr.f32.mxu0 0.0
  %1743 = vmatmul.mubr.f32.gmra.mrb[0].mxu0 %v741
  %v1744 = vpop.f32.mrb[0].mxu0
  %v1745 = vadd.f32 0.0, %v1744
  %v1746 = vpop.f32.mrb[0].mxu0
  %1747 = vmatprep.mubr.f32.mxu0 0.0
  %1748 = vmatmul.mubr.f32.gmra.mrb[0].mxu0 %v744
  %v1749 = vpop.f32.mrb[0].mxu0
  %v1750 = vadd.f32 0.0, %v1749
  %v1751 = vpop.f32.mrb[0].mxu0
  %1752 = vmatprep.mubr.f32.mxu0 0.0
  %1753 = vmatmul.mubr.f32.gmra.mrb[0].mxu0 %v747
  %v1754 = vpop.f32.mrb[0].mxu0
  %v1755 = vadd.f32 0.0, %v1754
  %v1756 = vpop.f32.mrb[0].mxu0
  %1757 = vmatprep.mubr.f32.mxu0 0.0
  %1758 = vmatmul.mubr.f32.gmra.mrb[0].mxu0 %v750
  %v1759 = vpop.f32.mrb[0].mxu0
  %v1760 = vadd.f32 0.0, %v1759
  %v1761 = vpop.f32.mrb[0].mxu0
  %1762 = vmatprep.mubr.f32.mxu0 0.0
  %1763 = vmatmul.mubr.f32.gmra.mrb[0].mxu0 %v753
  %v1764 = vpop.f32.mrb[0].mxu0
  %v1765 = vadd.f32 0.0, %v1764
  %v1766 = vpop.f32.mrb[0].mxu0
  %1767 = vmatprep.mubr.f32.mxu0 0.0
  %1768 = vmatmul.mubr.f32.gmra.mrb[0].mxu0 %v756
  %v1769 = vpop.f32.mrb[0].mxu0
  %v1770 = vadd.f32 0.0, %v1769
  %v1771 = vpop.f32.mrb[0].mxu0
  %1772 = vmatprep.mubr.f32.mxu0 0.0
  %1773 = vmatmul.mubr.f32.gmra.mrb[0].mxu0 %v759
  %v1774 = vpop.f32.mrb[0].mxu0
  %v1775 = vadd.f32 0.0, %v1774
  %v1776 = vpop.f32.mrb[0].mxu0
  %1777 = vmatprep.mubr.f32.mxu0 0.0
  %1778 = vmatmul.mubr.f32.gmra.mrb[0].mxu0 %v762
  %v1779 = vpop.f32.mrb[0].mxu0
  %v1780 = vadd.f32 0.0, %v1779
  %v1781 = vpop.f32.mrb[0].mxu0
  %1782 = vmatprep.mubr.f32.mxu0 0.0
  %1783 = vmatmul.mubr.f32.gmra.mrb[0].mxu0 %v765
  %v1784 = vpop.f32.mrb[0].mxu0
  %v1785 = vadd.f32 0.0, %v1784
  %v1786 = vpop.f32.mrb[0].mxu0
  %1787 = vmatprep.mubr.f32.mxu0 0.0
  %1788 = vmatmul.mubr.f32.gmra.mrb[0].mxu0 %v768
  %v1789 = vpop.f32.mrb[0].mxu0
  %v1790 = vadd.f32 0.0, %v1789
  %v1791 = vpop.f32.mrb[0].mxu0
  %1792 = vmatprep.mubr.f32.mxu0 0.0
  %1793 = vmatmul.mubr.f32.gmra.mrb[0].mxu0 %v771
  %v1794 = vpop.f32.mrb[0].mxu0
  %v1795 = vadd.f32 0.0, %v1794
  %v1796 = vpop.f32.mrb[0].mxu0
  %1797 = vmatprep.mubr.f32.mxu0 0.0
  %1798 = vmatmul.mubr.f32.gmra.mrb[0].mxu0 %v774
  %v1799 = vpop.f32.mrb[0].mxu0
  %v1800 = vadd.f32 0.0, %v1799
  %v1801 = vpop.f32.mrb[0].mxu0
  %1802 = vmatprep.mubr.f32.mxu0 0.0
  %1803 = vmatmul.mubr.f32.gmra.mrb[0].mxu0 %v777
  %v1804 = vpop.f32.mrb[0].mxu0
  %v1805 = vadd.f32 0.0, %v1804
  %v1806 = vpop.f32.mrb[0].mxu0
  %1807 = vmatprep.mubr.f32.mxu0 0.0
  %1808 = vmatmul.mubr.f32.gmra.mrb[0].mxu0 %v780
  %v1809 = vpop.f32.mrb[0].mxu0
  %v1810 = vadd.f32 0.0, %v1809
  %v1811 = vpop.f32.mrb[0].mxu0
  %1812 = vmatprep.mubr.f32.mxu0 0.0
  %1813 = vmatmul.mubr.f32.gmra.mrb[0].mxu0 %v783
  %v1814 = vpop.f32.mrb[0].mxu0
  %v1815 = vadd.f32 0.0, %v1814
  %v1816 = vpop.f32.mrb[0].mxu0
  %1817 = vmatprep.mubr.f32.mxu0 0.0
  %1818 = vmatmul.mubr.f32.gmra.mrb[0].mxu0 %v786
  %v1819 = vpop.f32.mrb[0].mxu0
  %v1820 = vadd.f32 0.0, %v1819
  %v1821 = vpop.f32.mrb[0].mxu0
  %1822 = vmatprep.mubr.f32.mxu0 0.0
  %1823 = vmatmul.mubr.f32.gmra.mrb[0].mxu0 %v789
  %v1824 = vpop.f32.mrb[0].mxu0
  %v1825 = vadd.f32 0.0, %v1824
  %v1826 = vpop.f32.mrb[0].mxu0
  %1827 = vmatprep.mubr.f32.mxu0 0.0
  %1828 = vmatmul.mubr.f32.gmra.mrb[0].mxu0 %v792
  %v1829 = vpop.f32.mrb[0].mxu0
  %v1830 = vadd.f32 0.0, %v1829
  %v1831 = vpop.f32.mrb[0].mxu0
  %1832 = vmatprep.mubr.f32.mxu0 0.0
  %1833 = vmatmul.mubr.f32.gmra.mrb[0].mxu0 %v795
  %v1834 = vpop.f32.mrb[0].mxu0
  %v1835 = vadd.f32 0.0, %v1834
  %v1836 = vpop.f32.mrb[0].mxu0
  %1837 = vmatprep.mubr.f32.mxu0 0.0
  %1838 = vmatmul.mubr.f32.gmra.mrb[0].mxu0 %v798
  %v1839 = vpop.f32.mrb[0].mxu0
  %v1840 = vadd.f32 0.0, %v1839
  %v1841 = vpop.f32.mrb[0].mxu0
  %1842 = vmatprep.mubr.f32.mxu0 0.0
  %1843 = vmatmul.mubr.f32.gmra.mrb[0].mxu0 %v801
  %v1844 = vpop.f32.mrb[0].mxu0
  %v1845 = vadd.f32 0.0, %v1844
  %v1846 = vpop.f32.mrb[0].mxu0
  %1847 = vmatprep.mubr.f32.mxu0 0.0
  %1848 = vmatmul.mubr.f32.gmra.mrb[0].mxu0 %v804
  %v1849 = vpop.f32.mrb[0].mxu0
  %v1850 = vadd.f32 0.0, %v1849
  %v1851 = vpop.f32.mrb[0].mxu0
  %1852 = vmatprep.mubr.f32.mxu0 0.0
  %1853 = vmatmul.mubr.f32.gmra.mrb[0].mxu0 %v807
  %v1854 = vpop.f32.mrb[0].mxu0
  %v1855 = vadd.f32 0.0, %v1854
  %v1856 = vpop.f32.mrb[0].mxu0
  %1857 = vdwg.mxu0
  %v1858 = vmax.f32 %v880, %v1125
  %v1859 = vmax.f32 %v885, %v1130
  %v1860 = vmax.f32 %v890, %v1135
  %v1861 = vmax.f32 %v895, %v1140
  %v1862 = vmax.f32 %v900, %v1145
  %v1863 = vmax.f32 %v905, %v1150
  %v1864 = vmax.f32 %v910, %v1155
  %v1865 = vmax.f32 %v915, %v1160
  %v1866 = vmax.f32 %v920, %v1165
  %v1867 = vmax.f32 %v925, %v1170
  %v1868 = vmax.f32 %v930, %v1175
  %v1869 = vmax.f32 %v935, %v1180
  %v1870 = vmax.f32 %v940, %v1185
  %v1871 = vmax.f32 %v945, %v1190
  %v1872 = vmax.f32 %v950, %v1195
  %v1873 = vmax.f32 %v955, %v1200
  %v1874 = vmax.f32 %v960, %v1205
  %v1875 = vmax.f32 %v965, %v1210
  %v1876 = vmax.f32 %v970, %v1215
  %v1877 = vmax.f32 %v975, %v1220
  %v1878 = vmax.f32 %v980, %v1225
  %v1879 = vmax.f32 %v985, %v1230
  %v1880 = vmax.f32 %v990, %v1235
  %v1881 = vmax.f32 %v995, %v1240
  %v1882 = vmax.f32 %v1000, %v1245
  %v1883 = vmax.f32 %v1005, %v1250
  %v1884 = vmax.f32 %v1010, %v1255
  %v1885 = vmax.f32 %v1015, %v1260
  %v1886 = vmax.f32 %v1020, %v1265
  %v1887 = vmax.f32 %v1025, %v1270
  %v1888 = vmax.f32 %v1030, %v1275
  %v1889 = vmax.f32 %v1035, %v1280
  %v1890 = vmax.f32 %v1040, %v1285
  %v1891 = vmax.f32 %v1045, %v1290
  %v1892 = vmax.f32 %v1050, %v1295
  %v1893 = vmax.f32 %v1055, %v1300
  %v1894 = vmax.f32 %v1060, %v1305
  %v1895 = vmax.f32 %v1065, %v1310
  %v1896 = vmax.f32 %v1070, %v1315
  %v1897 = vmax.f32 %v1075, %v1320
  %v1898 = vmax.f32 %v1080, %v1325
  %v1899 = vmax.f32 %v1085, %v1330
  %v1900 = vmax.f32 %v1090, %v1335
  %v1901 = vmax.f32 %v1095, %v1340
  %v1902 = vmax.f32 %v1100, %v1345
  %v1903 = vmax.f32 %v1105, %v1350
  %v1904 = vmax.f32 %v1110, %v1355
  %v1905 = vmax.f32 %v1115, %v1360
  %v1906 = vmax.f32 %v1120, %v1365
  %v1907 = vmax.f32 %v1370, %v1615
  %v1908 = vmax.f32 %v1375, %v1620
  %v1909 = vmax.f32 %v1380, %v1625
  %v1910 = vmax.f32 %v1385, %v1630
  %v1911 = vmax.f32 %v1390, %v1635
  %v1912 = vmax.f32 %v1395, %v1640
  %v1913 = vmax.f32 %v1400, %v1645
  %v1914 = vmax.f32 %v1405, %v1650
  %v1915 = vmax.f32 %v1410, %v1655
  %v1916 = vmax.f32 %v1415, %v1660
  %v1917 = vmax.f32 %v1420, %v1665
  %v1918 = vmax.f32 %v1425, %v1670
  %v1919 = vmax.f32 %v1430, %v1675
  %v1920 = vmax.f32 %v1435, %v1680
  %v1921 = vmax.f32 %v1440, %v1685
  %v1922 = vmax.f32 %v1445, %v1690
  %v1923 = vmax.f32 %v1450, %v1695
  %v1924 = vmax.f32 %v1455, %v1700
  %v1925 = vmax.f32 %v1460, %v1705
  %v1926 = vmax.f32 %v1465, %v1710
  %v1927 = vmax.f32 %v1470, %v1715
  %v1928 = vmax.f32 %v1475, %v1720
  %v1929 = vmax.f32 %v1480, %v1725
  %v1930 = vmax.f32 %v1485, %v1730
  %v1931 = vmax.f32 %v1490, %v1735
  %v1932 = vmax.f32 %v1495, %v1740
  %v1933 = vmax.f32 %v1500, %v1745
  %v1934 = vmax.f32 %v1505, %v1750
  %v1935 = vmax.f32 %v1510, %v1755
  %v1936 = vmax.f32 %v1515, %v1760
  %v1937 = vmax.f32 %v1520, %v1765
  %v1938 = vmax.f32 %v1525, %v1770
  %v1939 = vmax.f32 %v1530, %v1775
  %v1940 = vmax.f32 %v1535, %v1780
  %v1941 = vmax.f32 %v1540, %v1785
  %v1942 = vmax.f32 %v1545, %v1790
  %v1943 = vmax.f32 %v1550, %v1795
  %v1944 = vmax.f32 %v1555, %v1800
  %v1945 = vmax.f32 %v1560, %v1805
  %v1946 = vmax.f32 %v1565, %v1810
  %v1947 = vmax.f32 %v1570, %v1815
  %v1948 = vmax.f32 %v1575, %v1820
  %v1949 = vmax.f32 %v1580, %v1825
  %v1950 = vmax.f32 %v1585, %v1830
  %v1951 = vmax.f32 %v1590, %v1835
  %v1952 = vmax.f32 %v1595, %v1840
  %v1953 = vmax.f32 %v1600, %v1845
  %v1954 = vmax.f32 %v1605, %v1850
  %v1955 = vmax.f32 %v1610, %v1855
  %v1956 = vmax.f32 %v1858, %v1907
  %v1957 = vmax.f32 %v1859, %v1908
  %v1958 = vmax.f32 %v1860, %v1909
  %v1959 = vmax.f32 %v1861, %v1910
  %v1960 = vmax.f32 %v1862, %v1911
  %v1961 = vmax.f32 %v1863, %v1912
  %v1962 = vmax.f32 %v1864, %v1913
  %v1963 = vmax.f32 %v1865, %v1914
  %v1964 = vmax.f32 %v1866, %v1915
  %v1965 = vmax.f32 %v1867, %v1916
  %v1966 = vmax.f32 %v1868, %v1917
  %v1967 = vmax.f32 %v1869, %v1918
  %v1968 = vmax.f32 %v1870, %v1919
  %v1969 = vmax.f32 %v1871, %v1920
  %v1970 = vmax.f32 %v1872, %v1921
  %v1971 = vmax.f32 %v1873, %v1922
  %v1972 = vmax.f32 %v1874, %v1923
  %v1973 = vmax.f32 %v1875, %v1924
  %v1974 = vmax.f32 %v1876, %v1925
  %v1975 = vmax.f32 %v1877, %v1926
  %v1976 = vmax.f32 %v1878, %v1927
  %v1977 = vmax.f32 %v1879, %v1928
  %v1978 = vmax.f32 %v1880, %v1929
  %v1979 = vmax.f32 %v1881, %v1930
  %v1980 = vmax.f32 %v1882, %v1931
  %v1981 = vmax.f32 %v1883, %v1932
  %v1982 = vmax.f32 %v1884, %v1933
  %v1983 = vmax.f32 %v1885, %v1934
  %v1984 = vmax.f32 %v1886, %v1935
  %v1985 = vmax.f32 %v1887, %v1936
  %v1986 = vmax.f32 %v1888, %v1937
  %v1987 = vmax.f32 %v1889, %v1938
  %v1988 = vmax.f32 %v1890, %v1939
  %v1989 = vmax.f32 %v1891, %v1940
  %v1990 = vmax.f32 %v1892, %v1941
  %v1991 = vmax.f32 %v1893, %v1942
  %v1992 = vmax.f32 %v1894, %v1943
  %v1993 = vmax.f32 %v1895, %v1944
  %v1994 = vmax.f32 %v1896, %v1945
  %v1995 = vmax.f32 %v1897, %v1946
  %v1996 = vmax.f32 %v1898, %v1947
  %v1997 = vmax.f32 %v1899, %v1948
  %v1998 = vmax.f32 %v1900, %v1949
  %v1999 = vmax.f32 %v1901, %v1950
  %v2000 = vmax.f32 %v1902, %v1951
  %v2001 = vmax.f32 %v1903, %v1952
  %v2002 = vmax.f32 %v1904, %v1953
  %v2003 = vmax.f32 %v1905, %v1954
  %v2004 = vmax.f32 %v1906, %v1955
  %v2005 = vld [vmem:[%s2] sm:$0x1]
  %v2007 = vlaneseq
  %v2008 = vshrl.u32 %v2007, 7
  %v2009 = vsub.s32 0, %v2008
  %v2010 = vrot.slane %v2005, %v2009
  %v2012 = vadd.f32 %v1956, %v2010
  %v2013 = vadd.f32 %v1957, %v2010
  %v2014 = vadd.f32 %v1958, %v2010
  %v2015 = vadd.f32 %v1959, %v2010
  %v2016 = vadd.f32 %v1960, %v2010
  %v2017 = vadd.f32 %v1961, %v2010
  %v2018 = vadd.f32 %v1962, %v2010
  %v2019 = vadd.f32 %v1963, %v2010
  %v2020 = vadd.f32 %v1964, %v2010
  %v2021 = vadd.f32 %v1965, %v2010
  %v2022 = vadd.f32 %v1966, %v2010
  %v2023 = vadd.f32 %v1967, %v2010
  %v2024 = vadd.f32 %v1968, %v2010
  %v2025 = vadd.f32 %v1969, %v2010
  %v2026 = vadd.f32 %v1970, %v2010
  %v2027 = vadd.f32 %v1971, %v2010
  %v2028 = vadd.f32 %v1972, %v2010
  %v2029 = vadd.f32 %v1973, %v2010
  %v2030 = vadd.f32 %v1974, %v2010
  %v2031 = vadd.f32 %v1975, %v2010
  %v2032 = vadd.f32 %v1976, %v2010
  %v2033 = vadd.f32 %v1977, %v2010
  %v2034 = vadd.f32 %v1978, %v2010
  %v2035 = vadd.f32 %v1979, %v2010
  %v2036 = vadd.f32 %v1980, %v2010
  %v2037 = vadd.f32 %v1981, %v2010
  %v2038 = vadd.f32 %v1982, %v2010
  %v2039 = vadd.f32 %v1983, %v2010
  %v2040 = vadd.f32 %v1984, %v2010
  %v2041 = vadd.f32 %v1985, %v2010
  %v2042 = vadd.f32 %v1986, %v2010
  %v2043 = vadd.f32 %v1987, %v2010
  %v2044 = vadd.f32 %v1988, %v2010
  %v2045 = vadd.f32 %v1989, %v2010
  %v2046 = vadd.f32 %v1990, %v2010
  %v2047 = vadd.f32 %v1991, %v2010
  %v2048 = vadd.f32 %v1992, %v2010
  %v2049 = vadd.f32 %v1993, %v2010
  %v2050 = vadd.f32 %v1994, %v2010
  %v2051 = vadd.f32 %v1995, %v2010
  %v2052 = vadd.f32 %v1996, %v2010
  %v2053 = vadd.f32 %v1997, %v2010
  %v2054 = vadd.f32 %v1998, %v2010
  %v2055 = vadd.f32 %v1999, %v2010
  %v2056 = vadd.f32 %v2000, %v2010
  %v2057 = vadd.f32 %v2001, %v2010
  %v2058 = vadd.f32 %v2002, %v2010
  %v2059 = vadd.f32 %v2003, %v2010
  %v2060 = vadd.f32 %v2004, %v2010
  %v2061 = vmax.f32 %v2012, 0.0
  %v2062 = vmax.f32 %v2013, 0.0
  %v2063 = vmax.f32 %v2014, 0.0
  %v2064 = vmax.f32 %v2015, 0.0
  %v2065 = vmax.f32 %v2016, 0.0
  %v2066 = vmax.f32 %v2017, 0.0
  %v2067 = vmax.f32 %v2018, 0.0
  %v2068 = vmax.f32 %v2019, 0.0
  %v2069 = vmax.f32 %v2020, 0.0
  %v2070 = vmax.f32 %v2021, 0.0
  %v2071 = vmax.f32 %v2022, 0.0
  %v2072 = vmax.f32 %v2023, 0.0
  %v2073 = vmax.f32 %v2024, 0.0
  %v2074 = vmax.f32 %v2025, 0.0
  %v2075 = vmax.f32 %v2026, 0.0
  %v2076 = vmax.f32 %v2027, 0.0
  %v2077 = vmax.f32 %v2028, 0.0
  %v2078 = vmax.f32 %v2029, 0.0
  %v2079 = vmax.f32 %v2030, 0.0
  %v2080 = vmax.f32 %v2031, 0.0
  %v2081 = vmax.f32 %v2032, 0.0
  %v2082 = vmax.f32 %v2033, 0.0
  %v2083 = vmax.f32 %v2034, 0.0
  %v2084 = vmax.f32 %v2035, 0.0
  %v2085 = vmax.f32 %v2036, 0.0
  %v2086 = vmax.f32 %v2037, 0.0
  %v2087 = vmax.f32 %v2038, 0.0
  %v2088 = vmax.f32 %v2039, 0.0
  %v2089 = vmax.f32 %v2040, 0.0
  %v2090 = vmax.f32 %v2041, 0.0
  %v2091 = vmax.f32 %v2042, 0.0
  %v2092 = vmax.f32 %v2043, 0.0
  %v2093 = vmax.f32 %v2044, 0.0
  %v2094 = vmax.f32 %v2045, 0.0
  %v2095 = vmax.f32 %v2046, 0.0
  %v2096 = vmax.f32 %v2047, 0.0
  %v2097 = vmax.f32 %v2048, 0.0
  %v2098 = vmax.f32 %v2049, 0.0
  %v2099 = vmax.f32 %v2050, 0.0
  %v2100 = vmax.f32 %v2051, 0.0
  %v2101 = vmax.f32 %v2052, 0.0
  %v2102 = vmax.f32 %v2053, 0.0
  %v2103 = vmax.f32 %v2054, 0.0
  %v2104 = vmax.f32 %v2055, 0.0
  %v2105 = vmax.f32 %v2056, 0.0
  %v2106 = vmax.f32 %v2057, 0.0
  %v2107 = vmax.f32 %v2058, 0.0
  %v2108 = vmax.f32 %v2059, 0.0
  %v2109 = vmax.f32 %v2060, 0.0
  %vm2110 = vcmask 48128
  %2111 = vst.msk [vmem:[%s3] sm:$0xff] %vm2110, %v2061
  %2112 = vst.msk [vmem:[%s3 + $0x8] sm:$0xff] %vm2110, %v2062
  %2113 = vst.msk [vmem:[%s3 + $0x10] sm:$0xff] %vm2110, %v2063
  %2114 = vst.msk [vmem:[%s3 + $0x18] sm:$0xff] %vm2110, %v2064
  %2115 = vst.msk [vmem:[%s3 + $0x20] sm:$0xff] %vm2110, %v2065
  %2116 = vst.msk [vmem:[%s3 + $0x28] sm:$0xff] %vm2110, %v2066
  %2117 = vst.msk [vmem:[%s3 + $0x30] sm:$0xff] %vm2110, %v2067
  %2118 = vst.msk [vmem:[%s3 + $0x38] sm:$0xff] %vm2110, %v2068
  %2119 = vst.msk [vmem:[%s3 + $0x40] sm:$0xff] %vm2110, %v2069
  %2120 = vst.msk [vmem:[%s3 + $0x48] sm:$0xff] %vm2110, %v2070
  %2121 = vst.msk [vmem:[%s3 + $0x50] sm:$0xff] %vm2110, %v2071
  %2122 = vst.msk [vmem:[%s3 + $0x58] sm:$0xff] %vm2110, %v2072
  %2123 = vst.msk [vmem:[%s3 + $0x60] sm:$0xff] %vm2110, %v2073
  %2124 = vst.msk [vmem:[%s3 + $0x68] sm:$0xff] %vm2110, %v2074
  %2125 = vst.msk [vmem:[%s3 + $0x70] sm:$0xff] %vm2110, %v2075
  %2126 = vst.msk [vmem:[%s3 + $0x78] sm:$0xff] %vm2110, %v2076
  %2127 = vst.msk [vmem:[%s3 + $0x80] sm:$0xff] %vm2110, %v2077
  %2128 = vst.msk [vmem:[%s3 + $0x88] sm:$0xff] %vm2110, %v2078
  %2129 = vst.msk [vmem:[%s3 + $0x90] sm:$0xff] %vm2110, %v2079
  %2130 = vst.msk [vmem:[%s3 + $0x98] sm:$0xff] %vm2110, %v2080
  %2131 = vst.msk [vmem:[%s3 + $0xa0] sm:$0xff] %vm2110, %v2081
  %2132 = vst.msk [vmem:[%s3 + $0xa8] sm:$0xff] %vm2110, %v2082
  %2133 = vst.msk [vmem:[%s3 + $0xb0] sm:$0xff] %vm2110, %v2083
  %2134 = vst.msk [vmem:[%s3 + $0xb8] sm:$0xff] %vm2110, %v2084
  %2135 = vst.msk [vmem:[%s3 + $0xc0] sm:$0xff] %vm2110, %v2085
  %2136 = vst.msk [vmem:[%s3 + $0xc8] sm:$0xff] %vm2110, %v2086
  %2137 = vst.msk [vmem:[%s3 + $0xd0] sm:$0xff] %vm2110, %v2087
  %2138 = vst.msk [vmem:[%s3 + $0xd8] sm:$0xff] %vm2110, %v2088
  %2139 = vst.msk [vmem:[%s3 + $0xe0] sm:$0xff] %vm2110, %v2089
  %2140 = vst.msk [vmem:[%s3 + $0xe8] sm:$0xff] %vm2110, %v2090
  %2141 = vst.msk [vmem:[%s3 + $0xf0] sm:$0xff] %vm2110, %v2091
  %2142 = vst.msk [vmem:[%s3 + $0xf8] sm:$0xff] %vm2110, %v2092
  %2143 = vst.msk [vmem:[%s3 + $0x100] sm:$0xff] %vm2110, %v2093
  %2144 = vst.msk [vmem:[%s3 + $0x108] sm:$0xff] %vm2110, %v2094
  %2145 = vst.msk [vmem:[%s3 + $0x110] sm:$0xff] %vm2110, %v2095
  %2146 = vst.msk [vmem:[%s3 + $0x118] sm:$0xff] %vm2110, %v2096
  %2147 = vst.msk [vmem:[%s3 + $0x120] sm:$0xff] %vm2110, %v2097
  %2148 = vst.msk [vmem:[%s3 + $0x128] sm:$0xff] %vm2110, %v2098
  %2149 = vst.msk [vmem:[%s3 + $0x130] sm:$0xff] %vm2110, %v2099
  %2150 = vst.msk [vmem:[%s3 + $0x138] sm:$0xff] %vm2110, %v2100
  %2151 = vst.msk [vmem:[%s3 + $0x140] sm:$0xff] %vm2110, %v2101
  %2152 = vst.msk [vmem:[%s3 + $0x148] sm:$0xff] %vm2110, %v2102
  %2153 = vst.msk [vmem:[%s3 + $0x150] sm:$0xff] %vm2110, %v2103
  %2154 = vst.msk [vmem:[%s3 + $0x158] sm:$0xff] %vm2110, %v2104
  %2155 = vst.msk [vmem:[%s3 + $0x160] sm:$0xff] %vm2110, %v2105
  %2156 = vst.msk [vmem:[%s3 + $0x168] sm:$0xff] %vm2110, %v2106
  %2157 = vst.msk [vmem:[%s3 + $0x170] sm:$0xff] %vm2110, %v2107
  %2158 = vst.msk [vmem:[%s3 + $0x178] sm:$0xff] %vm2110, %v2108
  %2159 = vst.msk [vmem:[%s3 + $0x180] sm:$0xff] %vm2110, %v2109
  // Predicated region
  $region14: #{simplenet_forward.2} parent=0 // pred_check
    _
  $region15: #{simplenet_forward.2} parent=0 // pred_check_branch
    %2161 = sbr.rel (0) target = $region17
  $region16: #{simplenet_forward.2} parent=0 // pred_region
    _
  $region17: #{simplenet_forward.2} parent=0 // pred_fallthru
    _
  // Predicated region
  $region18: #{simplenet_forward.2} parent=0 // pred_check
    _
  $region19: #{simplenet_forward.2} parent=0 // pred_check_branch
    %2163 = sbr.rel (0) target = $region21
  $region20: #{simplenet_forward.2} parent=0 // pred_region
    _
  $region21: #{simplenet_forward.2} parent=0 // pred_fallthru
    _

// kernel: simplenet_forward.3
$region0: #{simplenet_forward.3}
  #allocation0 [shape = 'u32[]', space=smem, size = 0x4, offset = 0x4, fixed_abs, tag = 'smem constant byte address 0x4 - core index']
  #allocation1 [shape = 'u32[144,128]{1,0:T(1,128)}', space=vmem, size = 0x12000, scoped, tag = 'internal scratch']
  %s0 = inlined_call_operand.vmem [shape: f32[200,150], index: 0, kind: input, shape index: {}]
  %s1 = inlined_call_operand.vmem [shape: f32[150,16], index: 1, kind: input, shape index: {}]
  %s2 = inlined_call_operand.vmem [shape: f32[1,16], index: 2, kind: input, shape index: {}]
  %s3 = inlined_call_operand.vmem [shape: f32[400,120], index: 3, kind: input, shape index: {}]
  %s4 = inlined_call_operand.vmem [shape: f32[1,120], index: 4, kind: input, shape index: {}]
  %s5 = inlined_call_operand.vmem [shape: f32[120,84], index: 5, kind: input, shape index: {}]
  %s6 = inlined_call_operand.vmem [shape: f32[1,84], index: 6, kind: input, shape index: {}]
  %s7 = inlined_call_operand.vmem [shape: f32[84,10], index: 7, kind: input, shape index: {}]
  %s8 = inlined_call_operand.vmem [shape: f32[1,10], index: 8, kind: input, shape index: {}]
  %s9 = inlined_call_operand.hbm [shape: f32[2,10], index: 9, kind: output, shape index: {}]
  %s10 = sld [smem:[#allocation0]]
  $region46: #{simplenet_forward.3} parent=0
    _
  %s12 = ssub.s32 1, %s10
  %s13 = scalar_select 0, %s12, %s10
  $region1: #{simplenet_forward.3} parent=0
    #allocation2 [shape = 'u8[1024]{0}', space=vmem, size = 0x400, scoped, tag = 'output window, operand 0, single buffered']
    #allocation3 [shape = 's32[1]{0}', space=sflag, size = 0x4, scoped, tag = 'scoped memory for simplenet_forward.3']
    %14 = vsyncpa [#allocation3], 0
    // Predicated region
    $region2: #{simplenet_forward.3} parent=1 // pred_check
      _
    $region3: #{simplenet_forward.3} parent=1 // pred_check_branch
      %16 = sbr.rel (0) target = $region5
    $region4: #{simplenet_forward.3} parent=1 // pred_region
      _
    $region5: #{simplenet_forward.3} parent=1 // pred_fallthru
      _
    // Predicated region
    $region6: #{simplenet_forward.3} parent=1 // pred_check
      _
    $region7: #{simplenet_forward.3} parent=1 // pred_check_branch
      %18 = sbr.rel (0) target = $region9
    $region8: #{simplenet_forward.3} parent=1 // pred_region
      _
    $region9: #{simplenet_forward.3} parent=1 // pred_fallthru
      _
    // Predicated region
    $region10: #{simplenet_forward.3} parent=1 // pred_check
      _
    $region11: #{simplenet_forward.3} parent=1 // pred_check_branch
      %20 = sbr.rel (0) target = $region13
    $region12: #{simplenet_forward.3} parent=1 // pred_region
      _
    $region13: #{simplenet_forward.3} parent=1 // pred_fallthru
      _
    // Predicated region
    $region14: #{simplenet_forward.3} parent=1 // pred_check
      _
    $region15: #{simplenet_forward.3} parent=1 // pred_check_branch
      %22 = sbr.rel (0) target = $region17
    $region16: #{simplenet_forward.3} parent=1 // pred_region
      _
    $region17: #{simplenet_forward.3} parent=1 // pred_fallthru
      _
    // Predicated region
    $region18: #{simplenet_forward.3} parent=1 // pred_check
      _
    $region19: #{simplenet_forward.3} parent=1 // pred_check_branch
      %24 = sbr.rel (0) target = $region21
    $region20: #{simplenet_forward.3} parent=1 // pred_region
      _
    $region21: #{simplenet_forward.3} parent=1 // pred_fallthru
      _
    // Predicated region
    $region22: #{simplenet_forward.3} parent=1 // pred_check
      _
    $region23: #{simplenet_forward.3} parent=1 // pred_check_branch
      %26 = sbr.rel (0) target = $region25
    $region24: #{simplenet_forward.3} parent=1 // pred_region
      _
    $region25: #{simplenet_forward.3} parent=1 // pred_fallthru
      _
    // Predicated region
    $region26: #{simplenet_forward.3} parent=1 // pred_check
      _
    $region27: #{simplenet_forward.3} parent=1 // pred_check_branch
      %28 = sbr.rel (0) target = $region29
    $region28: #{simplenet_forward.3} parent=1 // pred_region
      _
    $region29: #{simplenet_forward.3} parent=1 // pred_fallthru
      _
    // Predicated region
    $region30: #{simplenet_forward.3} parent=1 // pred_check
      _
    $region31: #{simplenet_forward.3} parent=1 // pred_check_branch
      %30 = sbr.rel (0) target = $region33
    $region32: #{simplenet_forward.3} parent=1 // pred_region
      _
    $region33: #{simplenet_forward.3} parent=1 // pred_fallthru
      _
    // Predicated region
    $region34: #{simplenet_forward.3} parent=1 // pred_check
      _
    $region35: #{simplenet_forward.3} parent=1 // pred_check_branch
      %32 = sbr.rel (0) target = $region37
    $region36: #{simplenet_forward.3} parent=1 // pred_region
      _
    $region37: #{simplenet_forward.3} parent=1 // pred_fallthru
      _
    %v33 = vld [vmem:[%s0] sm:$0xff]
    %v34 = vld [vmem:[%s0 + $0x8] sm:$0xff]
    %v35 = vld [vmem:[%s0 + $0x10] sm:$0xff]
    %v36 = vld [vmem:[%s0 + $0x18] sm:$0xff]
    %v37 = vld [vmem:[%s0 + $0x20] sm:$0xff]
    %v38 = vld [vmem:[%s0 + $0x28] sm:$0xff]
    %v39 = vld [vmem:[%s0 + $0x30] sm:$0xff]
    %v40 = vld [vmem:[%s0 + $0x38] sm:$0xff]
    %v41 = vld [vmem:[%s0 + $0x40] sm:$0xff]
    %v42 = vld [vmem:[%s0 + $0x48] sm:$0xff]
    %v43 = vld [vmem:[%s0 + $0x50] sm:$0xff]
    %v44 = vld [vmem:[%s0 + $0x58] sm:$0xff]
    %v45 = vld [vmem:[%s0 + $0x60] sm:$0xff]
    %v46 = vld [vmem:[%s0 + $0x68] sm:$0xff]
    %v47 = vld [vmem:[%s0 + $0x70] sm:$0xff]
    %v48 = vld [vmem:[%s0 + $0x78] sm:$0xff]
    %v49 = vld [vmem:[%s0 + $0x80] sm:$0xff]
    %v50 = vld [vmem:[%s0 + $0x88] sm:$0xff]
    %v51 = vld [vmem:[%s0 + $0x90] sm:$0xff]
    %v52 = vld [vmem:[%s0 + $0x98] sm:$0xff]
    %v53 = vld [vmem:[%s0 + $0xa0] sm:$0xff]
    %v54 = vld [vmem:[%s0 + $0xa8] sm:$0xff]
    %v55 = vld [vmem:[%s0 + $0xb0] sm:$0xff]
    %v56 = vld [vmem:[%s0 + $0xb8] sm:$0xff]
    %v57 = vld [vmem:[%s0 + $0xc0] sm:$0xff]
    %v58 = vld [vmem:[%s0 + $0xc8] sm:$0xff]
    %v59 = vld [vmem:[%s0 + $0xd0] sm:$0xff]
    %v60 = vld [vmem:[%s0 + $0xd8] sm:$0xff]
    %v61 = vld [vmem:[%s0 + $0xe0] sm:$0xff]
    %v62 = vld [vmem:[%s0 + $0xe8] sm:$0xff]
    %v63 = vld [vmem:[%s0 + $0xf0] sm:$0xff]
    %v64 = vld [vmem:[%s0 + $0xf8] sm:$0xff]
    %v65 = vld [vmem:[%s0 + $0x100] sm:$0xff]
    %v66 = vld [vmem:[%s0 + $0x108] sm:$0xff]
    %v67 = vld [vmem:[%s0 + $0x110] sm:$0xff]
    %v68 = vld [vmem:[%s0 + $0x118] sm:$0xff]
    %v69 = vld [vmem:[%s0 + $0x120] sm:$0xff]
    %v70 = vld [vmem:[%s0 + $0x128] sm:$0xff]
    %v71 = vld [vmem:[%s0 + $0x130] sm:$0xff]
    %v72 = vld [vmem:[%s0 + $0x138] sm:$0xff]
    %v73 = vld [vmem:[%s0 + $0x140] sm:$0xff]
    %v74 = vld [vmem:[%s0 + $0x148] sm:$0xff]
    %v75 = vld [vmem:[%s0 + $0x150] sm:$0xff]
    %v76 = vld [vmem:[%s0 + $0x158] sm:$0xff]
    %v77 = vld [vmem:[%s0 + $0x160] sm:$0xff]
    %v78 = vld [vmem:[%s0 + $0x168] sm:$0xff]
    %v79 = vld [vmem:[%s0 + $0x170] sm:$0xff]
    %v80 = vld [vmem:[%s0 + $0x178] sm:$0xff]
    %v81 = vld [vmem:[%s0 + $0x180] sm:$0xff]
    %v82 = vld [vmem:[%s0 + $0x188] sm:$0xff]
    %v83 = vld [vmem:[%s1] sm:$0xff]
    %v84 = vld [vmem:[%s1 + $0x8] sm:$0xff]
    %v85 = vld [vmem:[%s1 + $0x10] sm:$0xff]
    %v86 = vld [vmem:[%s1 + $0x18] sm:$0xff]
    %v87 = vld [vmem:[%s1 + $0x20] sm:$0xff]
    %v88 = vld [vmem:[%s1 + $0x28] sm:$0xff]
    %v89 = vld [vmem:[%s1 + $0x30] sm:$0xff]
    %v90 = vld [vmem:[%s1 + $0x38] sm:$0xff]
    %v91 = vld [vmem:[%s1 + $0x40] sm:$0xff]
    %v92 = vld [vmem:[%s1 + $0x48] sm:$0xff]
    %v93 = vld [vmem:[%s1 + $0x50] sm:$0xff]
    %v94 = vld [vmem:[%s1 + $0x58] sm:$0xff]
    %v95 = vld [vmem:[%s1 + $0x60] sm:$0xff]
    %v96 = vld [vmem:[%s1 + $0x68] sm:$0xff]
    %v97 = vld [vmem:[%s1 + $0x70] sm:$0xff]
    %v98 = vld [vmem:[%s1 + $0x78] sm:$0xff]
    %v99 = vld [vmem:[%s1 + $0x80] sm:$0xff]
    %v100 = vld [vmem:[%s1 + $0x88] sm:$0xff]
    %v101 = vld [vmem:[%s1 + $0x90] sm:$0x3f]
    %vm102 = vcmask 179200
    %v104 = vsel %vm102, %v34, 0
    %v107 = vsel %vm102, %v36, 0
    %v110 = vsel %vm102, %v38, 0
    %v113 = vsel %vm102, %v40, 0
    %v116 = vsel %vm102, %v42, 0
    %v119 = vsel %vm102, %v44, 0
    %v122 = vsel %vm102, %v46, 0
    %v125 = vsel %vm102, %v48, 0
    %v128 = vsel %vm102, %v50, 0
    %v131 = vsel %vm102, %v52, 0
    %v134 = vsel %vm102, %v54, 0
    %v137 = vsel %vm102, %v56, 0
    %v140 = vsel %vm102, %v58, 0
    %v143 = vsel %vm102, %v60, 0
    %v146 = vsel %vm102, %v62, 0
    %v149 = vsel %vm102, %v64, 0
    %v152 = vsel %vm102, %v66, 0
    %v155 = vsel %vm102, %v68, 0
    %v158 = vsel %vm102, %v70, 0
    %v161 = vsel %vm102, %v72, 0
    %v164 = vsel %vm102, %v74, 0
    %v167 = vsel %vm102, %v76, 0
    %v170 = vsel %vm102, %v78, 0
    %v173 = vsel %vm102, %v80, 0
    %v176 = vsel %vm102, %v82, 0
    %vm178 = vcmask 1045504
    %v180 = vsel %vm178, %v101, 0
    %182 = vmatprep.subr.mxu0 0.0
    %183 = vmatpush1.msra.mxu0 %v83
    %184 = vmatprep.subr.mxu0 0.0
    %185 = vmatpush1.msra.mxu0 %v84
    %186 = vmatprep.subr.mxu0 0.0
    %187 = vmatpush1.msra.mxu0 %v85
    %188 = vmatprep.subr.mxu0 0.0
    %189 = vmatpush1.msra.mxu0 %v86
    %190 = vmatprep.subr.mxu0 0.0
    %191 = vmatpush1.msra.mxu0 %v87
    %192 = vmatprep.subr.mxu0 0.0
    %193 = vmatpush1.msra.mxu0 %v88
    %194 = vmatprep.subr.mxu0 0.0
    %195 = vmatpush1.msra.mxu0 %v89
    %196 = vmatprep.subr.mxu0 0.0
    %197 = vmatpush1.msra.mxu0 %v90
    %198 = vmatprep.subr.mxu0 0.0
    %199 = vmatpush1.msra.mxu0 %v91
    %200 = vmatprep.subr.mxu0 0.0
    %201 = vmatpush1.msra.mxu0 %v92
    %202 = vmatprep.subr.mxu0 0.0
    %203 = vmatpush1.msra.mxu0 %v93
    %204 = vmatprep.subr.mxu0 0.0
    %205 = vmatpush1.msra.mxu0 %v94
    %206 = vmatprep.subr.mxu0 0.0
    %207 = vmatpush1.msra.mxu0 %v95
    %208 = vmatprep.subr.mxu0 0.0
    %209 = vmatpush1.msra.mxu0 %v96
    %210 = vmatprep.subr.mxu0 0.0
    %211 = vmatpush1.msra.mxu0 %v97
    %212 = vmatprep.subr.mxu0 0.0
    %213 = vmatpush1.msra.mxu0 %v98
    %214 = vmatprep.subr.mxu0 0.0
    %215 = vmatpush1.msra.mxu0 %v99
    %216 = vmatprep.subr.mxu0 0.0
    %217 = vmatpush1.msra.mxu0 %v100
    %218 = vmatprep.subr.mxu0 0.0
    %219 = vmatpush1.msra.mxu0 %v180
    %220 = vmatprep.subr.mxu0 0.0
    %221 = vmatpush1.msra.mxu0 0.0
    %222 = vmatprep.subr.mxu0 0.0
    %223 = vmatpush1.msra.mxu0 0.0
    %224 = vmatprep.subr.mxu0 0.0
    %225 = vmatpush1.msra.mxu0 0.0
    %226 = vmatprep.subr.mxu0 0.0
    %227 = vmatpush1.msra.mxu0 0.0
    %228 = vmatprep.subr.mxu0 0.0
    %229 = vmatpush1.msra.mxu0 0.0
    %230 = vmatprep.subr.mxu0 0.0
    %231 = vmatpush1.msra.mxu0 0.0
    %232 = vmatprep.subr.mxu0 0.0
    %233 = vmatpush1.msra.mxu0 0.0
    %234 = vmatprep.subr.mxu0 0.0
    %235 = vmatpush1.msra.mxu0 0.0
    %236 = vmatprep.subr.mxu0 0.0
    %237 = vmatpush1.msra.mxu0 0.0
    %238 = vmatprep.subr.mxu0 0.0
    %239 = vmatpush1.msra.mxu0 0.0
    %240 = vmatprep.subr.mxu0 0.0
    %241 = vmatpush1.msra.mxu0 0.0
    %242 = vmatprep.subr.mxu0 0.0
    %243 = vmatpush1.msra.mxu0 0.0
    %244 = vmatprep.subr.mxu0 0.0
    %245 = vmatpush1.msra.mxu0 0.0
    %246 = vmatprep.mubr.f32.mxu0 %v104
    %247 = vmatmul.mubr.f32.gmra.mrb[0].mxu0 %v33
    %v248 = vpop.f32.mrb[0].mxu0
    %v249 = vadd.f32 0.0, %v248
    %v250 = vpop.f32.mrb[0].mxu0
    %251 = vmatprep.mubr.f32.mxu0 %v107
    %252 = vmatmul.mubr.f32.gmra.mrb[0].mxu0 %v35
    %v253 = vpop.f32.mrb[0].mxu0
    %v254 = vadd.f32 0.0, %v253
    %v255 = vpop.f32.mrb[0].mxu0
    %256 = vmatprep.mubr.f32.mxu0 %v110
    %257 = vmatmul.mubr.f32.gmra.mrb[0].mxu0 %v37
    %v258 = vpop.f32.mrb[0].mxu0
    %v259 = vadd.f32 0.0, %v258
    %v260 = vpop.f32.mrb[0].mxu0
    %261 = vmatprep.mubr.f32.mxu0 %v113
    %262 = vmatmul.mubr.f32.gmra.mrb[0].mxu0 %v39
    %v263 = vpop.f32.mrb[0].mxu0
    %v264 = vadd.f32 0.0, %v263
    %v265 = vpop.f32.mrb[0].mxu0
    %266 = vmatprep.mubr.f32.mxu0 %v116
    %267 = vmatmul.mubr.f32.gmra.mrb[0].mxu0 %v41
    %v268 = vpop.f32.mrb[0].mxu0
    %v269 = vadd.f32 0.0, %v268
    %v270 = vpop.f32.mrb[0].mxu0
    %271 = vmatprep.mubr.f32.mxu0 %v119
    %272 = vmatmul.mubr.f32.gmra.mrb[0].mxu0 %v43
    %v273 = vpop.f32.mrb[0].mxu0
    %v274 = vadd.f32 0.0, %v273
    %v275 = vpop.f32.mrb[0].mxu0
    %276 = vmatprep.mubr.f32.mxu0 %v122
    %277 = vmatmul.mubr.f32.gmra.mrb[0].mxu0 %v45
    %v278 = vpop.f32.mrb[0].mxu0
    %v279 = vadd.f32 0.0, %v278
    %v280 = vpop.f32.mrb[0].mxu0
    %281 = vmatprep.mubr.f32.mxu0 %v125
    %282 = vmatmul.mubr.f32.gmra.mrb[0].mxu0 %v47
    %v283 = vpop.f32.mrb[0].mxu0
    %v284 = vadd.f32 0.0, %v283
    %v285 = vpop.f32.mrb[0].mxu0
    %286 = vmatprep.mubr.f32.mxu0 %v128
    %287 = vmatmul.mubr.f32.gmra.mrb[0].mxu0 %v49
    %v288 = vpop.f32.mrb[0].mxu0
    %v289 = vadd.f32 0.0, %v288
    %v290 = vpop.f32.mrb[0].mxu0
    %291 = vmatprep.mubr.f32.mxu0 %v131
    %292 = vmatmul.mubr.f32.gmra.mrb[0].mxu0 %v51
    %v293 = vpop.f32.mrb[0].mxu0
    %v294 = vadd.f32 0.0, %v293
    %v295 = vpop.f32.mrb[0].mxu0
    %296 = vmatprep.mubr.f32.mxu0 %v134
    %297 = vmatmul.mubr.f32.gmra.mrb[0].mxu0 %v53
    %v298 = vpop.f32.mrb[0].mxu0
    %v299 = vadd.f32 0.0, %v298
    %v300 = vpop.f32.mrb[0].mxu0
    %301 = vmatprep.mubr.f32.mxu0 %v137
    %302 = vmatmul.mubr.f32.gmra.mrb[0].mxu0 %v55
    %v303 = vpop.f32.mrb[0].mxu0
    %v304 = vadd.f32 0.0, %v303
    %v305 = vpop.f32.mrb[0].mxu0
    %306 = vmatprep.mubr.f32.mxu0 %v140
    %307 = vmatmul.mubr.f32.gmra.mrb[0].mxu0 %v57
    %v308 = vpop.f32.mrb[0].mxu0
    %v309 = vadd.f32 0.0, %v308
    %v310 = vpop.f32.mrb[0].mxu0
    %311 = vmatprep.mubr.f32.mxu0 %v143
    %312 = vmatmul.mubr.f32.gmra.mrb[0].mxu0 %v59
    %v313 = vpop.f32.mrb[0].mxu0
    %v314 = vadd.f32 0.0, %v313
    %v315 = vpop.f32.mrb[0].mxu0
    %316 = vmatprep.mubr.f32.mxu0 %v146
    %317 = vmatmul.mubr.f32.gmra.mrb[0].mxu0 %v61
    %v318 = vpop.f32.mrb[0].mxu0
    %v319 = vadd.f32 0.0, %v318
    %v320 = vpop.f32.mrb[0].mxu0
    %321 = vmatprep.mubr.f32.mxu0 %v149
    %322 = vmatmul.mubr.f32.gmra.mrb[0].mxu0 %v63
    %v323 = vpop.f32.mrb[0].mxu0
    %v324 = vadd.f32 0.0, %v323
    %v325 = vpop.f32.mrb[0].mxu0
    %326 = vmatprep.mubr.f32.mxu0 %v152
    %327 = vmatmul.mubr.f32.gmra.mrb[0].mxu0 %v65
    %v328 = vpop.f32.mrb[0].mxu0
    %v329 = vadd.f32 0.0, %v328
    %v330 = vpop.f32.mrb[0].mxu0
    %331 = vmatprep.mubr.f32.mxu0 %v155
    %332 = vmatmul.mubr.f32.gmra.mrb[0].mxu0 %v67
    %v333 = vpop.f32.mrb[0].mxu0
    %v334 = vadd.f32 0.0, %v333
    %v335 = vpop.f32.mrb[0].mxu0
    %336 = vmatprep.mubr.f32.mxu0 %v158
    %337 = vmatmul.mubr.f32.gmra.mrb[0].mxu0 %v69
    %v338 = vpop.f32.mrb[0].mxu0
    %v339 = vadd.f32 0.0, %v338
    %v340 = vpop.f32.mrb[0].mxu0
    %341 = vmatprep.mubr.f32.mxu0 %v161
    %342 = vmatmul.mubr.f32.gmra.mrb[0].mxu0 %v71
    %v343 = vpop.f32.mrb[0].mxu0
    %v344 = vadd.f32 0.0, %v343
    %v345 = vpop.f32.mrb[0].mxu0
    %346 = vmatprep.mubr.f32.mxu0 %v164
    %347 = vmatmul.mubr.f32.gmra.mrb[0].mxu0 %v73
    %v348 = vpop.f32.mrb[0].mxu0
    %v349 = vadd.f32 0.0, %v348
    %v350 = vpop.f32.mrb[0].mxu0
    %351 = vmatprep.mubr.f32.mxu0 %v167
    %352 = vmatmul.mubr.f32.gmra.mrb[0].mxu0 %v75
    %v353 = vpop.f32.mrb[0].mxu0
    %v354 = vadd.f32 0.0, %v353
    %v355 = vpop.f32.mrb[0].mxu0
    %356 = vmatprep.mubr.f32.mxu0 %v170
    %357 = vmatmul.mubr.f32.gmra.mrb[0].mxu0 %v77
    %v358 = vpop.f32.mrb[0].mxu0
    %v359 = vadd.f32 0.0, %v358
    %v360 = vpop.f32.mrb[0].mxu0
    %361 = vmatprep.mubr.f32.mxu0 %v173
    %362 = vmatmul.mubr.f32.gmra.mrb[0].mxu0 %v79
    %v363 = vpop.f32.mrb[0].mxu0
    %v364 = vadd.f32 0.0, %v363
    %v365 = vpop.f32.mrb[0].mxu0
    %366 = vmatprep.mubr.f32.mxu0 %v176
    %367 = vmatmul.mubr.f32.gmra.mrb[0].mxu0 %v81
    %v368 = vpop.f32.mrb[0].mxu0
    %v369 = vadd.f32 0.0, %v368
    %v370 = vpop.f32.mrb[0].mxu0
    %371 = vdwg.mxu0
    %v379 = vrot.slane %v279, 2
    %v380 = vrot.slane %v284, 2
    %v381 = vsel %vm178, %v379, %v380
    %v382 = vrot.slane %v289, 2
    %v383 = vsel %vm178, %v380, %v382
    %v384 = vrot.slane %v294, 2
    %v385 = vsel %vm178, %v382, %v384
    %v386 = vrot.slane %v299, 2
    %v387 = vsel %vm178, %v384, %v386
    %v388 = vrot.slane %v304, 2
    %v389 = vsel %vm178, %v386, %v388
    %v390 = vrot.slane %v309, 2
    %v391 = vsel %vm178, %v388, %v390
    %v399 = vmax.f32 %v249, %v381
    %v400 = vmax.f32 %v254, %v383
    %v401 = vmax.f32 %v259, %v385
    %v402 = vmax.f32 %v264, %v387
    %v403 = vmax.f32 %v269, %v389
    %v404 = vmax.f32 %v274, %v391
    %v405 = vmax.f32 %v279, %v390
    %v413 = vrot.slane %v339, 2
    %v414 = vrot.slane %v344, 2
    %v415 = vsel %vm178, %v413, %v414
    %v416 = vrot.slane %v349, 2
    %v417 = vsel %vm178, %v414, %v416
    %v418 = vrot.slane %v354, 2
    %v419 = vsel %vm178, %v416, %v418
    %v420 = vrot.slane %v359, 2
    %v421 = vsel %vm178, %v418, %v420
    %v422 = vrot.slane %v364, 2
    %v423 = vsel %vm178, %v420, %v422
    %v424 = vrot.slane %v369, 2
    %v425 = vsel %vm178, %v422, %v424
    %v433 = vmax.f32 %v309, %v415
    %v434 = vmax.f32 %v314, %v417
    %v435 = vmax.f32 %v319, %v419
    %v436 = vmax.f32 %v324, %v421
    %v437 = vmax.f32 %v329, %v423
    %v438 = vmax.f32 %v334, %v425
    %v439 = vmax.f32 %v339, %v424
    %vm447 = vcmask 1043456
    %v448 = vrot.slane %v433, 4
    %v449 = vrot.slane %v434, 4
    %v450 = vsel %vm447, %v448, %v449
    %v451 = vrot.slane %v435, 4
    %v452 = vsel %vm447, %v449, %v451
    %v453 = vrot.slane %v436, 4
    %v454 = vsel %vm447, %v451, %v453
    %v455 = vrot.slane %v437, 4
    %v456 = vsel %vm447, %v453, %v455
    %v457 = vrot.slane %v438, 4
    %v458 = vsel %vm447, %v455, %v457
    %v459 = vrot.slane %v439, 4
    %v460 = vsel %vm447, %v457, %v459
    %v468 = vmax.f32 %v399, %v450
    %v469 = vmax.f32 %v400, %v452
    %v470 = vmax.f32 %v401, %v454
    %v471 = vmax.f32 %v402, %v456
    %v472 = vmax.f32 %v403, %v458
    %v473 = vmax.f32 %v404, %v460
    %v474 = vmax.f32 %v405, %v459
    %v475 = vld [vmem:[%s2] sm:$0x1]
    %v477 = vlaneseq
    %v478 = vshrl.u32 %v477, 7
    %v479 = vsub.s32 0, %v478
    %v480 = vrot.slane %v475, %v479
    %v482 = vadd.f32 %v468, %v480
    %v483 = vadd.f32 %v469, %v480
    %v484 = vadd.f32 %v470, %v480
    %v485 = vadd.f32 %v471, %v480
    %v486 = vadd.f32 %v472, %v480
    %v487 = vadd.f32 %v473, %v480
    %v488 = vadd.f32 %v474, %v480
    %v489 = vmax.f32 %v482, 0.0
    %v490 = vmax.f32 %v483, 0.0
    %v491 = vmax.f32 %v484, 0.0
    %v492 = vmax.f32 %v485, 0.0
    %v493 = vmax.f32 %v486, 0.0
    %v494 = vmax.f32 %v487, 0.0
    %v495 = vmax.f32 %v488, 0.0
    %v497 = vrot.slane %v489, 2
    %498 = vrot.lane.b32.xlu0 %v497, 16
    %v499 = vpop.permute.xlu0 %498
    %v501 = vrot.slane %v489, 4
    %502 = vrot.lane.b32.xlu0 %v501, 32
    %v503 = vpop.permute.xlu0 %502
    %v505 = vrot.slane %v489, 6
    %506 = vrot.lane.b32.xlu0 %v505, 48
    %v507 = vpop.permute.xlu0 %506
    %510 = vrot.lane.b32.xlu0 %v490, 64
    %v511 = vpop.permute.xlu0 %510
    %v513 = vrot.slane %v490, 2
    %514 = vrot.lane.b32.xlu0 %v513, 80
    %v515 = vpop.permute.xlu0 %514
    %v517 = vrot.slane %v490, 4
    %518 = vrot.lane.b32.xlu0 %v517, 96
    %v519 = vpop.permute.xlu0 %518
    %v521 = vrot.slane %v490, 6
    %522 = vrot.lane.b32.xlu0 %v521, 112
    %v523 = vpop.permute.xlu0 %522
    %v526 = vrot.slane %v491, 2
    %527 = vrot.lane.b32.xlu0 %v526, 16
    %v528 = vpop.permute.xlu0 %527
    %v530 = vrot.slane %v491, 4
    %531 = vrot.lane.b32.xlu0 %v530, 32
    %v532 = vpop.permute.xlu0 %531
    %v534 = vrot.slane %v491, 6
    %535 = vrot.lane.b32.xlu0 %v534, 48
    %v536 = vpop.permute.xlu0 %535
    %539 = vrot.lane.b32.xlu0 %v492, 64
    %v540 = vpop.permute.xlu0 %539
    %v542 = vrot.slane %v492, 2
    %543 = vrot.lane.b32.xlu0 %v542, 80
    %v544 = vpop.permute.xlu0 %543
    %v546 = vrot.slane %v492, 4
    %547 = vrot.lane.b32.xlu0 %v546, 96
    %v548 = vpop.permute.xlu0 %547
    %v550 = vrot.slane %v492, 6
    %551 = vrot.lane.b32.xlu0 %v550, 112
    %v552 = vpop.permute.xlu0 %551
    %vm554 = vcmask 130048
    %v555 = vsel %vm554, %v489, %v499
    %vm556 = vcmask 261120
    %v557 = vsel %vm556, %v555, %v503
    %vm558 = vcmask 392192
    %v559 = vsel %vm558, %v557, %v507
    %vm560 = vcmask 523264
    %v561 = vsel %vm560, %v559, %v511
    %vm562 = vcmask 654336
    %v563 = vsel %vm562, %v561, %v515
    %vm564 = vcmask 785408
    %v565 = vsel %vm564, %v563, %v519
    %vm566 = vcmask 916480
    %v567 = vsel %vm566, %v565, %v523
    %v568 = vsel %vm554, %v491, %v528
    %v569 = vsel %vm556, %v568, %v532
    %v570 = vsel %vm558, %v569, %v536
    %v571 = vsel %vm560, %v570, %v540
    %v572 = vsel %vm562, %v571, %v544
    %v573 = vsel %vm564, %v572, %v548
    %v574 = vsel %vm566, %v573, %v552
    %v576 = vrot.slane %v493, 2
    %577 = vrot.lane.b32.xlu0 %v576, 16
    %v578 = vpop.permute.xlu0 %577
    %v580 = vrot.slane %v493, 4
    %581 = vrot.lane.b32.xlu0 %v580, 32
    %v582 = vpop.permute.xlu0 %581
    %v584 = vrot.slane %v493, 6
    %585 = vrot.lane.b32.xlu0 %v584, 48
    %v586 = vpop.permute.xlu0 %585
    %589 = vrot.lane.b32.xlu0 %v494, 64
    %v590 = vpop.permute.xlu0 %589
    %v592 = vrot.slane %v494, 2
    %593 = vrot.lane.b32.xlu0 %v592, 80
    %v594 = vpop.permute.xlu0 %593
    %v596 = vrot.slane %v494, 4
    %597 = vrot.lane.b32.xlu0 %v596, 96
    %v598 = vpop.permute.xlu0 %597
    %v600 = vrot.slane %v494, 6
    %601 = vrot.lane.b32.xlu0 %v600, 112
    %v602 = vpop.permute.xlu0 %601
    %v604 = vsel %vm554, %v493, %v578
    %v605 = vsel %vm556, %v604, %v582
    %v606 = vsel %vm558, %v605, %v586
    %v607 = vsel %vm560, %v606, %v590
    %v608 = vsel %vm562, %v607, %v594
    %v609 = vsel %vm564, %v608, %v598
    %v610 = vsel %vm566, %v609, %v602
    %v611 = vld [vmem:[%s3] sm:$0xff]
    %v612 = vld [vmem:[%s3 + $0x8] sm:$0xff]
    %v613 = vld [vmem:[%s3 + $0x10] sm:$0xff]
    %v614 = vld [vmem:[%s3 + $0x18] sm:$0xff]
    %v615 = vld [vmem:[%s3 + $0x20] sm:$0xff]
    %v616 = vld [vmem:[%s3 + $0x28] sm:$0xff]
    %v617 = vld [vmem:[%s3 + $0x30] sm:$0xff]
    %v618 = vld [vmem:[%s3 + $0x38] sm:$0xff]
    %v619 = vld [vmem:[%s3 + $0x40] sm:$0xff]
    %v620 = vld [vmem:[%s3 + $0x48] sm:$0xff]
    %v621 = vld [vmem:[%s3 + $0x50] sm:$0xff]
    %v622 = vld [vmem:[%s3 + $0x58] sm:$0xff]
    %v623 = vld [vmem:[%s3 + $0x60] sm:$0xff]
    %v624 = vld [vmem:[%s3 + $0x68] sm:$0xff]
    %v625 = vld [vmem:[%s3 + $0x70] sm:$0xff]
    %v626 = vld [vmem:[%s3 + $0x78] sm:$0xff]
    %v627 = vld [vmem:[%s3 + $0x80] sm:$0xff]
    %v628 = vld [vmem:[%s3 + $0x88] sm:$0xff]
    %v629 = vld [vmem:[%s3 + $0x90] sm:$0xff]
    %v630 = vld [vmem:[%s3 + $0x98] sm:$0xff]
    %v631 = vld [vmem:[%s3 + $0xa0] sm:$0xff]
    %v632 = vld [vmem:[%s3 + $0xa8] sm:$0xff]
    %v633 = vld [vmem:[%s3 + $0xb0] sm:$0xff]
    %v634 = vld [vmem:[%s3 + $0xb8] sm:$0xff]
    %v635 = vld [vmem:[%s3 + $0xc0] sm:$0xff]
    %v636 = vld [vmem:[%s3 + $0xc8] sm:$0xff]
    %v637 = vld [vmem:[%s3 + $0xd0] sm:$0xff]
    %v638 = vld [vmem:[%s3 + $0xd8] sm:$0xff]
    %v639 = vld [vmem:[%s3 + $0xe0] sm:$0xff]
    %v640 = vld [vmem:[%s3 + $0xe8] sm:$0xff]
    %v641 = vld [vmem:[%s3 + $0xf0] sm:$0xff]
    %v642 = vld [vmem:[%s3 + $0xf8] sm:$0xff]
    %v643 = vld [vmem:[%s3 + $0x100] sm:$0xff]
    %v644 = vld [vmem:[%s3 + $0x108] sm:$0xff]
    %v645 = vld [vmem:[%s3 + $0x110] sm:$0xff]
    %v646 = vld [vmem:[%s3 + $0x118] sm:$0xff]
    %v647 = vld [vmem:[%s3 + $0x120] sm:$0xff]
    %v648 = vld [vmem:[%s3 + $0x128] sm:$0xff]
    %v649 = vld [vmem:[%s3 + $0x130] sm:$0xff]
    %v650 = vld [vmem:[%s3 + $0x138] sm:$0xff]
    %v651 = vld [vmem:[%s3 + $0x140] sm:$0xff]
    %v652 = vld [vmem:[%s3 + $0x148] sm:$0xff]
    %v653 = vld [vmem:[%s3 + $0x150] sm:$0xff]
    %v654 = vld [vmem:[%s3 + $0x158] sm:$0xff]
    %v655 = vld [vmem:[%s3 + $0x160] sm:$0xff]
    %v656 = vld [vmem:[%s3 + $0x168] sm:$0xff]
    %v657 = vld [vmem:[%s3 + $0x170] sm:$0xff]
    %v658 = vld [vmem:[%s3 + $0x178] sm:$0xff]
    %v659 = vld [vmem:[%s3 + $0x180] sm:$0xff]
    %v660 = vld [vmem:[%s3 + $0x188] sm:$0xff]
    %v661 = vld [vmem:[%s4] sm:$0x1]
    %v663 = vlaneseq
    %v664 = vshrl.u32 %v663, 7
    %v665 = vsub.s32 0, %v664
    %v666 = vrot.slane %v661, %v665
    %v669 = vsel %vm554, %v495, 0
    %671 = vmatprep.subr.mxu0 0.0
    %672 = vmatpush1.msra.mxu0 %v611
    %673 = vmatprep.subr.mxu0 0.0
    %674 = vmatpush1.msra.mxu0 %v612
    %675 = vmatprep.subr.mxu0 0.0
    %676 = vmatpush1.msra.mxu0 %v613
    %677 = vmatprep.subr.mxu0 0.0
    %678 = vmatpush1.msra.mxu0 %v614
    %679 = vmatprep.subr.mxu0 0.0
    %680 = vmatpush1.msra.mxu0 %v615
    %681 = vmatprep.subr.mxu0 0.0
    %682 = vmatpush1.msra.mxu0 %v616
    %683 = vmatprep.subr.mxu0 0.0
    %684 = vmatpush1.msra.mxu0 %v617
    %685 = vmatprep.subr.mxu0 0.0
    %686 = vmatpush1.msra.mxu0 %v618
    %687 = vmatprep.subr.mxu0 0.0
    %688 = vmatpush1.msra.mxu0 %v619
    %689 = vmatprep.subr.mxu0 0.0
    %690 = vmatpush1.msra.mxu0 %v620
    %691 = vmatprep.subr.mxu0 0.0
    %692 = vmatpush1.msra.mxu0 %v621
    %693 = vmatprep.subr.mxu0 0.0
    %694 = vmatpush1.msra.mxu0 %v622
    %695 = vmatprep.subr.mxu0 0.0
    %696 = vmatpush1.msra.mxu0 %v623
    %697 = vmatprep.subr.mxu0 0.0
    %698 = vmatpush1.msra.mxu0 %v624
    %699 = vmatprep.subr.mxu0 0.0
    %700 = vmatpush1.msra.mxu0 %v625
    %701 = vmatprep.subr.mxu0 0.0
    %702 = vmatpush1.msra.mxu0 %v626
    %703 = vmatprep.subr.mxu0 0.0
    %704 = vmatpush1.msra.mxu0 %v627
    %705 = vmatprep.subr.mxu0 0.0
    %706 = vmatpush1.msra.mxu0 %v628
    %707 = vmatprep.subr.mxu0 0.0
    %708 = vmatpush1.msra.mxu0 %v629
    %709 = vmatprep.subr.mxu0 0.0
    %710 = vmatpush1.msra.mxu0 %v630
    %711 = vmatprep.subr.mxu0 0.0
    %712 = vmatpush1.msra.mxu0 %v631
    %713 = vmatprep.subr.mxu0 0.0
    %714 = vmatpush1.msra.mxu0 %v632
    %715 = vmatprep.subr.mxu0 0.0
    %716 = vmatpush1.msra.mxu0 %v633
    %717 = vmatprep.subr.mxu0 0.0
    %718 = vmatpush1.msra.mxu0 %v634
    %719 = vmatprep.subr.mxu0 0.0
    %720 = vmatpush1.msra.mxu0 %v635
    %721 = vmatprep.subr.mxu0 0.0
    %722 = vmatpush1.msra.mxu0 %v636
    %723 = vmatprep.subr.mxu0 0.0
    %724 = vmatpush1.msra.mxu0 %v637
    %725 = vmatprep.subr.mxu0 0.0
    %726 = vmatpush1.msra.mxu0 %v638
    %727 = vmatprep.subr.mxu0 0.0
    %728 = vmatpush1.msra.mxu0 %v639
    %729 = vmatprep.subr.mxu0 0.0
    %730 = vmatpush1.msra.mxu0 %v640
    %731 = vmatprep.subr.mxu0 0.0
    %732 = vmatpush1.msra.mxu0 %v641
    %733 = vmatprep.subr.mxu0 0.0
    %734 = vmatpush1.msra.mxu0 %v642
    %735 = vmatprep.mubr.f32.mxu0 %v574
    %736 = vmatmul.mubr.f32.gmra.mrb[0].mxu0 %v567
    %v737 = vpop.f32.mrb[0].mxu0
    %v738 = vadd.f32 %v666, %v737
    %v739 = vpop.f32.mrb[0].mxu0
    %740 = vdwg.mxu0
    %741 = vmatprep.subr.mxu0 0.0
    %742 = vmatpush1.msra.mxu0 %v643
    %743 = vmatprep.subr.mxu0 0.0
    %744 = vmatpush1.msra.mxu0 %v644
    %745 = vmatprep.subr.mxu0 0.0
    %746 = vmatpush1.msra.mxu0 %v645
    %747 = vmatprep.subr.mxu0 0.0
    %748 = vmatpush1.msra.mxu0 %v646
    %749 = vmatprep.subr.mxu0 0.0
    %750 = vmatpush1.msra.mxu0 %v647
    %751 = vmatprep.subr.mxu0 0.0
    %752 = vmatpush1.msra.mxu0 %v648
    %753 = vmatprep.subr.mxu0 0.0
    %754 = vmatpush1.msra.mxu0 %v649
    %755 = vmatprep.subr.mxu0 0.0
    %756 = vmatpush1.msra.mxu0 %v650
    %757 = vmatprep.subr.mxu0 0.0
    %758 = vmatpush1.msra.mxu0 %v651
    %759 = vmatprep.subr.mxu0 0.0
    %760 = vmatpush1.msra.mxu0 %v652
    %761 = vmatprep.subr.mxu0 0.0
    %762 = vmatpush1.msra.mxu0 %v653
    %763 = vmatprep.subr.mxu0 0.0
    %764 = vmatpush1.msra.mxu0 %v654
    %765 = vmatprep.subr.mxu0 0.0
    %766 = vmatpush1.msra.mxu0 %v655
    %767 = vmatprep.subr.mxu0 0.0
    %768 = vmatpush1.msra.mxu0 %v656
    %769 = vmatprep.subr.mxu0 0.0
    %770 = vmatpush1.msra.mxu0 %v657
    %771 = vmatprep.subr.mxu0 0.0
    %772 = vmatpush1.msra.mxu0 %v658
    %773 = vmatprep.subr.mxu0 0.0
    %774 = vmatpush1.msra.mxu0 %v659
    %775 = vmatprep.subr.mxu0 0.0
    %776 = vmatpush1.msra.mxu0 %v660
    %777 = vmatprep.subr.mxu0 0.0
    %778 = vmatpush1.msra.mxu0 0.0
    %779 = vmatprep.subr.mxu0 0.0
    %780 = vmatpush1.msra.mxu0 0.0
    %781 = vmatprep.subr.mxu0 0.0
    %782 = vmatpush1.msra.mxu0 0.0
    %783 = vmatprep.subr.mxu0 0.0
    %784 = vmatpush1.msra.mxu0 0.0
    %785 = vmatprep.subr.mxu0 0.0
    %786 = vmatpush1.msra.mxu0 0.0
    %787 = vmatprep.subr.mxu0 0.0
    %788 = vmatpush1.msra.mxu0 0.0
    %789 = vmatprep.subr.mxu0 0.0
    %790 = vmatpush1.msra.mxu0 0.0
    %791 = vmatprep.subr.mxu0 0.0
    %792 = vmatpush1.msra.mxu0 0.0
    %793 = vmatprep.subr.mxu0 0.0
    %794 = vmatpush1.msra.mxu0 0.0
    %795 = vmatprep.subr.mxu0 0.0
    %796 = vmatpush1.msra.mxu0 0.0
    %797 = vmatprep.subr.mxu0 0.0
    %798 = vmatpush1.msra.mxu0 0.0
    %799 = vmatprep.subr.mxu0 0.0
    %800 = vmatpush1.msra.mxu0 0.0
    %801 = vmatprep.subr.mxu0 0.0
    %802 = vmatpush1.msra.mxu0 0.0
    %803 = vmatprep.subr.mxu0 0.0
    %804 = vmatpush1.msra.mxu0 0.0
    %805 = vmatprep.mubr.f32.mxu0 %v669
    %806 = vmatmul.mubr.f32.gmra.mrb[0].mxu0 %v610
    %v807 = vpop.f32.mrb[0].mxu0
    %v808 = vadd.f32 %v738, %v807
    %v809 = vpop.f32.mrb[0].mxu0
    %810 = vdwg.mxu0
    %v811 = vmax.f32 %v808, 0.0
    %v812 = vld [vmem:[%s5] sm:$0xff]
    %v813 = vld [vmem:[%s5 + $0x8] sm:$0xff]
    %v814 = vld [vmem:[%s5 + $0x10] sm:$0xff]
    %v815 = vld [vmem:[%s5 + $0x18] sm:$0xff]
    %v816 = vld [vmem:[%s5 + $0x20] sm:$0xff]
    %v817 = vld [vmem:[%s5 + $0x28] sm:$0xff]
    %v818 = vld [vmem:[%s5 + $0x30] sm:$0xff]
    %v819 = vld [vmem:[%s5 + $0x38] sm:$0xff]
    %v820 = vld [vmem:[%s5 + $0x40] sm:$0xff]
    %v821 = vld [vmem:[%s5 + $0x48] sm:$0xff]
    %v822 = vld [vmem:[%s5 + $0x50] sm:$0xff]
    %v823 = vld [vmem:[%s5 + $0x58] sm:$0xff]
    %v824 = vld [vmem:[%s5 + $0x60] sm:$0xff]
    %v825 = vld [vmem:[%s5 + $0x68] sm:$0xff]
    %v826 = vld [vmem:[%s5 + $0x70] sm:$0xff]
    %v827 = vld [vmem:[%s6] sm:$0x1]
    %v829 = vlaneseq
    %v830 = vshrl.u32 %v829, 7
    %v831 = vsub.s32 0, %v830
    %v832 = vrot.slane %v827, %v831
    %vm834 = vcmask 982016
    %v836 = vsel %vm834, %v811, 0
    %838 = vmatprep.subr.mxu0 0.0
    %839 = vmatpush1.msra.mxu0 %v812
    %840 = vmatprep.subr.mxu0 0.0
    %841 = vmatpush1.msra.mxu0 %v813
    %842 = vmatprep.subr.mxu0 0.0
    %843 = vmatpush1.msra.mxu0 %v814
    %844 = vmatprep.subr.mxu0 0.0
    %845 = vmatpush1.msra.mxu0 %v815
    %846 = vmatprep.subr.mxu0 0.0
    %847 = vmatpush1.msra.mxu0 %v816
    %848 = vmatprep.subr.mxu0 0.0
    %849 = vmatpush1.msra.mxu0 %v817
    %850 = vmatprep.subr.mxu0 0.0
    %851 = vmatpush1.msra.mxu0 %v818
    %852 = vmatprep.subr.mxu0 0.0
    %853 = vmatpush1.msra.mxu0 %v819
    %854 = vmatprep.subr.mxu0 0.0
    %855 = vmatpush1.msra.mxu0 %v820
    %856 = vmatprep.subr.mxu0 0.0
    %857 = vmatpush1.msra.mxu0 %v821
    %858 = vmatprep.subr.mxu0 0.0
    %859 = vmatpush1.msra.mxu0 %v822
    %860 = vmatprep.subr.mxu0 0.0
    %861 = vmatpush1.msra.mxu0 %v823
    %862 = vmatprep.subr.mxu0 0.0
    %863 = vmatpush1.msra.mxu0 %v824
    %864 = vmatprep.subr.mxu0 0.0
    %865 = vmatpush1.msra.mxu0 %v825
    %866 = vmatprep.subr.mxu0 0.0
    %867 = vmatpush1.msra.mxu0 %v826
    %868 = vmatprep.subr.mxu0 0.0
    %869 = vmatpush1.msra.mxu0 0.0
    %870 = vmatprep.subr.mxu0 0.0
    %871 = vmatpush1.msra.mxu0 0.0
    %872 = vmatprep.subr.mxu0 0.0
    %873 = vmatpush1.msra.mxu0 0.0
    %874 = vmatprep.subr.mxu0 0.0
    %875 = vmatpush1.msra.mxu0 0.0
    %876 = vmatprep.subr.mxu0 0.0
    %877 = vmatpush1.msra.mxu0 0.0
    %878 = vmatprep.subr.mxu0 0.0
    %879 = vmatpush1.msra.mxu0 0.0
    %880 = vmatprep.subr.mxu0 0.0
    %881 = vmatpush1.msra.mxu0 0.0
    %882 = vmatprep.subr.mxu0 0.0
    %883 = vmatpush1.msra.mxu0 0.0
    %884 = vmatprep.subr.mxu0 0.0
    %885 = vmatpush1.msra.mxu0 0.0
    %886 = vmatprep.subr.mxu0 0.0
    %887 = vmatpush1.msra.mxu0 0.0
    %888 = vmatprep.subr.mxu0 0.0
    %889 = vmatpush1.msra.mxu0 0.0
    %890 = vmatprep.subr.mxu0 0.0
    %891 = vmatpush1.msra.mxu0 0.0
    %892 = vmatprep.subr.mxu0 0.0
    %893 = vmatpush1.msra.mxu0 0.0
    %894 = vmatprep.subr.mxu0 0.0
    %895 = vmatpush1.msra.mxu0 0.0
    %896 = vmatprep.subr.mxu0 0.0
    %897 = vmatpush1.msra.mxu0 0.0
    %898 = vmatprep.subr.mxu0 0.0
    %899 = vmatpush1.msra.mxu0 0.0
    %900 = vmatprep.subr.mxu0 0.0
    %901 = vmatpush1.msra.mxu0 0.0
    %902 = vmatprep.mubr.f32.mxu0 0.0
    %903 = vmatmul.mubr.f32.gmra.mrb[0].mxu0 %v836
    %v904 = vpop.f32.mrb[0].mxu0
    %v905 = vadd.f32 %v832, %v904
    %v906 = vpop.f32.mrb[0].mxu0
    %907 = vdwg.mxu0
    %v908 = vmax.f32 %v905, 0.0
    %v909 = vld [vmem:[%s7] sm:$0xff]
    %v910 = vld [vmem:[%s7 + $0x8] sm:$0xff]
    %v911 = vld [vmem:[%s7 + $0x10] sm:$0xff]
    %v912 = vld [vmem:[%s7 + $0x18] sm:$0xff]
    %v913 = vld [vmem:[%s7 + $0x20] sm:$0xff]
    %v914 = vld [vmem:[%s7 + $0x28] sm:$0xff]
    %v915 = vld [vmem:[%s7 + $0x30] sm:$0xff]
    %v916 = vld [vmem:[%s7 + $0x38] sm:$0xff]
    %v917 = vld [vmem:[%s7 + $0x40] sm:$0xff]
    %v918 = vld [vmem:[%s7 + $0x48] sm:$0xff]
    %v919 = vld [vmem:[%s7 + $0x50] sm:$0xf]
    %v920 = vld [vmem:[%s8] sm:$0x1]
    %v922 = vlaneseq
    %v923 = vshrl.u32 %v922, 7
    %v924 = vsub.s32 0, %v923
    %v925 = vrot.slane %v920, %v924
    %vm927 = vcmask 687104
    %v929 = vsel %vm927, %v908, 0
    %v932 = vsel %vm447, %v919, 0
    %934 = vmatprep.subr.mxu0 0.0
    %935 = vmatpush1.msra.mxu0 %v909
    %936 = vmatprep.subr.mxu0 0.0
    %937 = vmatpush1.msra.mxu0 %v910
    %938 = vmatprep.subr.mxu0 0.0
    %939 = vmatpush1.msra.mxu0 %v911
    %940 = vmatprep.subr.mxu0 0.0
    %941 = vmatpush1.msra.mxu0 %v912
    %942 = vmatprep.subr.mxu0 0.0
    %943 = vmatpush1.msra.mxu0 %v913
    %944 = vmatprep.subr.mxu0 0.0
    %945 = vmatpush1.msra.mxu0 %v914
    %946 = vmatprep.subr.mxu0 0.0
    %947 = vmatpush1.msra.mxu0 %v915
    %948 = vmatprep.subr.mxu0 0.0
    %949 = vmatpush1.msra.mxu0 %v916
    %950 = vmatprep.subr.mxu0 0.0
    %951 = vmatpush1.msra.mxu0 %v917
    %952 = vmatprep.subr.mxu0 0.0
    %953 = vmatpush1.msra.mxu0 %v918
    %954 = vmatprep.subr.mxu0 0.0
    %955 = vmatpush1.msra.mxu0 %v932
    %956 = vmatprep.subr.mxu0 0.0
    %957 = vmatpush1.msra.mxu0 0.0
    %958 = vmatprep.subr.mxu0 0.0
    %959 = vmatpush1.msra.mxu0 0.0
    %960 = vmatprep.subr.mxu0 0.0
    %961 = vmatpush1.msra.mxu0 0.0
    %962 = vmatprep.subr.mxu0 0.0
    %963 = vmatpush1.msra.mxu0 0.0
    %964 = vmatprep.subr.mxu0 0.0
    %965 = vmatpush1.msra.mxu0 0.0
    %966 = vmatprep.subr.mxu0 0.0
    %967 = vmatpush1.msra.mxu0 0.0
    %968 = vmatprep.subr.mxu0 0.0
    %969 = vmatpush1.msra.mxu0 0.0
    %970 = vmatprep.subr.mxu0 0.0
    %971 = vmatpush1.msra.mxu0 0.0
    %972 = vmatprep.subr.mxu0 0.0
    %973 = vmatpush1.msra.mxu0 0.0
    %974 = vmatprep.subr.mxu0 0.0
    %975 = vmatpush1.msra.mxu0 0.0
    %976 = vmatprep.subr.mxu0 0.0
    %977 = vmatpush1.msra.mxu0 0.0
    %978 = vmatprep.subr.mxu0 0.0
    %979 = vmatpush1.msra.mxu0 0.0
    %980 = vmatprep.subr.mxu0 0.0
    %981 = vmatpush1.msra.mxu0 0.0
    %982 = vmatprep.subr.mxu0 0.0
    %983 = vmatpush1.msra.mxu0 0.0
    %984 = vmatprep.subr.mxu0 0.0
    %985 = vmatpush1.msra.mxu0 0.0
    %986 = vmatprep.subr.mxu0 0.0
    %987 = vmatpush1.msra.mxu0 0.0
    %988 = vmatprep.subr.mxu0 0.0
    %989 = vmatpush1.msra.mxu0 0.0
    %990 = vmatprep.subr.mxu0 0.0
    %991 = vmatpush1.msra.mxu0 0.0
    %992 = vmatprep.subr.mxu0 0.0
    %993 = vmatpush1.msra.mxu0 0.0
    %994 = vmatprep.subr.mxu0 0.0
    %995 = vmatpush1.msra.mxu0 0.0
    %996 = vmatprep.subr.mxu0 0.0
    %997 = vmatpush1.msra.mxu0 0.0
    %998 = vmatprep.mubr.f32.mxu0 0.0
    %999 = vmatmul.mubr.f32.gmra.mrb[0].mxu0 %v929
    %v1000 = vpop.f32.mrb[0].mxu0
    %v1001 = vadd.f32 %v925, %v1000
    %v1002 = vpop.f32.mrb[0].mxu0
    %1003 = vdwg.mxu0
    %vm1004 = vcmask 74752
    %1005 = vst.msk [vmem:[#allocation2] sm:$0x3] %vm1004, %v1001
    // Predicated region
    $region38: #{simplenet_forward.3} parent=1 // pred_check
      _
    $region39: #{simplenet_forward.3} parent=1 // pred_check_branch
      %1007 = sbr.rel (0) target = $region41
    $region40: #{simplenet_forward.3} parent=1 // pred_region
      %s1009 = ssub.s32 32, 32
      %1010 = vsyncadd [#allocation3], %s1009
      %s1012 = sshll.u32 [#allocation2], 4
      %s1013 = int_to_ptr.vmem [resolvable:$true] %s1012
      %1015 = dma.vmem_to_hbm [thread:$0]  %s1013, 32, %s9, [#allocation3]
    $region41: #{simplenet_forward.3} parent=1 // pred_fallthru
      _
    // Predicated region
    $region42: #{simplenet_forward.3} parent=1 // pred_check
      _
    $region43: #{simplenet_forward.3} parent=1 // pred_check_branch
      %1017 = sbr.rel (0) target = $region45
    $region44: #{simplenet_forward.3} parent=1 // pred_region
      %1018 = dma.done [#allocation3], 32
    $region45: #{simplenet_forward.3} parent=1 // pred_fallthru
      _
    %1019 = vsyncpa [#allocation3], 1

</llo_original>
